<compile_context>
chip_gen: v6e
topology: v6e:2x2x1
jax: 0.10.0
libtpu: 0.0.40
codegen_flags: <defaults>
</compile_context>

<pallas_src>
import functools

import jax
import jax.numpy as jnp
from jax import lax
from jax.experimental import pallas as pl
from jax.experimental.pallas import tpu as pltpu

NUM_CENTERS = 20
NUM_PROPOSALS = 25
RGB_FEAT_DIM = 2048
PC_FEAT_DIM = 33
FUSED_DIM = 512
HIDDEN = 256
POOL = 32                       # stride of the (stubbed) backbone, like ResNet50
OUT_DIM = NUM_PROPOSALS * 24    # 600
MAX_TILE_N = 8192               # un-padded points per reduction grid step


def _round_up(x, m):
    return ((x + m - 1) // m) * m


def _model_kernel(pooled_ref, maskr_ref, maskpt_ref, pc_ref,
                  cvp_w_ref, cvp_b_ref, rgbp_b_ref,
                  pcp_w_ref, pcp_b_ref,
                  fus_w_ref, fus_b_ref,
                  cp1_w_ref, cp1_b_ref,
                  cpr_w_ref, cpr_b_ref,
                  rg2_w_ref, rg2_b_ref,
                  out_ref,
                  pc_acc_ref, mmax_ref,
                  *, inv_p, inv_n, n_pts, tile_n, ragged):
    t = pl.program_id(1)

    @pl.when(t == 0)
    def _init():
        pc_acc_ref[...] = jnp.zeros_like(pc_acc_ref)
        mmax_ref[...] = jnp.zeros_like(mmax_ref)

    # ---- tiled reduction over points: sum_n mask_n * pc_n  and  max_n mask_n ----
    m = maskpt_ref[0]                          # (1, tile_n)   f32, lane-major
    pc = pc_ref[0]                             # (tile_n, 33)  f32, native layout
    if ragged:                                 # static: only a partial last tile needs masking
        start = t * tile_n
        valid_row = (start + lax.broadcasted_iota(jnp.int32, (1, tile_n), 1)) < n_pts
        valid_col = (start + lax.broadcasted_iota(jnp.int32, (tile_n, 1), 0)) < n_pts
        m = jnp.where(valid_row, m, 0.0)
        pc = jnp.where(valid_col, pc, 0.0)     # OOB block data may be NaN/Inf; 0*NaN != 0
    pc_acc_ref[...] += jnp.dot(m, pc, preferred_element_type=jnp.float32)  # (1, 33)
    mmax_ref[...] = jnp.maximum(mmax_ref[...], jnp.max(m, axis=1, keepdims=True))

    @pl.when(t == pl.num_programs(1) - 1)
    def _head():
        def mm(x, w_ref):   # bf16 operands into the MXU, f32 accumulation
            return jnp.dot(x.astype(jnp.bfloat16), w_ref[...],
                           preferred_element_type=jnp.float32)

        # -- stub-backbone 1x1 conv -> mask weighting -> spatial mean -> rgb_projector,
        #    reassociated and folded offline:
        #    rgb_proj = inv_p*((sum_p m_p*pooled_p)@(Wc@Wp) + (sum_p m_p)*(bc@Wp)) + bp
        mr = maskr_ref[0]                                           # (P, 1)
        sel = jnp.sum(pooled_ref[0] * mr, axis=0, keepdims=True)    # (1, 3)
        mask_sum = jnp.sum(mr, axis=0, keepdims=True)               # (1, 1)
        rgb_proj = ((mm(sel, cvp_w_ref) + mask_sum * cvp_b_ref[...]) * inv_p
                    + rgbp_b_ref[...])                              # (1, 512)

        # -- weighted point-cloud mean and pc_projector
        inv_max = pl.reciprocal(mmax_ref[...] + 1e-8)               # (1, 1), exact
        pc_mean = pc_acc_ref[...] * (inv_n * inv_max)               # (1, 33)
        pc_proj = mm(pc_mean, pcp_w_ref) + pcp_b_ref[...]           # (1, 512)

        # -- fusion_layer: concat([rgb_proj, pc_proj]) @ W  ==  split matmul
        fused = (jnp.dot(rgb_proj.astype(jnp.bfloat16), fus_w_ref[0:FUSED_DIM, :],
                         preferred_element_type=jnp.float32)
                 + jnp.dot(pc_proj.astype(jnp.bfloat16), fus_w_ref[FUSED_DIM:2 * FUSED_DIM, :],
                           preferred_element_type=jnp.float32)
                 + fus_b_ref[...])                                  # (1, 512)

        # -- MaskGuidedCenterPredictor (Linear+ReLU), then [cp2 -> rg1] folded,
        #    then the regressor ReLU + output layer.
        h = jnp.maximum(mm(fused, cp1_w_ref) + cp1_b_ref[...], 0.0)     # (1, 256)
        h2 = jnp.maximum(mm(h, cpr_w_ref) + cpr_b_ref[...], 0.0)        # (1, 256)
        out = mm(h2, rg2_w_ref) + rg2_b_ref[...]                        # (1, 600)
        out_ref[...] = out[None]


def init_params(key):
    """PyTorch-style U(-1/sqrt(fan_in), +1/sqrt(fan_in)) init; weights stored (in, out), f32."""
    def linear(k, fan_in, fan_out):
        k1, k2 = jax.random.split(k)
        bound = 1.0 / float(fan_in) ** 0.5
        w = jax.random.uniform(k1, (fan_in, fan_out), jnp.float32, -bound, bound)
        b = jax.random.uniform(k2, (1, fan_out), jnp.float32, -bound, bound)
        return w, b

    keys = jax.random.split(key, 8)
    return {
        "conv":     linear(keys[0], 3, RGB_FEAT_DIM),                  # backbone stub 1x1 conv
        "rgb_proj": linear(keys[1], RGB_FEAT_DIM, FUSED_DIM),
        "pc_proj":  linear(keys[2], PC_FEAT_DIM, FUSED_DIM),
        "fusion":   linear(keys[3], 2 * FUSED_DIM, FUSED_DIM),
        "cp1":      linear(keys[4], FUSED_DIM, HIDDEN),
        "cp2":      linear(keys[5], HIDDEN, NUM_CENTERS * 3),
        "rg1":      linear(keys[6], NUM_CENTERS * 3, HIDDEN),
        "rg2":      linear(keys[7], HIDDEN, OUT_DIM),
    }


def fold_params(params):
    """Fold the purely-linear chains (valid: no nonlinearity in between) and cast
    matmul weights to bf16 (f32 accumulation in-kernel); biases stay f32."""
    conv_w, conv_b = params["conv"]
    rgbp_w, rgbp_b = params["rgb_proj"]
    cvp_w = conv_w @ rgbp_w                       # (3, 512)
    cvp_b = conv_b @ rgbp_w                       # (1, 512)
    cp2_w, cp2_b = params["cp2"]
    rg1_w, rg1_b = params["rg1"]
    cpr_w = cp2_w @ rg1_w                         # (256, 256)
    cpr_b = cp2_b @ rg1_w + rg1_b                 # (1, 256)
    pcp_w, pcp_b = params["pc_proj"]
    fus_w, fus_b = params["fusion"]
    cp1_w, cp1_b = params["cp1"]
    rg2_w, rg2_b = params["rg2"]
    bf = lambda a: a.astype(jnp.bfloat16)
    return {
        "cvp_w": bf(cvp_w), "cvp_b": cvp_b, "rgbp_b": rgbp_b,
        "pcp_w": bf(pcp_w), "pcp_b": pcp_b,
        "fus_w": bf(fus_w), "fus_b": fus_b,
        "cp1_w": bf(cp1_w), "cp1_b": cp1_b,
        "cpr_w": bf(cpr_w), "cpr_b": cpr_b,
        "rg2_w": bf(rg2_w), "rg2_b": rg2_b,
    }


@jax.jit
def multi_object_3d_bbox_forward(rgb, mask, pc_features, kparams):
    """rgb: (B,3,H,W) NCHW; mask: (B,Hm,Wm); pc_features: (B, Hm*Wm, 33)."""
    B, C, H, W = rgb.shape
    Hf, Wf = H // POOL, W // POOL
    P = Hf * Wf
    n_pts = pc_features.shape[1]
    assert n_pts == mask.shape[1] * mask.shape[2]

    # ---- glue: stub backbone front-end (stride-POOL avg pool), CHW -> HWC ----
    pooled = rgb.astype(jnp.float32).reshape(B, C, Hf, POOL, Wf, POOL).mean(axis=(3, 5))
    pooled = jnp.transpose(pooled, (0, 2, 3, 1)).reshape(B, P, C)            # (B, P, 3)

    # ---- glue: bilinear mask resize to feature resolution ---------------------
    mask_r = jax.image.resize(mask.astype(jnp.float32), (B, Hf, Wf),
                              method="bilinear").reshape(B, P, 1)            # (B, P, 1)

    # ---- point tensors in native layout (NO lane padding, NO HBM pad pass) ----
    mask_pts = mask.astype(jnp.float32).reshape(B, 1, n_pts)                 # pure reshape
    pc = pc_features.astype(jnp.float32)                                     # (B, n_pts, 33)

    tile_n = min(MAX_TILE_N, _round_up(n_pts, 128))
    num_tiles = -(-n_pts // tile_n)
    ragged = (n_pts % tile_n) != 0

    weight_names = ("cvp_w", "cvp_b", "rgbp_b", "pcp_w", "pcp_b",
                    "fus_w", "fus_b", "cp1_w", "cp1_b",
                    "cpr_w", "cpr_b", "rg2_w", "rg2_b")
    weight_args = [kparams[n] for n in weight_names]

    def resident(a):   # full-array, constant block index -> fetched once, stays in VMEM
        return pl.BlockSpec(a.shape, lambda b, t: (0,) * a.ndim)

    in_specs = [
        pl.BlockSpec((1, P, C), lambda b, t: (b, 0, 0)),                 # pooled
        pl.BlockSpec((1, P, 1), lambda b, t: (b, 0, 0)),                 # resized mask
        pl.BlockSpec((1, 1, tile_n), lambda b, t: (b, 0, t)),            # per-point mask
        pl.BlockSpec((1, tile_n, PC_FEAT_DIM), lambda b, t: (b, t, 0)),  # pc (native 33-wide)
    ] + [resident(a) for a in weight_args]

    out_spec = pl.BlockSpec((1, 1, OUT_DIM), lambda b, t: (b, 0, 0))

    # VMEM budget from actual footprint (2x for pipeline buffers) + headroom,
    # clamped well under v7x's 64 MiB physical VMEM.
    def nbytes(a):
        return a.size * a.dtype.itemsize
    resident_bytes = P * C * 4 + P * 4 + sum(nbytes(a) for a in weight_args)
    stream_bytes = tile_n * PC_FEAT_DIM * 4 + tile_n * 4 * 8   # pc tile + sublane-padded mask tile
    vmem_limit = min(int(2 * (resident_bytes + stream_bytes) + OUT_DIM * 4 * 2) + (8 << 20),
                     40 << 20)

    kernel = functools.partial(_model_kernel,
                               inv_p=float(1.0 / P), inv_n=float(1.0 / n_pts),
                               n_pts=n_pts, tile_n=tile_n, ragged=ragged)

    out = pl.pallas_call(
        kernel,
        out_shape=jax.ShapeDtypeStruct((B, 1, OUT_DIM), jnp.float32),
        grid_spec=pltpu.PrefetchScalarGridSpec(
            num_scalar_prefetch=0,
            grid=(B, num_tiles),
            in_specs=in_specs,
            out_specs=out_spec,
            scratch_shapes=[pltpu.VMEM((1, PC_FEAT_DIM), jnp.float32),   # sum(mask*pc)
                            pltpu.VMEM((1, 1), jnp.float32)],            # max(mask)
        ),
        compiler_params=pltpu.CompilerParams(
            dimension_semantics=("parallel", "arbitrary"),
            vmem_limit_bytes=vmem_limit,
        ),
    )(pooled, mask_r, mask_pts, pc, *weight_args)

    # PyTorch: .view(-1, num_proposals, 8, 3)
    return out.reshape(B, NUM_PROPOSALS, 8, 3)


if __name__ == "__main__":
    key = jax.random.PRNGKey(0)
    k_rgb, k_mask, k_pc, k_params = jax.random.split(key, 4)

    B, H, W = 2, 64, 64            # 64x64 image -> 2x2 feature map (stride 32)
    n_pts = H * W                  # one point per mask pixel

    rgb = jax.random.uniform(k_rgb, (B, 3, H, W), jnp.float32)
    mask = jax.random.uniform(k_mask, (B, H, W), jnp.float32)
    pc_features = jax.random.normal(k_pc, (B, n_pts, PC_FEAT_DIM), jnp.float32)

    params = init_params(k_params)
    kparams = fold_params(params)

    boxes = multi_object_3d_bbox_forward(rgb, mask, pc_features, kparams)
    jax.block_until_ready(boxes)
    assert boxes.shape == (B, NUM_PROPOSALS, 8, 3)
    assert boxes.dtype == jnp.float32
    print("KERNEL_OK")
</pallas_src>

<mosaic_0001>
module attributes {stable_mosaic.version = 11 : i64} {
  func.func @_model_kernel(%arg0: i32, %arg1: i32, %arg2: memref<1x4x3xf32, #tpu.memory_space<vmem>>, %arg3: memref<1x4x1xf32, #tpu.memory_space<vmem>>, %arg4: memref<1x1x4096xf32, #tpu.memory_space<vmem>>, %arg5: memref<1x4096x33xf32, #tpu.memory_space<vmem>>, %arg6: memref<3x512xbf16, #tpu.memory_space<vmem>>, %arg7: memref<1x512xf32, #tpu.memory_space<vmem>>, %arg8: memref<1x512xf32, #tpu.memory_space<vmem>>, %arg9: memref<33x512xbf16, #tpu.memory_space<vmem>>, %arg10: memref<1x512xf32, #tpu.memory_space<vmem>>, %arg11: memref<1024x512xbf16, #tpu.memory_space<vmem>>, %arg12: memref<1x512xf32, #tpu.memory_space<vmem>>, %arg13: memref<512x256xbf16, #tpu.memory_space<vmem>>, %arg14: memref<1x256xf32, #tpu.memory_space<vmem>>, %arg15: memref<256x256xbf16, #tpu.memory_space<vmem>>, %arg16: memref<1x256xf32, #tpu.memory_space<vmem>>, %arg17: memref<256x600xbf16, #tpu.memory_space<vmem>>, %arg18: memref<1x600xf32, #tpu.memory_space<vmem>>, %arg19: memref<1x1x600xf32, #tpu.memory_space<vmem>>, %arg20: memref<1x33xf32, #tpu.memory_space<vmem>>, %arg21: memref<1x1xf32, #tpu.memory_space<vmem>>) attributes {dimension_semantics = [#tpu.dimension_semantics<parallel>, #tpu.dimension_semantics<arbitrary>], iteration_bounds = array<i64: 2, 1>, scalar_prefetch = 0 : i64, scratch_operands = 2 : i64, tpu.core_type = #tpu.core_type<tc>, window_params = [{transform_indices = @transform_0, window_bounds = array<i64: 1, 4, 3>}, {transform_indices = @transform_1, window_bounds = array<i64: 1, 4, 1>}, {transform_indices = @transform_2, window_bounds = array<i64: 1, 1, 4096>}, {transform_indices = @transform_3, window_bounds = array<i64: 1, 4096, 33>}, {pipeline_mode = #tpu.pipeline_mode<synchronous>, transform_indices = @transform_4, window_bounds = array<i64: 3, 512>}, {pipeline_mode = #tpu.pipeline_mode<synchronous>, transform_indices = @transform_5, window_bounds = array<i64: 1, 512>}, {pipeline_mode = #tpu.pipeline_mode<synchronous>, transform_indices = @transform_6, window_bounds = array<i64: 1, 512>}, {pipeline_mode = #tpu.pipeline_mode<synchronous>, transform_indices = @transform_7, window_bounds = array<i64: 33, 512>}, {pipeline_mode = #tpu.pipeline_mode<synchronous>, transform_indices = @transform_8, window_bounds = array<i64: 1, 512>}, {pipeline_mode = #tpu.pipeline_mode<synchronous>, transform_indices = @transform_9, window_bounds = array<i64: 1024, 512>}, {pipeline_mode = #tpu.pipeline_mode<synchronous>, transform_indices = @transform_10, window_bounds = array<i64: 1, 512>}, {pipeline_mode = #tpu.pipeline_mode<synchronous>, transform_indices = @transform_11, window_bounds = array<i64: 512, 256>}, {pipeline_mode = #tpu.pipeline_mode<synchronous>, transform_indices = @transform_12, window_bounds = array<i64: 1, 256>}, {pipeline_mode = #tpu.pipeline_mode<synchronous>, transform_indices = @transform_13, window_bounds = array<i64: 256, 256>}, {pipeline_mode = #tpu.pipeline_mode<synchronous>, transform_indices = @transform_14, window_bounds = array<i64: 1, 256>}, {pipeline_mode = #tpu.pipeline_mode<synchronous>, transform_indices = @transform_15, window_bounds = array<i64: 256, 600>}, {pipeline_mode = #tpu.pipeline_mode<synchronous>, transform_indices = @transform_16, window_bounds = array<i64: 1, 600>}, {transform_indices = @transform_17, window_bounds = array<i64: 1, 1, 600>}]} {
    %c0_i32 = arith.constant 0 : i32
    %0 = arith.cmpi eq, %arg1, %c0_i32 : i32
    %1 = arith.extui %0 : i1 to i32
    %c0_i32_0 = arith.constant 0 : i32
    %2 = arith.cmpi ne, %1, %c0_i32_0 : i32
    scf.if %2 {
      %cst_17 = arith.constant 0.000000e+00 : f32
      %19 = vector.broadcast %cst_17 : f32 to vector<1x33xf32>
      %c0_18 = arith.constant 0 : index
      %c0_19 = arith.constant 0 : index
      %20 = vector.load %arg20[%c0_18, %c0_19] : memref<1x33xf32, #tpu.memory_space<vmem>>, vector<1x33xf32>
      tpu.vector_store %arg20[%c0_18, %c0_19], %19 {strides = array<i32>} : memref<1x33xf32, #tpu.memory_space<vmem>>, vector<1x33xf32>,
      %cst_20 = arith.constant 0.000000e+00 : f32
      %21 = vector.broadcast %cst_20 : f32 to vector<1x1xf32>
      %c0_21 = arith.constant 0 : index
      %c0_22 = arith.constant 0 : index
      %22 = vector.load %arg21[%c0_21, %c0_22] : memref<1x1xf32, #tpu.memory_space<vmem>>, vector<1x1xf32>
      tpu.vector_store %arg21[%c0_21, %c0_22], %21 {strides = array<i32>} : memref<1x1xf32, #tpu.memory_space<vmem>>, vector<1x1xf32>,
    } else {
    }
    %c0 = arith.constant 0 : index
    %c0_1 = arith.constant 0 : index
    %c0_2 = arith.constant 0 : index
    %3 = vector.load %arg4[%c0, %c0_1, %c0_2] : memref<1x1x4096xf32, #tpu.memory_space<vmem>>, vector<1x1x4096xf32>
    %4 = vector.shape_cast %3 : vector<1x1x4096xf32> to vector<1x4096xf32>
    %c0_3 = arith.constant 0 : index
    %c0_4 = arith.constant 0 : index
    %c0_5 = arith.constant 0 : index
    %5 = vector.load %arg5[%c0_3, %c0_4, %c0_5] : memref<1x4096x33xf32, #tpu.memory_space<vmem>>, vector<1x4096x33xf32>
    %6 = vector.shape_cast %5 : vector<1x4096x33xf32> to vector<4096x33xf32>
    %c0_6 = arith.constant 0 : index
    %c0_7 = arith.constant 0 : index
    %7 = vector.load %arg20[%c0_6, %c0_7] : memref<1x33xf32, #tpu.memory_space<vmem>>, vector<1x33xf32>
    %cst = arith.constant dense<0.000000e+00> : vector<1x33xf32>
    %8 = tpu.matmul %4, %6, %cst {dimension_numbers = #tpu.dot_dimension_numbers<[1], [0], [0], [1], [0, 0, 1, 1], [], []>} : vector<1x4096xf32>, vector<4096x33xf32>, vector<1x33xf32> -> vector<1x33xf32>
    %9 = arith.addf %7, %8 : vector<1x33xf32>
    %c0_8 = arith.constant 0 : index
    %c0_9 = arith.constant 0 : index
    %10 = vector.load %arg20[%c0_8, %c0_9] : memref<1x33xf32, #tpu.memory_space<vmem>>, vector<1x33xf32>
    tpu.vector_store %arg20[%c0_8, %c0_9], %9 {strides = array<i32>} : memref<1x33xf32, #tpu.memory_space<vmem>>, vector<1x33xf32>,
    %c0_10 = arith.constant 0 : index
    %c0_11 = arith.constant 0 : index
    %11 = vector.load %arg21[%c0_10, %c0_11] : memref<1x1xf32, #tpu.memory_space<vmem>>, vector<1x1xf32>
    %cst_12 = arith.constant dense<0xFF800000> : vector<1xf32>
    %12 = vector.multi_reduction <maximumf>, %4, %cst_12 [1] : vector<1x4096xf32> to vector<1xf32>
    %13 = vector.shape_cast %12 : vector<1xf32> to vector<1x1xf32>
    %14 = arith.maximumf %11, %13 : vector<1x1xf32>
    %c0_13 = arith.constant 0 : index
    %c0_14 = arith.constant 0 : index
    %15 = vector.load %arg21[%c0_13, %c0_14] : memref<1x1xf32, #tpu.memory_space<vmem>>, vector<1x1xf32>
    tpu.vector_store %arg21[%c0_13, %c0_14], %14 {strides = array<i32>} : memref<1x1xf32, #tpu.memory_space<vmem>>, vector<1x1xf32>,
    %c0_i32_15 = arith.constant 0 : i32
    %16 = arith.cmpi eq, %arg1, %c0_i32_15 : i32
    %17 = arith.extui %16 : i1 to i32
    %c0_i32_16 = arith.constant 0 : i32
    %18 = arith.cmpi ne, %17, %c0_i32_16 : i32
    scf.if %18 {
      %c0_17 = arith.constant 0 : index
      %c0_18 = arith.constant 0 : index
      %c0_19 = arith.constant 0 : index
      %19 = vector.load %arg3[%c0_17, %c0_18, %c0_19] : memref<1x4x1xf32, #tpu.memory_space<vmem>>, vector<1x4x1xf32>
      %20 = vector.shape_cast %19 : vector<1x4x1xf32> to vector<4x1xf32>
      %c0_20 = arith.constant 0 : index
      %c0_21 = arith.constant 0 : index
      %c0_22 = arith.constant 0 : index
      %21 = vector.load %arg2[%c0_20, %c0_21, %c0_22] : memref<1x4x3xf32, #tpu.memory_space<vmem>>, vector<1x4x3xf32>
      %22 = vector.shape_cast %21 : vector<1x4x3xf32> to vector<4x3xf32>
      %23 = vector.broadcast %20 : vector<4x1xf32> to vector<4x3xf32>
      %24 = arith.mulf %22, %23 : vector<4x3xf32>
      %cst_23 = arith.constant dense<0.000000e+00> : vector<3xf32>
      %25 = vector.multi_reduction <add>, %24, %cst_23 [0] : vector<4x3xf32> to vector<3xf32>
      %26 = vector.shape_cast %25 : vector<3xf32> to vector<1x3xf32>
      %cst_24 = arith.constant dense<0.000000e+00> : vector<1xf32>
      %27 = vector.multi_reduction <add>, %20, %cst_24 [0] : vector<4x1xf32> to vector<1xf32>
      %28 = vector.shape_cast %27 : vector<1xf32> to vector<1x1xf32>
      %29 = arith.truncf %26 : vector<1x3xf32> to vector<1x3xbf16>
      %c0_25 = arith.constant 0 : index
      %c0_26 = arith.constant 0 : index
      %30 = vector.load %arg6[%c0_25, %c0_26] : memref<3x512xbf16, #tpu.memory_space<vmem>>, vector<3x512xbf16>
      %cst_27 = arith.constant dense<0.000000e+00> : vector<1x512xf32>
      %31 = tpu.matmul %29, %30, %cst_27 {dimension_numbers = #tpu.dot_dimension_numbers<[1], [0], [0], [1], [0, 0, 1, 1], [], []>} : vector<1x3xbf16>, vector<3x512xbf16>, vector<1x512xf32> -> vector<1x512xf32>
      %c0_28 = arith.constant 0 : index
      %c0_29 = arith.constant 0 : index
      %32 = vector.load %arg7[%c0_28, %c0_29] : memref<1x512xf32, #tpu.memory_space<vmem>>, vector<1x512xf32>
      %33 = vector.broadcast %28 : vector<1x1xf32> to vector<1x512xf32>
      %34 = arith.mulf %33, %32 : vector<1x512xf32>
      %35 = arith.addf %31, %34 : vector<1x512xf32>
      %cst_30 = arith.constant 2.500000e-01 : f32
      %36 = vector.broadcast %cst_30 : f32 to vector<1x512xf32>
      %37 = arith.mulf %35, %36 : vector<1x512xf32>
      %c0_31 = arith.constant 0 : index
      %c0_32 = arith.constant 0 : index
      %38 = vector.load %arg8[%c0_31, %c0_32] : memref<1x512xf32, #tpu.memory_space<vmem>>, vector<1x512xf32>
      %39 = arith.addf %37, %38 : vector<1x512xf32>
      %c0_33 = arith.constant 0 : index
      %c0_34 = arith.constant 0 : index
      %40 = vector.load %arg21[%c0_33, %c0_34] : memref<1x1xf32, #tpu.memory_space<vmem>>, vector<1x1xf32>
      %cst_35 = arith.constant 9.99999993E-9 : f32
      %41 = vector.broadcast %cst_35 : f32 to vector<1x1xf32>
      %42 = arith.addf %40, %41 : vector<1x1xf32>
      %43 = tpu.reciprocal %42 : vector<1x1xf32> -> vector<1x1xf32>
      %c0_36 = arith.constant 0 : index
      %c0_37 = arith.constant 0 : index
      %44 = vector.load %arg20[%c0_36, %c0_37] : memref<1x33xf32, #tpu.memory_space<vmem>>, vector<1x33xf32>
      %cst_38 = arith.constant 2.44140625E-4 : f32
      %45 = vector.broadcast %cst_38 : f32 to vector<1x1xf32>
      %46 = arith.mulf %45, %43 : vector<1x1xf32>
      %47 = vector.broadcast %46 : vector<1x1xf32> to vector<1x33xf32>
      %48 = arith.mulf %44, %47 : vector<1x33xf32>
      %49 = arith.truncf %48 : vector<1x33xf32> to vector<1x33xbf16>
      %c0_39 = arith.constant 0 : index
      %c0_40 = arith.constant 0 : index
      %50 = vector.load %arg9[%c0_39, %c0_40] : memref<33x512xbf16, #tpu.memory_space<vmem>>, vector<33x512xbf16>
      %cst_41 = arith.constant dense<0.000000e+00> : vector<1x512xf32>
      %51 = tpu.matmul %49, %50, %cst_41 {dimension_numbers = #tpu.dot_dimension_numbers<[1], [0], [0], [1], [0, 0, 1, 1], [], []>} : vector<1x33xbf16>, vector<33x512xbf16>, vector<1x512xf32> -> vector<1x512xf32>
      %c0_42 = arith.constant 0 : index
      %c0_43 = arith.constant 0 : index
      %52 = vector.load %arg10[%c0_42, %c0_43] : memref<1x512xf32, #tpu.memory_space<vmem>>, vector<1x512xf32>
      %53 = arith.addf %51, %52 : vector<1x512xf32>
      %54 = arith.truncf %39 : vector<1x512xf32> to vector<1x512xbf16>
      %c0_44 = arith.constant 0 : index
      %c0_45 = arith.constant 0 : index
      %55 = vector.load %arg11[%c0_44, %c0_45] : memref<1024x512xbf16, #tpu.memory_space<vmem>>, vector<512x512xbf16>
      %cst_46 = arith.constant dense<0.000000e+00> : vector<1x512xf32>
      %56 = tpu.matmul %54, %55, %cst_46 {dimension_numbers = #tpu.dot_dimension_numbers<[1], [0], [0], [1], [0, 0, 1, 1], [], []>} : vector<1x512xbf16>, vector<512x512xbf16>, vector<1x512xf32> -> vector<1x512xf32>
      %57 = arith.truncf %53 : vector<1x512xf32> to vector<1x512xbf16>
      %c512 = arith.constant 512 : index
      %c0_47 = arith.constant 0 : index
      %58 = vector.load %arg11[%c512, %c0_47] : memref<1024x512xbf16, #tpu.memory_space<vmem>>, vector<512x512xbf16>
      %cst_48 = arith.constant dense<0.000000e+00> : vector<1x512xf32>
      %59 = tpu.matmul %57, %58, %cst_48 {dimension_numbers = #tpu.dot_dimension_numbers<[1], [0], [0], [1], [0, 0, 1, 1], [], []>} : vector<1x512xbf16>, vector<512x512xbf16>, vector<1x512xf32> -> vector<1x512xf32>
      %60 = arith.addf %56, %59 : vector<1x512xf32>
      %c0_49 = arith.constant 0 : index
      %c0_50 = arith.constant 0 : index
      %61 = vector.load %arg12[%c0_49, %c0_50] : memref<1x512xf32, #tpu.memory_space<vmem>>, vector<1x512xf32>
      %62 = arith.addf %60, %61 : vector<1x512xf32>
      %63 = arith.truncf %62 : vector<1x512xf32> to vector<1x512xbf16>
      %c0_51 = arith.constant 0 : index
      %c0_52 = arith.constant 0 : index
      %64 = vector.load %arg13[%c0_51, %c0_52] : memref<512x256xbf16, #tpu.memory_space<vmem>>, vector<512x256xbf16>
      %cst_53 = arith.constant dense<0.000000e+00> : vector<1x256xf32>
      %65 = tpu.matmul %63, %64, %cst_53 {dimension_numbers = #tpu.dot_dimension_numbers<[1], [0], [0], [1], [0, 0, 1, 1], [], []>} : vector<1x512xbf16>, vector<512x256xbf16>, vector<1x256xf32> -> vector<1x256xf32>
      %c0_54 = arith.constant 0 : index
      %c0_55 = arith.constant 0 : index
      %66 = vector.load %arg14[%c0_54, %c0_55] : memref<1x256xf32, #tpu.memory_space<vmem>>, vector<1x256xf32>
      %67 = arith.addf %65, %66 : vector<1x256xf32>
      %cst_56 = arith.constant 0.000000e+00 : f32
      %68 = vector.broadcast %cst_56 : f32 to vector<1x256xf32>
      %69 = arith.maximumf %67, %68 : vector<1x256xf32>
      %70 = arith.truncf %69 : vector<1x256xf32> to vector<1x256xbf16>
      %c0_57 = arith.constant 0 : index
      %c0_58 = arith.constant 0 : index
      %71 = vector.load %arg15[%c0_57, %c0_58] : memref<256x256xbf16, #tpu.memory_space<vmem>>, vector<256x256xbf16>
      %cst_59 = arith.constant dense<0.000000e+00> : vector<1x256xf32>
      %72 = tpu.matmul %70, %71, %cst_59 {dimension_numbers = #tpu.dot_dimension_numbers<[1], [0], [0], [1], [0, 0, 1, 1], [], []>} : vector<1x256xbf16>, vector<256x256xbf16>, vector<1x256xf32> -> vector<1x256xf32>
      %c0_60 = arith.constant 0 : index
      %c0_61 = arith.constant 0 : index
      %73 = vector.load %arg16[%c0_60, %c0_61] : memref<1x256xf32, #tpu.memory_space<vmem>>, vector<1x256xf32>
      %74 = arith.addf %72, %73 : vector<1x256xf32>
      %cst_62 = arith.constant 0.000000e+00 : f32
      %75 = vector.broadcast %cst_62 : f32 to vector<1x256xf32>
      %76 = arith.maximumf %74, %75 : vector<1x256xf32>
      %77 = arith.truncf %76 : vector<1x256xf32> to vector<1x256xbf16>
      %c0_63 = arith.constant 0 : index
      %c0_64 = arith.constant 0 : index
      %78 = vector.load %arg17[%c0_63, %c0_64] : memref<256x600xbf16, #tpu.memory_space<vmem>>, vector<256x600xbf16>
      %cst_65 = arith.constant dense<0.000000e+00> : vector<1x600xf32>
      %79 = tpu.matmul %77, %78, %cst_65 {dimension_numbers = #tpu.dot_dimension_numbers<[1], [0], [0], [1], [0, 0, 1, 1], [], []>} : vector<1x256xbf16>, vector<256x600xbf16>, vector<1x600xf32> -> vector<1x600xf32>
      %c0_66 = arith.constant 0 : index
      %c0_67 = arith.constant 0 : index
      %80 = vector.load %arg18[%c0_66, %c0_67] : memref<1x600xf32, #tpu.memory_space<vmem>>, vector<1x600xf32>
      %81 = arith.addf %79, %80 : vector<1x600xf32>
      %82 = vector.shape_cast %81 : vector<1x600xf32> to vector<1x1x600xf32>
      %c0_68 = arith.constant 0 : index
      %c0_69 = arith.constant 0 : index
      %c0_70 = arith.constant 0 : index
      %83 = vector.load %arg19[%c0_68, %c0_69, %c0_70] : memref<1x1x600xf32, #tpu.memory_space<vmem>>, vector<1x1x600xf32>
      tpu.vector_store %arg19[%c0_68, %c0_69, %c0_70], %82 {strides = array<i32>} : memref<1x1x600xf32, #tpu.memory_space<vmem>>, vector<1x1x600xf32>,
    } else {
    }
    return
  }
  func.func @transform_0(%arg0: i32, %arg1: i32) -> (i32, i32, i32) {
    %c0_i32 = arith.constant 0 : i32
    %c0_i32_0 = arith.constant 0 : i32
    %c0_i32_1 = arith.constant 0 : i32
    return %arg0, %c0_i32, %c0_i32_0 : i32, i32, i32
  }
  func.func @transform_1(%arg0: i32, %arg1: i32) -> (i32, i32, i32) {
    %c0_i32 = arith.constant 0 : i32
    %c0_i32_0 = arith.constant 0 : i32
    %c0_i32_1 = arith.constant 0 : i32
    return %arg0, %c0_i32, %c0_i32_0 : i32, i32, i32
  }
  func.func @transform_2(%arg0: i32, %arg1: i32) -> (i32, i32, i32) {
    %c0_i32 = arith.constant 0 : i32
    %c0_i32_0 = arith.constant 0 : i32
    return %arg0, %c0_i32, %arg1 : i32, i32, i32
  }
  func.func @transform_3(%arg0: i32, %arg1: i32) -> (i32, i32, i32) {
    %c0_i32 = arith.constant 0 : i32
    %c0_i32_0 = arith.constant 0 : i32
    return %arg0, %arg1, %c0_i32 : i32, i32, i32
  }
  func.func @transform_4(%arg0: i32, %arg1: i32) -> (i32, i32) {
    %c0_i32 = arith.constant 0 : i32
    %c0_i32_0 = arith.constant 0 : i32
    %c0_i32_1 = arith.constant 0 : i32
    return %c0_i32, %c0_i32_0 : i32, i32
  }
  func.func @transform_5(%arg0: i32, %arg1: i32) -> (i32, i32) {
    %c0_i32 = arith.constant 0 : i32
    %c0_i32_0 = arith.constant 0 : i32
    %c0_i32_1 = arith.constant 0 : i32
    return %c0_i32, %c0_i32_0 : i32, i32
  }
  func.func @transform_6(%arg0: i32, %arg1: i32) -> (i32, i32) {
    %c0_i32 = arith.constant 0 : i32
    %c0_i32_0 = arith.constant 0 : i32
    %c0_i32_1 = arith.constant 0 : i32
    return %c0_i32, %c0_i32_0 : i32, i32
  }
  func.func @transform_7(%arg0: i32, %arg1: i32) -> (i32, i32) {
    %c0_i32 = arith.constant 0 : i32
    %c0_i32_0 = arith.constant 0 : i32
    %c0_i32_1 = arith.constant 0 : i32
    return %c0_i32, %c0_i32_0 : i32, i32
  }
  func.func @transform_8(%arg0: i32, %arg1: i32) -> (i32, i32) {
    %c0_i32 = arith.constant 0 : i32
    %c0_i32_0 = arith.constant 0 : i32
    %c0_i32_1 = arith.constant 0 : i32
    return %c0_i32, %c0_i32_0 : i32, i32
  }
  func.func @transform_9(%arg0: i32, %arg1: i32) -> (i32, i32) {
    %c0_i32 = arith.constant 0 : i32
    %c0_i32_0 = arith.constant 0 : i32
    %c0_i32_1 = arith.constant 0 : i32
    return %c0_i32, %c0_i32_0 : i32, i32
  }
  func.func @transform_10(%arg0: i32, %arg1: i32) -> (i32, i32) {
    %c0_i32 = arith.constant 0 : i32
    %c0_i32_0 = arith.constant 0 : i32
    %c0_i32_1 = arith.constant 0 : i32
    return %c0_i32, %c0_i32_0 : i32, i32
  }
  func.func @transform_11(%arg0: i32, %arg1: i32) -> (i32, i32) {
    %c0_i32 = arith.constant 0 : i32
    %c0_i32_0 = arith.constant 0 : i32
    %c0_i32_1 = arith.constant 0 : i32
    return %c0_i32, %c0_i32_0 : i32, i32
  }
  func.func @transform_12(%arg0: i32, %arg1: i32) -> (i32, i32) {
    %c0_i32 = arith.constant 0 : i32
    %c0_i32_0 = arith.constant 0 : i32
    %c0_i32_1 = arith.constant 0 : i32
    return %c0_i32, %c0_i32_0 : i32, i32
  }
  func.func @transform_13(%arg0: i32, %arg1: i32) -> (i32, i32) {
    %c0_i32 = arith.constant 0 : i32
    %c0_i32_0 = arith.constant 0 : i32
    %c0_i32_1 = arith.constant 0 : i32
    return %c0_i32, %c0_i32_0 : i32, i32
  }
  func.func @transform_14(%arg0: i32, %arg1: i32) -> (i32, i32) {
    %c0_i32 = arith.constant 0 : i32
    %c0_i32_0 = arith.constant 0 : i32
    %c0_i32_1 = arith.constant 0 : i32
    return %c0_i32, %c0_i32_0 : i32, i32
  }
  func.func @transform_15(%arg0: i32, %arg1: i32) -> (i32, i32) {
    %c0_i32 = arith.constant 0 : i32
    %c0_i32_0 = arith.constant 0 : i32
    %c0_i32_1 = arith.constant 0 : i32
    return %c0_i32, %c0_i32_0 : i32, i32
  }
  func.func @transform_16(%arg0: i32, %arg1: i32) -> (i32, i32) {
    %c0_i32 = arith.constant 0 : i32
    %c0_i32_0 = arith.constant 0 : i32
    %c0_i32_1 = arith.constant 0 : i32
    return %c0_i32, %c0_i32_0 : i32, i32
  }
  func.func @transform_17(%arg0: i32, %arg1: i32) -> (i32, i32, i32) {
    %c0_i32 = arith.constant 0 : i32
    %c0_i32_0 = arith.constant 0 : i32
    %c0_i32_1 = arith.constant 0 : i32
    return %arg0, %c0_i32, %c0_i32_0 : i32, i32, i32
  }
}

</mosaic_0001>

<llo_original>
// kernel: multi_object_3d_bbox_forward.1
$region0: #{multi_object_3d_bbox_forward.1}
  #allocation0 [shape = 'u32[]', space=smem, size = 0x4, offset = 0x4, fixed_abs, tag = 'smem constant byte address 0x4 - core index']
  #allocation1 [shape = 'u32[144,128]{1,0:T(1,128)}', space=vmem, size = 0x12000, scoped, tag = 'internal scratch']
  #allocation2 [shape = 'f32[1,33]{1,0:T(1,128)}', space=vmem, size = 0x200, scoped, tag = 'scratch operand']
  #allocation3 [shape = 'f32[1,1]{1,0:T(1,128)}', space=vmem, size = 0x200, scoped, tag = 'scratch operand']
  %s0 = inlined_call_operand.vmem [shape: f32[2,4,3], index: 0, kind: input, shape index: {}]
  %s1 = inlined_call_operand.vmem [shape: f32[2,4,1], index: 1, kind: input, shape index: {}]
  %s2 = inlined_call_operand.vmem [shape: f32[2,1,4096], index: 2, kind: input, shape index: {}]
  %s3 = inlined_call_operand.vmem [shape: f32[2,4096,33], index: 3, kind: input, shape index: {}]
  %s4 = inlined_call_operand.vmem [shape: bf16[3,512], index: 4, kind: input, shape index: {}]
  %s5 = inlined_call_operand.vmem [shape: f32[1,512], index: 5, kind: input, shape index: {}]
  %s6 = inlined_call_operand.vmem [shape: f32[1,512], index: 6, kind: input, shape index: {}]
  %s7 = inlined_call_operand.vmem [shape: bf16[33,512], index: 7, kind: input, shape index: {}]
  %s8 = inlined_call_operand.vmem [shape: f32[1,512], index: 8, kind: input, shape index: {}]
  %s9 = inlined_call_operand.vmem [shape: bf16[1024,512], index: 9, kind: input, shape index: {}]
  %s10 = inlined_call_operand.vmem [shape: f32[1,512], index: 10, kind: input, shape index: {}]
  %s11 = inlined_call_operand.vmem [shape: bf16[512,256], index: 11, kind: input, shape index: {}]
  %s12 = inlined_call_operand.vmem [shape: f32[1,256], index: 12, kind: input, shape index: {}]
  %s13 = inlined_call_operand.vmem [shape: bf16[256,256], index: 13, kind: input, shape index: {}]
  %s14 = inlined_call_operand.vmem [shape: f32[1,256], index: 14, kind: input, shape index: {}]
  %s15 = inlined_call_operand.vmem [shape: bf16[256,600], index: 15, kind: input, shape index: {}]
  %s16 = inlined_call_operand.vmem [shape: f32[1,600], index: 16, kind: input, shape index: {}]
  %s17 = inlined_call_operand.vmem [shape: f32[2,1,600], index: 17, kind: output, shape index: {}]
  %s18 = sld [smem:[#allocation0]]
  $region109: #{multi_object_3d_bbox_forward.1} parent=0
    _
  %s20 = ssub.s32 1, %s18
  %s21 = scalar_select 0, %s20, %s18
  loop: start=0, step=1, limit=4
  $region2: #{multi_object_3d_bbox_forward.1} parent=0 // loop_pre_header
    _
  $region3: #{multi_object_3d_bbox_forward.1} parent=0 // loop_header
    %s23 = sphi 0, %s27
    %p24 = scmp.ge.s32.totalorder %s23, 4
    %s30 = sphi 0, %s42
    %s31 = sphi 0, %s38
    %s32 = sphi 0, %s30
    %s33 = sphi 0, %s31
    %s34 = sphi 0, %s32
    %s35 = sphi 0, %s33
    %s45 = sphi 0, %s47
    %s48 = sphi 0, %s45
    %s49 = sphi 0, %s48
    %s65 = sphi 0, %s49
    %s71 = sphi 0, %s73
    %s74 = sphi 0, %s71
    %s75 = sphi 0, %s74
    %s91 = sphi 0, %s75
    %s99 = sphi 0, %s101
    %s102 = sphi 0, %s99
    %s103 = sphi 0, %s102
    %s119 = sphi 0, %s103
    %s127 = sphi 0, %s129
    %s130 = sphi 0, %s127
    %s131 = sphi 0, %s130
    %s147 = sphi 0, %s131
    %s151 = sphi 0, %s151
    %s153 = sphi 0, %s151
    %s154 = sphi 0, %s153
    %s168 = sphi 0, %s154
    %s172 = sphi 0, %s172
    %s174 = sphi 0, %s172
    %s175 = sphi 0, %s174
    %s189 = sphi 0, %s175
    %s193 = sphi 0, %s193
    %s195 = sphi 0, %s193
    %s196 = sphi 0, %s195
    %s210 = sphi 0, %s196
    %s214 = sphi 0, %s214
    %s216 = sphi 0, %s214
    %s217 = sphi 0, %s216
    %s231 = sphi 0, %s217
    %s235 = sphi 0, %s235
    %s237 = sphi 0, %s235
    %s238 = sphi 0, %s237
    %s252 = sphi 0, %s238
    %s256 = sphi 0, %s256
    %s258 = sphi 0, %s256
    %s259 = sphi 0, %s258
    %s273 = sphi 0, %s259
    %s277 = sphi 0, %s277
    %s279 = sphi 0, %s277
    %s280 = sphi 0, %s279
    %s294 = sphi 0, %s280
    %s298 = sphi 0, %s298
    %s300 = sphi 0, %s298
    %s301 = sphi 0, %s300
    %s315 = sphi 0, %s301
    %s319 = sphi 0, %s319
    %s321 = sphi 0, %s319
    %s322 = sphi 0, %s321
    %s336 = sphi 0, %s322
    %s340 = sphi 0, %s340
    %s342 = sphi 0, %s340
    %s343 = sphi 0, %s342
    %s357 = sphi 0, %s343
    %s361 = sphi 0, %s361
    %s363 = sphi 0, %s361
    %s364 = sphi 0, %s363
    %s378 = sphi 0, %s364
    %s382 = sphi 0, %s382
    %s384 = sphi 0, %s382
    %s385 = sphi 0, %s384
    %s399 = sphi 0, %s385
    %s403 = sphi 0, %s403
    %s405 = sphi 0, %s403
    %s406 = sphi 0, %s405
    %s420 = sphi 0, %s406
    %s426 = sphi 0, %s428
    %s429 = sphi 0, %s426
    %s430 = sphi 0, %s429
    %s446 = sphi 0, %s430
  $region4: #{multi_object_3d_bbox_forward.1} parent=0 // loop_header_branch
    %26 = sbr.rel (%p24) target = $region8
  $region5: #{multi_object_3d_bbox_forward.1} parent=0 // loop_body
    %s28 = ssub.s32 %s23, 1
    %s29 = ssub.s32 %s23, 2
    %s36 = sadd.s32 1, %s31
    %p37 = scmp.ge.s32.totalorder %s36, 1
    %s38 = scalar_select %p37, 0, %s36
    %s39 = sadd.s32 1, %s30
    %s40 = scalar_select %p37, %s39, %s30
    %p41 = scmp.ge.s32.totalorder %s40, 2
    %s42 = scalar_select %p41, 0, %s40
    %s43 = ssub.s32 %s30, %s42
    %p44 = scmp.eq.s32.totalorder %s43, 0
    %s46 = sadd.s32 %s45, 1
    %s47 = scalar_select %p44, %s45, %s46
    %p50 = pneg %p44
    %p51 = scmp.eq.s32.totalorder %s23, 1
    %p52 = por %p50, %p51
    %p53 = scmp.ne.s32.totalorder %s45, %s48
    %p54 = scmp.eq.s32.totalorder %s23, 0
    %p55 = por %p53, %p54
    %p56 = scmp.ne.s32.totalorder %s45, %s48
    %p57 = scmp.eq.s32.totalorder %s28, 1
    %p58 = por %p56, %p57
    %p59 = scmp.ne.s32.totalorder %s48, %s49
    %p60 = scmp.eq.s32.totalorder %s28, 0
    %p61 = por %p59, %p60
    %p62 = scmp.ne.s32.totalorder %s48, %s49
    %p63 = scmp.eq.s32.totalorder %s29, 1
    %p64 = por %p62, %p63
    %p66 = scmp.ne.s32.totalorder %s49, %s65
    %p67 = scmp.eq.s32.totalorder %s29, 0
    %p68 = por %p66, %p67
    %s69 = ssub.s32 %s30, %s42
    %p70 = scmp.eq.s32.totalorder %s69, 0
    %s72 = sadd.s32 %s71, 1
    %s73 = scalar_select %p70, %s71, %s72
    %p76 = pneg %p70
    %p77 = scmp.eq.s32.totalorder %s23, 1
    %p78 = por %p76, %p77
    %p79 = scmp.ne.s32.totalorder %s71, %s74
    %p80 = scmp.eq.s32.totalorder %s23, 0
    %p81 = por %p79, %p80
    %p82 = scmp.ne.s32.totalorder %s71, %s74
    %p83 = scmp.eq.s32.totalorder %s28, 1
    %p84 = por %p82, %p83
    %p85 = scmp.ne.s32.totalorder %s74, %s75
    %p86 = scmp.eq.s32.totalorder %s28, 0
    %p87 = por %p85, %p86
    %p88 = scmp.ne.s32.totalorder %s74, %s75
    %p89 = scmp.eq.s32.totalorder %s29, 1
    %p90 = por %p88, %p89
    %p92 = scmp.ne.s32.totalorder %s75, %s91
    %p93 = scmp.eq.s32.totalorder %s29, 0
    %p94 = por %p92, %p93
    %s95 = ssub.s32 %s30, %s42
    %s96 = ssub.s32 %s31, %s38
    %s97 = sor.u32 %s95, %s96
    %p98 = scmp.eq.s32.totalorder %s97, 0
    %s100 = sadd.s32 %s99, 1
    %s101 = scalar_select %p98, %s99, %s100
    %p104 = pneg %p98
    %p105 = scmp.eq.s32.totalorder %s23, 1
    %p106 = por %p104, %p105
    %p107 = scmp.ne.s32.totalorder %s99, %s102
    %p108 = scmp.eq.s32.totalorder %s23, 0
    %p109 = por %p107, %p108
    %p110 = scmp.ne.s32.totalorder %s99, %s102
    %p111 = scmp.eq.s32.totalorder %s28, 1
    %p112 = por %p110, %p111
    %p113 = scmp.ne.s32.totalorder %s102, %s103
    %p114 = scmp.eq.s32.totalorder %s28, 0
    %p115 = por %p113, %p114
    %p116 = scmp.ne.s32.totalorder %s102, %s103
    %p117 = scmp.eq.s32.totalorder %s29, 1
    %p118 = por %p116, %p117
    %p120 = scmp.ne.s32.totalorder %s103, %s119
    %p121 = scmp.eq.s32.totalorder %s29, 0
    %p122 = por %p120, %p121
    %s123 = ssub.s32 %s30, %s42
    %s124 = ssub.s32 %s31, %s38
    %s125 = sor.u32 %s123, %s124
    %p126 = scmp.eq.s32.totalorder %s125, 0
    %s128 = sadd.s32 %s127, 1
    %s129 = scalar_select %p126, %s127, %s128
    %p132 = pneg %p126
    %p133 = scmp.eq.s32.totalorder %s23, 1
    %p134 = por %p132, %p133
    %p135 = scmp.ne.s32.totalorder %s127, %s130
    %p136 = scmp.eq.s32.totalorder %s23, 0
    %p137 = por %p135, %p136
    %p138 = scmp.ne.s32.totalorder %s127, %s130
    %p139 = scmp.eq.s32.totalorder %s28, 1
    %p140 = por %p138, %p139
    %p141 = scmp.ne.s32.totalorder %s130, %s131
    %p142 = scmp.eq.s32.totalorder %s28, 0
    %p143 = por %p141, %p142
    %p144 = scmp.ne.s32.totalorder %s130, %s131
    %p145 = scmp.eq.s32.totalorder %s29, 1
    %p146 = por %p144, %p145
    %p148 = scmp.ne.s32.totalorder %s131, %s147
    %p149 = scmp.eq.s32.totalorder %s29, 0
    %p150 = por %p148, %p149
    %s152 = sadd.s32 %s151, 1
    %p155 = scmp.eq.s32.totalorder %s23, 1
    %p156 = scmp.ne.s32.totalorder %s151, %s153
    %p157 = scmp.eq.s32.totalorder %s23, 0
    %p158 = por %p156, %p157
    %p159 = scmp.ne.s32.totalorder %s151, %s153
    %p160 = scmp.eq.s32.totalorder %s28, 1
    %p161 = por %p159, %p160
    %p162 = scmp.ne.s32.totalorder %s153, %s154
    %p163 = scmp.eq.s32.totalorder %s28, 0
    %p164 = por %p162, %p163
    %p165 = scmp.ne.s32.totalorder %s153, %s154
    %p166 = scmp.eq.s32.totalorder %s29, 1
    %p167 = por %p165, %p166
    %p169 = scmp.ne.s32.totalorder %s154, %s168
    %p170 = scmp.eq.s32.totalorder %s29, 0
    %p171 = por %p169, %p170
    %s173 = sadd.s32 %s172, 1
    %p176 = scmp.eq.s32.totalorder %s23, 1
    %p177 = scmp.ne.s32.totalorder %s172, %s174
    %p178 = scmp.eq.s32.totalorder %s23, 0
    %p179 = por %p177, %p178
    %p180 = scmp.ne.s32.totalorder %s172, %s174
    %p181 = scmp.eq.s32.totalorder %s28, 1
    %p182 = por %p180, %p181
    %p183 = scmp.ne.s32.totalorder %s174, %s175
    %p184 = scmp.eq.s32.totalorder %s28, 0
    %p185 = por %p183, %p184
    %p186 = scmp.ne.s32.totalorder %s174, %s175
    %p187 = scmp.eq.s32.totalorder %s29, 1
    %p188 = por %p186, %p187
    %p190 = scmp.ne.s32.totalorder %s175, %s189
    %p191 = scmp.eq.s32.totalorder %s29, 0
    %p192 = por %p190, %p191
    %s194 = sadd.s32 %s193, 1
    %p197 = scmp.eq.s32.totalorder %s23, 1
    %p198 = scmp.ne.s32.totalorder %s193, %s195
    %p199 = scmp.eq.s32.totalorder %s23, 0
    %p200 = por %p198, %p199
    %p201 = scmp.ne.s32.totalorder %s193, %s195
    %p202 = scmp.eq.s32.totalorder %s28, 1
    %p203 = por %p201, %p202
    %p204 = scmp.ne.s32.totalorder %s195, %s196
    %p205 = scmp.eq.s32.totalorder %s28, 0
    %p206 = por %p204, %p205
    %p207 = scmp.ne.s32.totalorder %s195, %s196
    %p208 = scmp.eq.s32.totalorder %s29, 1
    %p209 = por %p207, %p208
    %p211 = scmp.ne.s32.totalorder %s196, %s210
    %p212 = scmp.eq.s32.totalorder %s29, 0
    %p213 = por %p211, %p212
    %s215 = sadd.s32 %s214, 1
    %p218 = scmp.eq.s32.totalorder %s23, 1
    %p219 = scmp.ne.s32.totalorder %s214, %s216
    %p220 = scmp.eq.s32.totalorder %s23, 0
    %p221 = por %p219, %p220
    %p222 = scmp.ne.s32.totalorder %s214, %s216
    %p223 = scmp.eq.s32.totalorder %s28, 1
    %p224 = por %p222, %p223
    %p225 = scmp.ne.s32.totalorder %s216, %s217
    %p226 = scmp.eq.s32.totalorder %s28, 0
    %p227 = por %p225, %p226
    %p228 = scmp.ne.s32.totalorder %s216, %s217
    %p229 = scmp.eq.s32.totalorder %s29, 1
    %p230 = por %p228, %p229
    %p232 = scmp.ne.s32.totalorder %s217, %s231
    %p233 = scmp.eq.s32.totalorder %s29, 0
    %p234 = por %p232, %p233
    %s236 = sadd.s32 %s235, 1
    %p239 = scmp.eq.s32.totalorder %s23, 1
    %p240 = scmp.ne.s32.totalorder %s235, %s237
    %p241 = scmp.eq.s32.totalorder %s23, 0
    %p242 = por %p240, %p241
    %p243 = scmp.ne.s32.totalorder %s235, %s237
    %p244 = scmp.eq.s32.totalorder %s28, 1
    %p245 = por %p243, %p244
    %p246 = scmp.ne.s32.totalorder %s237, %s238
    %p247 = scmp.eq.s32.totalorder %s28, 0
    %p248 = por %p246, %p247
    %p249 = scmp.ne.s32.totalorder %s237, %s238
    %p250 = scmp.eq.s32.totalorder %s29, 1
    %p251 = por %p249, %p250
    %p253 = scmp.ne.s32.totalorder %s238, %s252
    %p254 = scmp.eq.s32.totalorder %s29, 0
    %p255 = por %p253, %p254
    %s257 = sadd.s32 %s256, 1
    %p260 = scmp.eq.s32.totalorder %s23, 1
    %p261 = scmp.ne.s32.totalorder %s256, %s258
    %p262 = scmp.eq.s32.totalorder %s23, 0
    %p263 = por %p261, %p262
    %p264 = scmp.ne.s32.totalorder %s256, %s258
    %p265 = scmp.eq.s32.totalorder %s28, 1
    %p266 = por %p264, %p265
    %p267 = scmp.ne.s32.totalorder %s258, %s259
    %p268 = scmp.eq.s32.totalorder %s28, 0
    %p269 = por %p267, %p268
    %p270 = scmp.ne.s32.totalorder %s258, %s259
    %p271 = scmp.eq.s32.totalorder %s29, 1
    %p272 = por %p270, %p271
    %p274 = scmp.ne.s32.totalorder %s259, %s273
    %p275 = scmp.eq.s32.totalorder %s29, 0
    %p276 = por %p274, %p275
    %s278 = sadd.s32 %s277, 1
    %p281 = scmp.eq.s32.totalorder %s23, 1
    %p282 = scmp.ne.s32.totalorder %s277, %s279
    %p283 = scmp.eq.s32.totalorder %s23, 0
    %p284 = por %p282, %p283
    %p285 = scmp.ne.s32.totalorder %s277, %s279
    %p286 = scmp.eq.s32.totalorder %s28, 1
    %p287 = por %p285, %p286
    %p288 = scmp.ne.s32.totalorder %s279, %s280
    %p289 = scmp.eq.s32.totalorder %s28, 0
    %p290 = por %p288, %p289
    %p291 = scmp.ne.s32.totalorder %s279, %s280
    %p292 = scmp.eq.s32.totalorder %s29, 1
    %p293 = por %p291, %p292
    %p295 = scmp.ne.s32.totalorder %s280, %s294
    %p296 = scmp.eq.s32.totalorder %s29, 0
    %p297 = por %p295, %p296
    %s299 = sadd.s32 %s298, 1
    %p302 = scmp.eq.s32.totalorder %s23, 1
    %p303 = scmp.ne.s32.totalorder %s298, %s300
    %p304 = scmp.eq.s32.totalorder %s23, 0
    %p305 = por %p303, %p304
    %p306 = scmp.ne.s32.totalorder %s298, %s300
    %p307 = scmp.eq.s32.totalorder %s28, 1
    %p308 = por %p306, %p307
    %p309 = scmp.ne.s32.totalorder %s300, %s301
    %p310 = scmp.eq.s32.totalorder %s28, 0
    %p311 = por %p309, %p310
    %p312 = scmp.ne.s32.totalorder %s300, %s301
    %p313 = scmp.eq.s32.totalorder %s29, 1
    %p314 = por %p312, %p313
    %p316 = scmp.ne.s32.totalorder %s301, %s315
    %p317 = scmp.eq.s32.totalorder %s29, 0
    %p318 = por %p316, %p317
    %s320 = sadd.s32 %s319, 1
    %p323 = scmp.eq.s32.totalorder %s23, 1
    %p324 = scmp.ne.s32.totalorder %s319, %s321
    %p325 = scmp.eq.s32.totalorder %s23, 0
    %p326 = por %p324, %p325
    %p327 = scmp.ne.s32.totalorder %s319, %s321
    %p328 = scmp.eq.s32.totalorder %s28, 1
    %p329 = por %p327, %p328
    %p330 = scmp.ne.s32.totalorder %s321, %s322
    %p331 = scmp.eq.s32.totalorder %s28, 0
    %p332 = por %p330, %p331
    %p333 = scmp.ne.s32.totalorder %s321, %s322
    %p334 = scmp.eq.s32.totalorder %s29, 1
    %p335 = por %p333, %p334
    %p337 = scmp.ne.s32.totalorder %s322, %s336
    %p338 = scmp.eq.s32.totalorder %s29, 0
    %p339 = por %p337, %p338
    %s341 = sadd.s32 %s340, 1
    %p344 = scmp.eq.s32.totalorder %s23, 1
    %p345 = scmp.ne.s32.totalorder %s340, %s342
    %p346 = scmp.eq.s32.totalorder %s23, 0
    %p347 = por %p345, %p346
    %p348 = scmp.ne.s32.totalorder %s340, %s342
    %p349 = scmp.eq.s32.totalorder %s28, 1
    %p350 = por %p348, %p349
    %p351 = scmp.ne.s32.totalorder %s342, %s343
    %p352 = scmp.eq.s32.totalorder %s28, 0
    %p353 = por %p351, %p352
    %p354 = scmp.ne.s32.totalorder %s342, %s343
    %p355 = scmp.eq.s32.totalorder %s29, 1
    %p356 = por %p354, %p355
    %p358 = scmp.ne.s32.totalorder %s343, %s357
    %p359 = scmp.eq.s32.totalorder %s29, 0
    %p360 = por %p358, %p359
    %s362 = sadd.s32 %s361, 1
    %p365 = scmp.eq.s32.totalorder %s23, 1
    %p366 = scmp.ne.s32.totalorder %s361, %s363
    %p367 = scmp.eq.s32.totalorder %s23, 0
    %p368 = por %p366, %p367
    %p369 = scmp.ne.s32.totalorder %s361, %s363
    %p370 = scmp.eq.s32.totalorder %s28, 1
    %p371 = por %p369, %p370
    %p372 = scmp.ne.s32.totalorder %s363, %s364
    %p373 = scmp.eq.s32.totalorder %s28, 0
    %p374 = por %p372, %p373
    %p375 = scmp.ne.s32.totalorder %s363, %s364
    %p376 = scmp.eq.s32.totalorder %s29, 1
    %p377 = por %p375, %p376
    %p379 = scmp.ne.s32.totalorder %s364, %s378
    %p380 = scmp.eq.s32.totalorder %s29, 0
    %p381 = por %p379, %p380
    %s383 = sadd.s32 %s382, 1
    %p386 = scmp.eq.s32.totalorder %s23, 1
    %p387 = scmp.ne.s32.totalorder %s382, %s384
    %p388 = scmp.eq.s32.totalorder %s23, 0
    %p389 = por %p387, %p388
    %p390 = scmp.ne.s32.totalorder %s382, %s384
    %p391 = scmp.eq.s32.totalorder %s28, 1
    %p392 = por %p390, %p391
    %p393 = scmp.ne.s32.totalorder %s384, %s385
    %p394 = scmp.eq.s32.totalorder %s28, 0
    %p395 = por %p393, %p394
    %p396 = scmp.ne.s32.totalorder %s384, %s385
    %p397 = scmp.eq.s32.totalorder %s29, 1
    %p398 = por %p396, %p397
    %p400 = scmp.ne.s32.totalorder %s385, %s399
    %p401 = scmp.eq.s32.totalorder %s29, 0
    %p402 = por %p400, %p401
    %s404 = sadd.s32 %s403, 1
    %p407 = scmp.eq.s32.totalorder %s23, 1
    %p408 = scmp.ne.s32.totalorder %s403, %s405
    %p409 = scmp.eq.s32.totalorder %s23, 0
    %p410 = por %p408, %p409
    %p411 = scmp.ne.s32.totalorder %s403, %s405
    %p412 = scmp.eq.s32.totalorder %s28, 1
    %p413 = por %p411, %p412
    %p414 = scmp.ne.s32.totalorder %s405, %s406
    %p415 = scmp.eq.s32.totalorder %s28, 0
    %p416 = por %p414, %p415
    %p417 = scmp.ne.s32.totalorder %s405, %s406
    %p418 = scmp.eq.s32.totalorder %s29, 1
    %p419 = por %p417, %p418
    %p421 = scmp.ne.s32.totalorder %s406, %s420
    %p422 = scmp.eq.s32.totalorder %s29, 0
    %p423 = por %p421, %p422
    %s424 = ssub.s32 %s30, %s42
    %p425 = scmp.eq.s32.totalorder %s424, 0
    %s427 = sadd.s32 %s426, 1
    %s428 = scalar_select %p425, %s426, %s427
    %p431 = pneg %p425
    %p432 = scmp.eq.s32.totalorder %s23, 1
    %p433 = por %p431, %p432
    %p434 = scmp.ne.s32.totalorder %s426, %s429
    %p435 = scmp.eq.s32.totalorder %s23, 0
    %p436 = por %p434, %p435
    %p437 = scmp.ne.s32.totalorder %s426, %s429
    %p438 = scmp.eq.s32.totalorder %s28, 1
    %p439 = por %p437, %p438
    %p440 = scmp.ne.s32.totalorder %s429, %s430
    %p441 = scmp.eq.s32.totalorder %s28, 0
    %p442 = por %p440, %p441
    %p443 = scmp.ne.s32.totalorder %s429, %s430
    %p444 = scmp.eq.s32.totalorder %s29, 1
    %p445 = por %p443, %p444
    %p447 = scmp.ne.s32.totalorder %s430, %s446
    %p448 = scmp.eq.s32.totalorder %s29, 0
    %p449 = por %p447, %p448
    %p450 = scmp.le.s32.totalorder 1, %s23
    %p451 = scmp.lt.s32.totalorder %s23, 3
    %p452 = pnand %p450, %p451
    %p453 = pneg %p452
    // Predicated region
    $region9: #{multi_object_3d_bbox_forward.1} parent=5 // pred_check
      _
    $region10: #{multi_object_3d_bbox_forward.1} parent=5 // pred_check_branch
      %455 = sbr.rel (%p452) target = $region12
    $region11: #{multi_object_3d_bbox_forward.1} parent=5 // pred_region
      %s456 = ssub.s32 %s23, 1
      // Predicated region
      $region13: #{multi_object_3d_bbox_forward.1} parent=11 // pred_check
        %p457 = pneg %p164
      $region14: #{multi_object_3d_bbox_forward.1} parent=11 // pred_check_branch
        %459 = sbr.rel (%p457) target = $region16
      $region15: #{multi_object_3d_bbox_forward.1} parent=11 // pred_region
        _
      $region16: #{multi_object_3d_bbox_forward.1} parent=11 // pred_fallthru
        _
      // Predicated region
      $region17: #{multi_object_3d_bbox_forward.1} parent=11 // pred_check
        %p460 = pneg %p185
      $region18: #{multi_object_3d_bbox_forward.1} parent=11 // pred_check_branch
        %462 = sbr.rel (%p460) target = $region20
      $region19: #{multi_object_3d_bbox_forward.1} parent=11 // pred_region
        _
      $region20: #{multi_object_3d_bbox_forward.1} parent=11 // pred_fallthru
        _
      // Predicated region
      $region21: #{multi_object_3d_bbox_forward.1} parent=11 // pred_check
        %p463 = pneg %p206
      $region22: #{multi_object_3d_bbox_forward.1} parent=11 // pred_check_branch
        %465 = sbr.rel (%p463) target = $region24
      $region23: #{multi_object_3d_bbox_forward.1} parent=11 // pred_region
        _
      $region24: #{multi_object_3d_bbox_forward.1} parent=11 // pred_fallthru
        _
      // Predicated region
      $region25: #{multi_object_3d_bbox_forward.1} parent=11 // pred_check
        %p466 = pneg %p227
      $region26: #{multi_object_3d_bbox_forward.1} parent=11 // pred_check_branch
        %468 = sbr.rel (%p466) target = $region28
      $region27: #{multi_object_3d_bbox_forward.1} parent=11 // pred_region
        _
      $region28: #{multi_object_3d_bbox_forward.1} parent=11 // pred_fallthru
        _
      // Predicated region
      $region29: #{multi_object_3d_bbox_forward.1} parent=11 // pred_check
        %p469 = pneg %p248
      $region30: #{multi_object_3d_bbox_forward.1} parent=11 // pred_check_branch
        %471 = sbr.rel (%p469) target = $region32
      $region31: #{multi_object_3d_bbox_forward.1} parent=11 // pred_region
        _
      $region32: #{multi_object_3d_bbox_forward.1} parent=11 // pred_fallthru
        _
      // Predicated region
      $region33: #{multi_object_3d_bbox_forward.1} parent=11 // pred_check
        %p472 = pneg %p269
      $region34: #{multi_object_3d_bbox_forward.1} parent=11 // pred_check_branch
        %474 = sbr.rel (%p472) target = $region36
      $region35: #{multi_object_3d_bbox_forward.1} parent=11 // pred_region
        _
      $region36: #{multi_object_3d_bbox_forward.1} parent=11 // pred_fallthru
        _
      // Predicated region
      $region37: #{multi_object_3d_bbox_forward.1} parent=11 // pred_check
        %p475 = pneg %p290
      $region38: #{multi_object_3d_bbox_forward.1} parent=11 // pred_check_branch
        %477 = sbr.rel (%p475) target = $region40
      $region39: #{multi_object_3d_bbox_forward.1} parent=11 // pred_region
        _
      $region40: #{multi_object_3d_bbox_forward.1} parent=11 // pred_fallthru
        _
      // Predicated region
      $region41: #{multi_object_3d_bbox_forward.1} parent=11 // pred_check
        %p478 = pneg %p311
      $region42: #{multi_object_3d_bbox_forward.1} parent=11 // pred_check_branch
        %480 = sbr.rel (%p478) target = $region44
      $region43: #{multi_object_3d_bbox_forward.1} parent=11 // pred_region
        _
      $region44: #{multi_object_3d_bbox_forward.1} parent=11 // pred_fallthru
        _
      // Predicated region
      $region45: #{multi_object_3d_bbox_forward.1} parent=11 // pred_check
        %p481 = pneg %p332
      $region46: #{multi_object_3d_bbox_forward.1} parent=11 // pred_check_branch
        %483 = sbr.rel (%p481) target = $region48
      $region47: #{multi_object_3d_bbox_forward.1} parent=11 // pred_region
        _
      $region48: #{multi_object_3d_bbox_forward.1} parent=11 // pred_fallthru
        _
      // Predicated region
      $region49: #{multi_object_3d_bbox_forward.1} parent=11 // pred_check
        %p484 = pneg %p353
      $region50: #{multi_object_3d_bbox_forward.1} parent=11 // pred_check_branch
        %486 = sbr.rel (%p484) target = $region52
      $region51: #{multi_object_3d_bbox_forward.1} parent=11 // pred_region
        _
      $region52: #{multi_object_3d_bbox_forward.1} parent=11 // pred_fallthru
        _
      // Predicated region
      $region53: #{multi_object_3d_bbox_forward.1} parent=11 // pred_check
        %p487 = pneg %p374
      $region54: #{multi_object_3d_bbox_forward.1} parent=11 // pred_check_branch
        %489 = sbr.rel (%p487) target = $region56
      $region55: #{multi_object_3d_bbox_forward.1} parent=11 // pred_region
        _
      $region56: #{multi_object_3d_bbox_forward.1} parent=11 // pred_fallthru
        _
      // Predicated region
      $region57: #{multi_object_3d_bbox_forward.1} parent=11 // pred_check
        %p490 = pneg %p395
      $region58: #{multi_object_3d_bbox_forward.1} parent=11 // pred_check_branch
        %492 = sbr.rel (%p490) target = $region60
      $region59: #{multi_object_3d_bbox_forward.1} parent=11 // pred_region
        _
      $region60: #{multi_object_3d_bbox_forward.1} parent=11 // pred_fallthru
        _
      // Predicated region
      $region61: #{multi_object_3d_bbox_forward.1} parent=11 // pred_check
        %p493 = pneg %p416
      $region62: #{multi_object_3d_bbox_forward.1} parent=11 // pred_check_branch
        %495 = sbr.rel (%p493) target = $region64
      $region63: #{multi_object_3d_bbox_forward.1} parent=11 // pred_region
        _
      $region64: #{multi_object_3d_bbox_forward.1} parent=11 // pred_fallthru
        _
    $region12: #{multi_object_3d_bbox_forward.1} parent=5 // pred_fallthru
      _
    %p496 = scmp.lt.s32.totalorder %s23, 2
    // Predicated region
    $region65: #{multi_object_3d_bbox_forward.1} parent=5 // pred_check
      %p497 = pneg %p496
    $region66: #{multi_object_3d_bbox_forward.1} parent=5 // pred_check_branch
      %499 = sbr.rel (%p497) target = $region68
    $region67: #{multi_object_3d_bbox_forward.1} parent=5 // pred_region
      // Predicated region
      $region69: #{multi_object_3d_bbox_forward.1} parent=67 // pred_check
        %p500 = pneg %p55
      $region70: #{multi_object_3d_bbox_forward.1} parent=67 // pred_check_branch
        %502 = sbr.rel (%p500) target = $region72
      $region71: #{multi_object_3d_bbox_forward.1} parent=67 // pred_region
        %p503 = scmp.lt.s32.totalorder %s30, 1
        %s504 = scalar_select %p503, %s30, 1
        %s505 = smul.addr %s504, 4
        %s506 = scalar_lea.vmem %s0, %s505
      $region72: #{multi_object_3d_bbox_forward.1} parent=67 // pred_fallthru
        _
      // Predicated region
      $region73: #{multi_object_3d_bbox_forward.1} parent=67 // pred_check
        %p507 = pneg %p81
      $region74: #{multi_object_3d_bbox_forward.1} parent=67 // pred_check_branch
        %509 = sbr.rel (%p507) target = $region76
      $region75: #{multi_object_3d_bbox_forward.1} parent=67 // pred_region
        %p510 = scmp.lt.s32.totalorder %s30, 1
        %s511 = scalar_select %p510, %s30, 1
        %s512 = smul.addr %s511, 4
        %s513 = scalar_lea.vmem %s1, %s512
      $region76: #{multi_object_3d_bbox_forward.1} parent=67 // pred_fallthru
        _
      // Predicated region
      $region77: #{multi_object_3d_bbox_forward.1} parent=67 // pred_check
        %p514 = pneg %p109
      $region78: #{multi_object_3d_bbox_forward.1} parent=67 // pred_check_branch
        %516 = sbr.rel (%p514) target = $region80
      $region79: #{multi_object_3d_bbox_forward.1} parent=67 // pred_region
        %s517 = smul.u32 32, %s31
        %p518 = scmp.lt.s32.totalorder %s30, 1
        %s519 = scalar_select %p518, %s30, 1
        %p520 = scmp.lt.s32.totalorder %s517, 31
        %s521 = scalar_select %p520, %s517, 31
        %s522 = smul.addr %s519, 32
        %s523 = sadd.s32 %s521, %s522
        %s524 = scalar_lea.vmem %s2, %s523
        %s525 = smul.u32 32, %s31
      $region80: #{multi_object_3d_bbox_forward.1} parent=67 // pred_fallthru
        _
      // Predicated region
      $region81: #{multi_object_3d_bbox_forward.1} parent=67 // pred_check
        %p526 = pneg %p137
      $region82: #{multi_object_3d_bbox_forward.1} parent=67 // pred_check_branch
        %528 = sbr.rel (%p526) target = $region84
      $region83: #{multi_object_3d_bbox_forward.1} parent=67 // pred_region
        %s529 = smul.u32 512, %s31
        %p530 = scmp.lt.s32.totalorder %s30, 1
        %s531 = scalar_select %p530, %s30, 1
        %p532 = scmp.lt.s32.totalorder %s529, 511
        %s533 = scalar_select %p532, %s529, 511
        %s534 = smul.addr %s531, 512
        %s535 = sadd.s32 %s533, %s534
        %s536 = smul.addr %s535, 8
        %s537 = scalar_lea.vmem %s3, %s536
        %s538 = smul.u32 512, %s31
      $region84: #{multi_object_3d_bbox_forward.1} parent=67 // pred_fallthru
        _
    $region68: #{multi_object_3d_bbox_forward.1} parent=5 // pred_fallthru
      _
    %p539 = scmp.le.s32.totalorder 1, %s23
    %p540 = scmp.lt.s32.totalorder %s23, 3
    %p541 = pnand %p539, %p540
    %p542 = pneg %p541
    // Predicated region
    $region85: #{multi_object_3d_bbox_forward.1} parent=5 // pred_check
      _
    $region86: #{multi_object_3d_bbox_forward.1} parent=5 // pred_check_branch
      %544 = sbr.rel (%p541) target = $region88
    $region87: #{multi_object_3d_bbox_forward.1} parent=5 // pred_region
      %s545 = ssub.s32 %s23, 1
      %p546 = scmp.lt.s32.totalorder %s32, 1
      %s547 = scalar_select %p546, %s32, 1
      %s548 = smul.addr %s547, 4
      %s549 = scalar_lea.vmem %s0, %s548
      %p550 = pneg %p61
      %p551 = pneg %p58
      %p552 = scmp.lt.s32.totalorder %s32, 1
      %s553 = scalar_select %p552, %s32, 1
      %s554 = smul.addr %s553, 4
      %s555 = scalar_lea.vmem %s1, %s554
      %p556 = pneg %p87
      %p557 = pneg %p84
      %s558 = smul.u32 32, %s33
      %p559 = scmp.lt.s32.totalorder %s32, 1
      %s560 = scalar_select %p559, %s32, 1
      %p561 = scmp.lt.s32.totalorder %s558, 31
      %s562 = scalar_select %p561, %s558, 31
      %s563 = smul.addr %s560, 32
      %s564 = sadd.s32 %s562, %s563
      %s565 = scalar_lea.vmem %s2, %s564
      %p566 = pneg %p115
      %p567 = pneg %p112
      %s568 = smul.u32 512, %s33
      %p569 = scmp.lt.s32.totalorder %s32, 1
      %s570 = scalar_select %p569, %s32, 1
      %p571 = scmp.lt.s32.totalorder %s568, 511
      %s572 = scalar_select %p571, %s568, 511
      %s573 = smul.addr %s570, 512
      %s574 = sadd.s32 %s572, %s573
      %s575 = smul.addr %s574, 8
      %s576 = scalar_lea.vmem %s3, %s575
      %p577 = pneg %p143
      %p578 = pneg %p140
      %p579 = pneg %p164
      %p580 = pneg %p161
      %p581 = pneg %p185
      %p582 = pneg %p182
      %p583 = pneg %p206
      %p584 = pneg %p203
      %p585 = pneg %p227
      %p586 = pneg %p224
      %p587 = pneg %p248
      %p588 = pneg %p245
      %p589 = pneg %p269
      %p590 = pneg %p266
      %p591 = pneg %p290
      %p592 = pneg %p287
      %p593 = pneg %p311
      %p594 = pneg %p308
      %p595 = pneg %p332
      %p596 = pneg %p329
      %p597 = pneg %p353
      %p598 = pneg %p350
      %p599 = pneg %p374
      %p600 = pneg %p371
      %p601 = pneg %p395
      %p602 = pneg %p392
      %p603 = pneg %p416
      %p604 = pneg %p413
      %p605 = pneg %p442
      %p606 = pneg %p439
      %p607 = scmp.lt.s32.totalorder %s32, 1
      %s608 = scalar_select %p607, %s32, 1
      %s609 = smul.addr %s608, 5
      %s610 = scalar_lea.vmem %s17, %s609
      %p611 = scmp.lt.s32.totalorder %s32, 1
      %s612 = scalar_select %p611, %s32, 1
      %s613 = smul.addr %s612, 4
      %s614 = scalar_lea.vmem %s0, %s613
      %p615 = scmp.lt.s32.totalorder %s32, 1
      %s616 = scalar_select %p615, %s32, 1
      %s617 = smul.addr %s616, 4
      %s618 = scalar_lea.vmem %s1, %s617
      %s619 = smul.u32 32, %s33
      %p620 = scmp.lt.s32.totalorder %s32, 1
      %s621 = scalar_select %p620, %s32, 1
      %p622 = scmp.lt.s32.totalorder %s619, 31
      %s623 = scalar_select %p622, %s619, 31
      %s624 = smul.addr %s621, 32
      %s625 = sadd.s32 %s623, %s624
      %s626 = scalar_lea.vmem %s2, %s625
      %s627 = smul.u32 32, %s33
      %s628 = smul.u32 512, %s33
      %p629 = scmp.lt.s32.totalorder %s32, 1
      %s630 = scalar_select %p629, %s32, 1
      %p631 = scmp.lt.s32.totalorder %s628, 511
      %s632 = scalar_select %p631, %s628, 511
      %s633 = smul.addr %s630, 512
      %s634 = sadd.s32 %s632, %s633
      %s635 = smul.addr %s634, 8
      %s636 = scalar_lea.vmem %s3, %s635
      %s637 = smul.u32 512, %s33
      %p638 = scmp.lt.s32.totalorder %s32, 1
      %s639 = scalar_select %p638, %s32, 1
      %s640 = smul.addr %s639, 5
      %s641 = scalar_lea.vmem %s17, %s640
      %p643 = scmp.eq.s32.totalorder %s33, 0
      // Predicated region
      $region89: #{multi_object_3d_bbox_forward.1} parent=87 // pred_check
        %p644 = pneg %p643
      $region90: #{multi_object_3d_bbox_forward.1} parent=87 // pred_check_branch
        %646 = sbr.rel (%p644) target = $region92
      $region91: #{multi_object_3d_bbox_forward.1} parent=87 // pred_region
        %vm647 = vcmask 262144
        %648 = vst.msk [vmem:[#allocation2] sm:$0x1] %vm647, 0.0
        %vm649 = vcmask 0
        %650 = vst.msk [vmem:[#allocation3] sm:$0x1] %vm649, 0.0
      $region92: #{multi_object_3d_bbox_forward.1} parent=87 // pred_fallthru
        _
      %v651 = vld [vmem:[%s626] sm:$0xff]
      %v652 = vld [vmem:[%s626 + $0x8] sm:$0xff]
      %v653 = vld [vmem:[%s626 + $0x10] sm:$0xff]
      %v654 = vld [vmem:[%s626 + $0x18] sm:$0xff]
      %v655 = vld [vmem:[%s636] sm:$0xff]
      %v656 = vld [vmem:[%s636 + $0x8] sm:$0xff]
      %v657 = vld [vmem:[%s636 + $0x10] sm:$0xff]
      %v658 = vld [vmem:[%s636 + $0x18] sm:$0xff]
      %v659 = vld [vmem:[%s636 + $0x20] sm:$0xff]
      %v660 = vld [vmem:[%s636 + $0x28] sm:$0xff]
      %v661 = vld [vmem:[%s636 + $0x30] sm:$0xff]
      %v662 = vld [vmem:[%s636 + $0x38] sm:$0xff]
      %v663 = vld [vmem:[%s636 + $0x40] sm:$0xff]
      %v664 = vld [vmem:[%s636 + $0x48] sm:$0xff]
      %v665 = vld [vmem:[%s636 + $0x50] sm:$0xff]
      %v666 = vld [vmem:[%s636 + $0x58] sm:$0xff]
      %v667 = vld [vmem:[%s636 + $0x60] sm:$0xff]
      %v668 = vld [vmem:[%s636 + $0x68] sm:$0xff]
      %v669 = vld [vmem:[%s636 + $0x70] sm:$0xff]
      %v670 = vld [vmem:[%s636 + $0x78] sm:$0xff]
      %v671 = vld [vmem:[%s636 + $0x80] sm:$0xff]
      %v672 = vld [vmem:[%s636 + $0x88] sm:$0xff]
      %v673 = vld [vmem:[%s636 + $0x90] sm:$0xff]
      %v674 = vld [vmem:[%s636 + $0x98] sm:$0xff]
      %v675 = vld [vmem:[%s636 + $0xa0] sm:$0xff]
      %v676 = vld [vmem:[%s636 + $0xa8] sm:$0xff]
      %v677 = vld [vmem:[%s636 + $0xb0] sm:$0xff]
      %v678 = vld [vmem:[%s636 + $0xb8] sm:$0xff]
      %v679 = vld [vmem:[%s636 + $0xc0] sm:$0xff]
      %v680 = vld [vmem:[%s636 + $0xc8] sm:$0xff]
      %v681 = vld [vmem:[%s636 + $0xd0] sm:$0xff]
      %v682 = vld [vmem:[%s636 + $0xd8] sm:$0xff]
      %v683 = vld [vmem:[%s636 + $0xe0] sm:$0xff]
      %v684 = vld [vmem:[%s636 + $0xe8] sm:$0xff]
      %v685 = vld [vmem:[%s636 + $0xf0] sm:$0xff]
      %v686 = vld [vmem:[%s636 + $0xf8] sm:$0xff]
      %v687 = vld [vmem:[%s636 + $0x100] sm:$0xff]
      %v688 = vld [vmem:[%s636 + $0x108] sm:$0xff]
      %v689 = vld [vmem:[%s636 + $0x110] sm:$0xff]
      %v690 = vld [vmem:[%s636 + $0x118] sm:$0xff]
      %v691 = vld [vmem:[%s636 + $0x120] sm:$0xff]
      %v692 = vld [vmem:[%s636 + $0x128] sm:$0xff]
      %v693 = vld [vmem:[%s636 + $0x130] sm:$0xff]
      %v694 = vld [vmem:[%s636 + $0x138] sm:$0xff]
      %v695 = vld [vmem:[%s636 + $0x140] sm:$0xff]
      %v696 = vld [vmem:[%s636 + $0x148] sm:$0xff]
      %v697 = vld [vmem:[%s636 + $0x150] sm:$0xff]
      %v698 = vld [vmem:[%s636 + $0x158] sm:$0xff]
      %v699 = vld [vmem:[%s636 + $0x160] sm:$0xff]
      %v700 = vld [vmem:[%s636 + $0x168] sm:$0xff]
      %v701 = vld [vmem:[%s636 + $0x170] sm:$0xff]
      %v702 = vld [vmem:[%s636 + $0x178] sm:$0xff]
      %v703 = vld [vmem:[%s636 + $0x180] sm:$0xff]
      %v704 = vld [vmem:[%s636 + $0x188] sm:$0xff]
      %v705 = vld [vmem:[%s636 + $0x190] sm:$0xff]
      %v706 = vld [vmem:[%s636 + $0x198] sm:$0xff]
      %v707 = vld [vmem:[%s636 + $0x1a0] sm:$0xff]
      %v708 = vld [vmem:[%s636 + $0x1a8] sm:$0xff]
      %v709 = vld [vmem:[%s636 + $0x1b0] sm:$0xff]
      %v710 = vld [vmem:[%s636 + $0x1b8] sm:$0xff]
      %v711 = vld [vmem:[%s636 + $0x1c0] sm:$0xff]
      %v712 = vld [vmem:[%s636 + $0x1c8] sm:$0xff]
      %v713 = vld [vmem:[%s636 + $0x1d0] sm:$0xff]
      %v714 = vld [vmem:[%s636 + $0x1d8] sm:$0xff]
      %v715 = vld [vmem:[%s636 + $0x1e0] sm:$0xff]
      %v716 = vld [vmem:[%s636 + $0x1e8] sm:$0xff]
      %v717 = vld [vmem:[%s636 + $0x1f0] sm:$0xff]
      %v718 = vld [vmem:[%s636 + $0x1f8] sm:$0xff]
      %v719 = vld [vmem:[%s636 + $0x200] sm:$0xff]
      %v720 = vld [vmem:[%s636 + $0x208] sm:$0xff]
      %v721 = vld [vmem:[%s636 + $0x210] sm:$0xff]
      %v722 = vld [vmem:[%s636 + $0x218] sm:$0xff]
      %v723 = vld [vmem:[%s636 + $0x220] sm:$0xff]
      %v724 = vld [vmem:[%s636 + $0x228] sm:$0xff]
      %v725 = vld [vmem:[%s636 + $0x230] sm:$0xff]
      %v726 = vld [vmem:[%s636 + $0x238] sm:$0xff]
      %v727 = vld [vmem:[%s636 + $0x240] sm:$0xff]
      %v728 = vld [vmem:[%s636 + $0x248] sm:$0xff]
      %v729 = vld [vmem:[%s636 + $0x250] sm:$0xff]
      %v730 = vld [vmem:[%s636 + $0x258] sm:$0xff]
      %v731 = vld [vmem:[%s636 + $0x260] sm:$0xff]
      %v732 = vld [vmem:[%s636 + $0x268] sm:$0xff]
      %v733 = vld [vmem:[%s636 + $0x270] sm:$0xff]
      %v734 = vld [vmem:[%s636 + $0x278] sm:$0xff]
      %v735 = vld [vmem:[%s636 + $0x280] sm:$0xff]
      %v736 = vld [vmem:[%s636 + $0x288] sm:$0xff]
      %v737 = vld [vmem:[%s636 + $0x290] sm:$0xff]
      %v738 = vld [vmem:[%s636 + $0x298] sm:$0xff]
      %v739 = vld [vmem:[%s636 + $0x2a0] sm:$0xff]
      %v740 = vld [vmem:[%s636 + $0x2a8] sm:$0xff]
      %v741 = vld [vmem:[%s636 + $0x2b0] sm:$0xff]
      %v742 = vld [vmem:[%s636 + $0x2b8] sm:$0xff]
      %v743 = vld [vmem:[%s636 + $0x2c0] sm:$0xff]
      %v744 = vld [vmem:[%s636 + $0x2c8] sm:$0xff]
      %v745 = vld [vmem:[%s636 + $0x2d0] sm:$0xff]
      %v746 = vld [vmem:[%s636 + $0x2d8] sm:$0xff]
      %v747 = vld [vmem:[%s636 + $0x2e0] sm:$0xff]
      %v748 = vld [vmem:[%s636 + $0x2e8] sm:$0xff]
      %v749 = vld [vmem:[%s636 + $0x2f0] sm:$0xff]
      %v750 = vld [vmem:[%s636 + $0x2f8] sm:$0xff]
      %v751 = vld [vmem:[%s636 + $0x300] sm:$0xff]
      %v752 = vld [vmem:[%s636 + $0x308] sm:$0xff]
      %v753 = vld [vmem:[%s636 + $0x310] sm:$0xff]
      %v754 = vld [vmem:[%s636 + $0x318] sm:$0xff]
      %v755 = vld [vmem:[%s636 + $0x320] sm:$0xff]
      %v756 = vld [vmem:[%s636 + $0x328] sm:$0xff]
      %v757 = vld [vmem:[%s636 + $0x330] sm:$0xff]
      %v758 = vld [vmem:[%s636 + $0x338] sm:$0xff]
      %v759 = vld [vmem:[%s636 + $0x340] sm:$0xff]
      %v760 = vld [vmem:[%s636 + $0x348] sm:$0xff]
      %v761 = vld [vmem:[%s636 + $0x350] sm:$0xff]
      %v762 = vld [vmem:[%s636 + $0x358] sm:$0xff]
      %v763 = vld [vmem:[%s636 + $0x360] sm:$0xff]
      %v764 = vld [vmem:[%s636 + $0x368] sm:$0xff]
      %v765 = vld [vmem:[%s636 + $0x370] sm:$0xff]
      %v766 = vld [vmem:[%s636 + $0x378] sm:$0xff]
      %v767 = vld [vmem:[%s636 + $0x380] sm:$0xff]
      %v768 = vld [vmem:[%s636 + $0x388] sm:$0xff]
      %v769 = vld [vmem:[%s636 + $0x390] sm:$0xff]
      %v770 = vld [vmem:[%s636 + $0x398] sm:$0xff]
      %v771 = vld [vmem:[%s636 + $0x3a0] sm:$0xff]
      %v772 = vld [vmem:[%s636 + $0x3a8] sm:$0xff]
      %v773 = vld [vmem:[%s636 + $0x3b0] sm:$0xff]
      %v774 = vld [vmem:[%s636 + $0x3b8] sm:$0xff]
      %v775 = vld [vmem:[%s636 + $0x3c0] sm:$0xff]
      %v776 = vld [vmem:[%s636 + $0x3c8] sm:$0xff]
      %v777 = vld [vmem:[%s636 + $0x3d0] sm:$0xff]
      %v778 = vld [vmem:[%s636 + $0x3d8] sm:$0xff]
      %v779 = vld [vmem:[%s636 + $0x3e0] sm:$0xff]
      %v780 = vld [vmem:[%s636 + $0x3e8] sm:$0xff]
      %v781 = vld [vmem:[%s636 + $0x3f0] sm:$0xff]
      %v782 = vld [vmem:[%s636 + $0x3f8] sm:$0xff]
      %v783 = vld [vmem:[%s636 + $0x400] sm:$0xff]
      %v784 = vld [vmem:[%s636 + $0x408] sm:$0xff]
      %v785 = vld [vmem:[%s636 + $0x410] sm:$0xff]
      %v786 = vld [vmem:[%s636 + $0x418] sm:$0xff]
      %v787 = vld [vmem:[%s636 + $0x420] sm:$0xff]
      %v788 = vld [vmem:[%s636 + $0x428] sm:$0xff]
      %v789 = vld [vmem:[%s636 + $0x430] sm:$0xff]
      %v790 = vld [vmem:[%s636 + $0x438] sm:$0xff]
      %v791 = vld [vmem:[%s636 + $0x440] sm:$0xff]
      %v792 = vld [vmem:[%s636 + $0x448] sm:$0xff]
      %v793 = vld [vmem:[%s636 + $0x450] sm:$0xff]
      %v794 = vld [vmem:[%s636 + $0x458] sm:$0xff]
      %v795 = vld [vmem:[%s636 + $0x460] sm:$0xff]
      %v796 = vld [vmem:[%s636 + $0x468] sm:$0xff]
      %v797 = vld [vmem:[%s636 + $0x470] sm:$0xff]
      %v798 = vld [vmem:[%s636 + $0x478] sm:$0xff]
      %v799 = vld [vmem:[%s636 + $0x480] sm:$0xff]
      %v800 = vld [vmem:[%s636 + $0x488] sm:$0xff]
      %v801 = vld [vmem:[%s636 + $0x490] sm:$0xff]
      %v802 = vld [vmem:[%s636 + $0x498] sm:$0xff]
      %v803 = vld [vmem:[%s636 + $0x4a0] sm:$0xff]
      %v804 = vld [vmem:[%s636 + $0x4a8] sm:$0xff]
      %v805 = vld [vmem:[%s636 + $0x4b0] sm:$0xff]
      %v806 = vld [vmem:[%s636 + $0x4b8] sm:$0xff]
      %v807 = vld [vmem:[%s636 + $0x4c0] sm:$0xff]
      %v808 = vld [vmem:[%s636 + $0x4c8] sm:$0xff]
      %v809 = vld [vmem:[%s636 + $0x4d0] sm:$0xff]
      %v810 = vld [vmem:[%s636 + $0x4d8] sm:$0xff]
      %v811 = vld [vmem:[%s636 + $0x4e0] sm:$0xff]
      %v812 = vld [vmem:[%s636 + $0x4e8] sm:$0xff]
      %v813 = vld [vmem:[%s636 + $0x4f0] sm:$0xff]
      %v814 = vld [vmem:[%s636 + $0x4f8] sm:$0xff]
      %v815 = vld [vmem:[%s636 + $0x500] sm:$0xff]
      %v816 = vld [vmem:[%s636 + $0x508] sm:$0xff]
      %v817 = vld [vmem:[%s636 + $0x510] sm:$0xff]
      %v818 = vld [vmem:[%s636 + $0x518] sm:$0xff]
      %v819 = vld [vmem:[%s636 + $0x520] sm:$0xff]
      %v820 = vld [vmem:[%s636 + $0x528] sm:$0xff]
      %v821 = vld [vmem:[%s636 + $0x530] sm:$0xff]
      %v822 = vld [vmem:[%s636 + $0x538] sm:$0xff]
      %v823 = vld [vmem:[%s636 + $0x540] sm:$0xff]
      %v824 = vld [vmem:[%s636 + $0x548] sm:$0xff]
      %v825 = vld [vmem:[%s636 + $0x550] sm:$0xff]
      %v826 = vld [vmem:[%s636 + $0x558] sm:$0xff]
      %v827 = vld [vmem:[%s636 + $0x560] sm:$0xff]
      %v828 = vld [vmem:[%s636 + $0x568] sm:$0xff]
      %v829 = vld [vmem:[%s636 + $0x570] sm:$0xff]
      %v830 = vld [vmem:[%s636 + $0x578] sm:$0xff]
      %v831 = vld [vmem:[%s636 + $0x580] sm:$0xff]
      %v832 = vld [vmem:[%s636 + $0x588] sm:$0xff]
      %v833 = vld [vmem:[%s636 + $0x590] sm:$0xff]
      %v834 = vld [vmem:[%s636 + $0x598] sm:$0xff]
      %v835 = vld [vmem:[%s636 + $0x5a0] sm:$0xff]
      %v836 = vld [vmem:[%s636 + $0x5a8] sm:$0xff]
      %v837 = vld [vmem:[%s636 + $0x5b0] sm:$0xff]
      %v838 = vld [vmem:[%s636 + $0x5b8] sm:$0xff]
      %v839 = vld [vmem:[%s636 + $0x5c0] sm:$0xff]
      %v840 = vld [vmem:[%s636 + $0x5c8] sm:$0xff]
      %v841 = vld [vmem:[%s636 + $0x5d0] sm:$0xff]
      %v842 = vld [vmem:[%s636 + $0x5d8] sm:$0xff]
      %v843 = vld [vmem:[%s636 + $0x5e0] sm:$0xff]
      %v844 = vld [vmem:[%s636 + $0x5e8] sm:$0xff]
      %v845 = vld [vmem:[%s636 + $0x5f0] sm:$0xff]
      %v846 = vld [vmem:[%s636 + $0x5f8] sm:$0xff]
      %v847 = vld [vmem:[%s636 + $0x600] sm:$0xff]
      %v848 = vld [vmem:[%s636 + $0x608] sm:$0xff]
      %v849 = vld [vmem:[%s636 + $0x610] sm:$0xff]
      %v850 = vld [vmem:[%s636 + $0x618] sm:$0xff]
      %v851 = vld [vmem:[%s636 + $0x620] sm:$0xff]
      %v852 = vld [vmem:[%s636 + $0x628] sm:$0xff]
      %v853 = vld [vmem:[%s636 + $0x630] sm:$0xff]
      %v854 = vld [vmem:[%s636 + $0x638] sm:$0xff]
      %v855 = vld [vmem:[%s636 + $0x640] sm:$0xff]
      %v856 = vld [vmem:[%s636 + $0x648] sm:$0xff]
      %v857 = vld [vmem:[%s636 + $0x650] sm:$0xff]
      %v858 = vld [vmem:[%s636 + $0x658] sm:$0xff]
      %v859 = vld [vmem:[%s636 + $0x660] sm:$0xff]
      %v860 = vld [vmem:[%s636 + $0x668] sm:$0xff]
      %v861 = vld [vmem:[%s636 + $0x670] sm:$0xff]
      %v862 = vld [vmem:[%s636 + $0x678] sm:$0xff]
      %v863 = vld [vmem:[%s636 + $0x680] sm:$0xff]
      %v864 = vld [vmem:[%s636 + $0x688] sm:$0xff]
      %v865 = vld [vmem:[%s636 + $0x690] sm:$0xff]
      %v866 = vld [vmem:[%s636 + $0x698] sm:$0xff]
      %v867 = vld [vmem:[%s636 + $0x6a0] sm:$0xff]
      %v868 = vld [vmem:[%s636 + $0x6a8] sm:$0xff]
      %v869 = vld [vmem:[%s636 + $0x6b0] sm:$0xff]
      %v870 = vld [vmem:[%s636 + $0x6b8] sm:$0xff]
      %v871 = vld [vmem:[%s636 + $0x6c0] sm:$0xff]
      %v872 = vld [vmem:[%s636 + $0x6c8] sm:$0xff]
      %v873 = vld [vmem:[%s636 + $0x6d0] sm:$0xff]
      %v874 = vld [vmem:[%s636 + $0x6d8] sm:$0xff]
      %v875 = vld [vmem:[%s636 + $0x6e0] sm:$0xff]
      %v876 = vld [vmem:[%s636 + $0x6e8] sm:$0xff]
      %v877 = vld [vmem:[%s636 + $0x6f0] sm:$0xff]
      %v878 = vld [vmem:[%s636 + $0x6f8] sm:$0xff]
      %v879 = vld [vmem:[%s636 + $0x700] sm:$0xff]
      %v880 = vld [vmem:[%s636 + $0x708] sm:$0xff]
      %v881 = vld [vmem:[%s636 + $0x710] sm:$0xff]
      %v882 = vld [vmem:[%s636 + $0x718] sm:$0xff]
      %v883 = vld [vmem:[%s636 + $0x720] sm:$0xff]
      %v884 = vld [vmem:[%s636 + $0x728] sm:$0xff]
      %v885 = vld [vmem:[%s636 + $0x730] sm:$0xff]
      %v886 = vld [vmem:[%s636 + $0x738] sm:$0xff]
      %v887 = vld [vmem:[%s636 + $0x740] sm:$0xff]
      %v888 = vld [vmem:[%s636 + $0x748] sm:$0xff]
      %v889 = vld [vmem:[%s636 + $0x750] sm:$0xff]
      %v890 = vld [vmem:[%s636 + $0x758] sm:$0xff]
      %v891 = vld [vmem:[%s636 + $0x760] sm:$0xff]
      %v892 = vld [vmem:[%s636 + $0x768] sm:$0xff]
      %v893 = vld [vmem:[%s636 + $0x770] sm:$0xff]
      %v894 = vld [vmem:[%s636 + $0x778] sm:$0xff]
      %v895 = vld [vmem:[%s636 + $0x780] sm:$0xff]
      %v896 = vld [vmem:[%s636 + $0x788] sm:$0xff]
      %v897 = vld [vmem:[%s636 + $0x790] sm:$0xff]
      %v898 = vld [vmem:[%s636 + $0x798] sm:$0xff]
      %v899 = vld [vmem:[%s636 + $0x7a0] sm:$0xff]
      %v900 = vld [vmem:[%s636 + $0x7a8] sm:$0xff]
      %v901 = vld [vmem:[%s636 + $0x7b0] sm:$0xff]
      %v902 = vld [vmem:[%s636 + $0x7b8] sm:$0xff]
      %v903 = vld [vmem:[%s636 + $0x7c0] sm:$0xff]
      %v904 = vld [vmem:[%s636 + $0x7c8] sm:$0xff]
      %v905 = vld [vmem:[%s636 + $0x7d0] sm:$0xff]
      %v906 = vld [vmem:[%s636 + $0x7d8] sm:$0xff]
      %v907 = vld [vmem:[%s636 + $0x7e0] sm:$0xff]
      %v908 = vld [vmem:[%s636 + $0x7e8] sm:$0xff]
      %v909 = vld [vmem:[%s636 + $0x7f0] sm:$0xff]
      %v910 = vld [vmem:[%s636 + $0x7f8] sm:$0xff]
      %v911 = vld [vmem:[%s636 + $0x800] sm:$0xff]
      %v912 = vld [vmem:[%s636 + $0x808] sm:$0xff]
      %v913 = vld [vmem:[%s636 + $0x810] sm:$0xff]
      %v914 = vld [vmem:[%s636 + $0x818] sm:$0xff]
      %v915 = vld [vmem:[%s636 + $0x820] sm:$0xff]
      %v916 = vld [vmem:[%s636 + $0x828] sm:$0xff]
      %v917 = vld [vmem:[%s636 + $0x830] sm:$0xff]
      %v918 = vld [vmem:[%s636 + $0x838] sm:$0xff]
      %v919 = vld [vmem:[%s636 + $0x840] sm:$0xff]
      %v920 = vld [vmem:[%s636 + $0x848] sm:$0xff]
      %v921 = vld [vmem:[%s636 + $0x850] sm:$0xff]
      %v922 = vld [vmem:[%s636 + $0x858] sm:$0xff]
      %v923 = vld [vmem:[%s636 + $0x860] sm:$0xff]
      %v924 = vld [vmem:[%s636 + $0x868] sm:$0xff]
      %v925 = vld [vmem:[%s636 + $0x870] sm:$0xff]
      %v926 = vld [vmem:[%s636 + $0x878] sm:$0xff]
      %v927 = vld [vmem:[%s636 + $0x880] sm:$0xff]
      %v928 = vld [vmem:[%s636 + $0x888] sm:$0xff]
      %v929 = vld [vmem:[%s636 + $0x890] sm:$0xff]
      %v930 = vld [vmem:[%s636 + $0x898] sm:$0xff]
      %v931 = vld [vmem:[%s636 + $0x8a0] sm:$0xff]
      %v932 = vld [vmem:[%s636 + $0x8a8] sm:$0xff]
      %v933 = vld [vmem:[%s636 + $0x8b0] sm:$0xff]
      %v934 = vld [vmem:[%s636 + $0x8b8] sm:$0xff]
      %v935 = vld [vmem:[%s636 + $0x8c0] sm:$0xff]
      %v936 = vld [vmem:[%s636 + $0x8c8] sm:$0xff]
      %v937 = vld [vmem:[%s636 + $0x8d0] sm:$0xff]
      %v938 = vld [vmem:[%s636 + $0x8d8] sm:$0xff]
      %v939 = vld [vmem:[%s636 + $0x8e0] sm:$0xff]
      %v940 = vld [vmem:[%s636 + $0x8e8] sm:$0xff]
      %v941 = vld [vmem:[%s636 + $0x8f0] sm:$0xff]
      %v942 = vld [vmem:[%s636 + $0x8f8] sm:$0xff]
      %v943 = vld [vmem:[%s636 + $0x900] sm:$0xff]
      %v944 = vld [vmem:[%s636 + $0x908] sm:$0xff]
      %v945 = vld [vmem:[%s636 + $0x910] sm:$0xff]
      %v946 = vld [vmem:[%s636 + $0x918] sm:$0xff]
      %v947 = vld [vmem:[%s636 + $0x920] sm:$0xff]
      %v948 = vld [vmem:[%s636 + $0x928] sm:$0xff]
      %v949 = vld [vmem:[%s636 + $0x930] sm:$0xff]
      %v950 = vld [vmem:[%s636 + $0x938] sm:$0xff]
      %v951 = vld [vmem:[%s636 + $0x940] sm:$0xff]
      %v952 = vld [vmem:[%s636 + $0x948] sm:$0xff]
      %v953 = vld [vmem:[%s636 + $0x950] sm:$0xff]
      %v954 = vld [vmem:[%s636 + $0x958] sm:$0xff]
      %v955 = vld [vmem:[%s636 + $0x960] sm:$0xff]
      %v956 = vld [vmem:[%s636 + $0x968] sm:$0xff]
      %v957 = vld [vmem:[%s636 + $0x970] sm:$0xff]
      %v958 = vld [vmem:[%s636 + $0x978] sm:$0xff]
      %v959 = vld [vmem:[%s636 + $0x980] sm:$0xff]
      %v960 = vld [vmem:[%s636 + $0x988] sm:$0xff]
      %v961 = vld [vmem:[%s636 + $0x990] sm:$0xff]
      %v962 = vld [vmem:[%s636 + $0x998] sm:$0xff]
      %v963 = vld [vmem:[%s636 + $0x9a0] sm:$0xff]
      %v964 = vld [vmem:[%s636 + $0x9a8] sm:$0xff]
      %v965 = vld [vmem:[%s636 + $0x9b0] sm:$0xff]
      %v966 = vld [vmem:[%s636 + $0x9b8] sm:$0xff]
      %v967 = vld [vmem:[%s636 + $0x9c0] sm:$0xff]
      %v968 = vld [vmem:[%s636 + $0x9c8] sm:$0xff]
      %v969 = vld [vmem:[%s636 + $0x9d0] sm:$0xff]
      %v970 = vld [vmem:[%s636 + $0x9d8] sm:$0xff]
      %v971 = vld [vmem:[%s636 + $0x9e0] sm:$0xff]
      %v972 = vld [vmem:[%s636 + $0x9e8] sm:$0xff]
      %v973 = vld [vmem:[%s636 + $0x9f0] sm:$0xff]
      %v974 = vld [vmem:[%s636 + $0x9f8] sm:$0xff]
      %v975 = vld [vmem:[%s636 + $0xa00] sm:$0xff]
      %v976 = vld [vmem:[%s636 + $0xa08] sm:$0xff]
      %v977 = vld [vmem:[%s636 + $0xa10] sm:$0xff]
      %v978 = vld [vmem:[%s636 + $0xa18] sm:$0xff]
      %v979 = vld [vmem:[%s636 + $0xa20] sm:$0xff]
      %v980 = vld [vmem:[%s636 + $0xa28] sm:$0xff]
      %v981 = vld [vmem:[%s636 + $0xa30] sm:$0xff]
      %v982 = vld [vmem:[%s636 + $0xa38] sm:$0xff]
      %v983 = vld [vmem:[%s636 + $0xa40] sm:$0xff]
      %v984 = vld [vmem:[%s636 + $0xa48] sm:$0xff]
      %v985 = vld [vmem:[%s636 + $0xa50] sm:$0xff]
      %v986 = vld [vmem:[%s636 + $0xa58] sm:$0xff]
      %v987 = vld [vmem:[%s636 + $0xa60] sm:$0xff]
      %v988 = vld [vmem:[%s636 + $0xa68] sm:$0xff]
      %v989 = vld [vmem:[%s636 + $0xa70] sm:$0xff]
      %v990 = vld [vmem:[%s636 + $0xa78] sm:$0xff]
      %v991 = vld [vmem:[%s636 + $0xa80] sm:$0xff]
      %v992 = vld [vmem:[%s636 + $0xa88] sm:$0xff]
      %v993 = vld [vmem:[%s636 + $0xa90] sm:$0xff]
      %v994 = vld [vmem:[%s636 + $0xa98] sm:$0xff]
      %v995 = vld [vmem:[%s636 + $0xaa0] sm:$0xff]
      %v996 = vld [vmem:[%s636 + $0xaa8] sm:$0xff]
      %v997 = vld [vmem:[%s636 + $0xab0] sm:$0xff]
      %v998 = vld [vmem:[%s636 + $0xab8] sm:$0xff]
      %v999 = vld [vmem:[%s636 + $0xac0] sm:$0xff]
      %v1000 = vld [vmem:[%s636 + $0xac8] sm:$0xff]
      %v1001 = vld [vmem:[%s636 + $0xad0] sm:$0xff]
      %v1002 = vld [vmem:[%s636 + $0xad8] sm:$0xff]
      %v1003 = vld [vmem:[%s636 + $0xae0] sm:$0xff]
      %v1004 = vld [vmem:[%s636 + $0xae8] sm:$0xff]
      %v1005 = vld [vmem:[%s636 + $0xaf0] sm:$0xff]
      %v1006 = vld [vmem:[%s636 + $0xaf8] sm:$0xff]
      %v1007 = vld [vmem:[%s636 + $0xb00] sm:$0xff]
      %v1008 = vld [vmem:[%s636 + $0xb08] sm:$0xff]
      %v1009 = vld [vmem:[%s636 + $0xb10] sm:$0xff]
      %v1010 = vld [vmem:[%s636 + $0xb18] sm:$0xff]
      %v1011 = vld [vmem:[%s636 + $0xb20] sm:$0xff]
      %v1012 = vld [vmem:[%s636 + $0xb28] sm:$0xff]
      %v1013 = vld [vmem:[%s636 + $0xb30] sm:$0xff]
      %v1014 = vld [vmem:[%s636 + $0xb38] sm:$0xff]
      %v1015 = vld [vmem:[%s636 + $0xb40] sm:$0xff]
      %v1016 = vld [vmem:[%s636 + $0xb48] sm:$0xff]
      %v1017 = vld [vmem:[%s636 + $0xb50] sm:$0xff]
      %v1018 = vld [vmem:[%s636 + $0xb58] sm:$0xff]
      %v1019 = vld [vmem:[%s636 + $0xb60] sm:$0xff]
      %v1020 = vld [vmem:[%s636 + $0xb68] sm:$0xff]
      %v1021 = vld [vmem:[%s636 + $0xb70] sm:$0xff]
      %v1022 = vld [vmem:[%s636 + $0xb78] sm:$0xff]
      %v1023 = vld [vmem:[%s636 + $0xb80] sm:$0xff]
      %v1024 = vld [vmem:[%s636 + $0xb88] sm:$0xff]
      %v1025 = vld [vmem:[%s636 + $0xb90] sm:$0xff]
      %v1026 = vld [vmem:[%s636 + $0xb98] sm:$0xff]
      %v1027 = vld [vmem:[%s636 + $0xba0] sm:$0xff]
      %v1028 = vld [vmem:[%s636 + $0xba8] sm:$0xff]
      %v1029 = vld [vmem:[%s636 + $0xbb0] sm:$0xff]
      %v1030 = vld [vmem:[%s636 + $0xbb8] sm:$0xff]
      %v1031 = vld [vmem:[%s636 + $0xbc0] sm:$0xff]
      %v1032 = vld [vmem:[%s636 + $0xbc8] sm:$0xff]
      %v1033 = vld [vmem:[%s636 + $0xbd0] sm:$0xff]
      %v1034 = vld [vmem:[%s636 + $0xbd8] sm:$0xff]
      %v1035 = vld [vmem:[%s636 + $0xbe0] sm:$0xff]
      %v1036 = vld [vmem:[%s636 + $0xbe8] sm:$0xff]
      %v1037 = vld [vmem:[%s636 + $0xbf0] sm:$0xff]
      %v1038 = vld [vmem:[%s636 + $0xbf8] sm:$0xff]
      %v1039 = vld [vmem:[%s636 + $0xc00] sm:$0xff]
      %v1040 = vld [vmem:[%s636 + $0xc08] sm:$0xff]
      %v1041 = vld [vmem:[%s636 + $0xc10] sm:$0xff]
      %v1042 = vld [vmem:[%s636 + $0xc18] sm:$0xff]
      %v1043 = vld [vmem:[%s636 + $0xc20] sm:$0xff]
      %v1044 = vld [vmem:[%s636 + $0xc28] sm:$0xff]
      %v1045 = vld [vmem:[%s636 + $0xc30] sm:$0xff]
      %v1046 = vld [vmem:[%s636 + $0xc38] sm:$0xff]
      %v1047 = vld [vmem:[%s636 + $0xc40] sm:$0xff]
      %v1048 = vld [vmem:[%s636 + $0xc48] sm:$0xff]
      %v1049 = vld [vmem:[%s636 + $0xc50] sm:$0xff]
      %v1050 = vld [vmem:[%s636 + $0xc58] sm:$0xff]
      %v1051 = vld [vmem:[%s636 + $0xc60] sm:$0xff]
      %v1052 = vld [vmem:[%s636 + $0xc68] sm:$0xff]
      %v1053 = vld [vmem:[%s636 + $0xc70] sm:$0xff]
      %v1054 = vld [vmem:[%s636 + $0xc78] sm:$0xff]
      %v1055 = vld [vmem:[%s636 + $0xc80] sm:$0xff]
      %v1056 = vld [vmem:[%s636 + $0xc88] sm:$0xff]
      %v1057 = vld [vmem:[%s636 + $0xc90] sm:$0xff]
      %v1058 = vld [vmem:[%s636 + $0xc98] sm:$0xff]
      %v1059 = vld [vmem:[%s636 + $0xca0] sm:$0xff]
      %v1060 = vld [vmem:[%s636 + $0xca8] sm:$0xff]
      %v1061 = vld [vmem:[%s636 + $0xcb0] sm:$0xff]
      %v1062 = vld [vmem:[%s636 + $0xcb8] sm:$0xff]
      %v1063 = vld [vmem:[%s636 + $0xcc0] sm:$0xff]
      %v1064 = vld [vmem:[%s636 + $0xcc8] sm:$0xff]
      %v1065 = vld [vmem:[%s636 + $0xcd0] sm:$0xff]
      %v1066 = vld [vmem:[%s636 + $0xcd8] sm:$0xff]
      %v1067 = vld [vmem:[%s636 + $0xce0] sm:$0xff]
      %v1068 = vld [vmem:[%s636 + $0xce8] sm:$0xff]
      %v1069 = vld [vmem:[%s636 + $0xcf0] sm:$0xff]
      %v1070 = vld [vmem:[%s636 + $0xcf8] sm:$0xff]
      %v1071 = vld [vmem:[%s636 + $0xd00] sm:$0xff]
      %v1072 = vld [vmem:[%s636 + $0xd08] sm:$0xff]
      %v1073 = vld [vmem:[%s636 + $0xd10] sm:$0xff]
      %v1074 = vld [vmem:[%s636 + $0xd18] sm:$0xff]
      %v1075 = vld [vmem:[%s636 + $0xd20] sm:$0xff]
      %v1076 = vld [vmem:[%s636 + $0xd28] sm:$0xff]
      %v1077 = vld [vmem:[%s636 + $0xd30] sm:$0xff]
      %v1078 = vld [vmem:[%s636 + $0xd38] sm:$0xff]
      %v1079 = vld [vmem:[%s636 + $0xd40] sm:$0xff]
      %v1080 = vld [vmem:[%s636 + $0xd48] sm:$0xff]
      %v1081 = vld [vmem:[%s636 + $0xd50] sm:$0xff]
      %v1082 = vld [vmem:[%s636 + $0xd58] sm:$0xff]
      %v1083 = vld [vmem:[%s636 + $0xd60] sm:$0xff]
      %v1084 = vld [vmem:[%s636 + $0xd68] sm:$0xff]
      %v1085 = vld [vmem:[%s636 + $0xd70] sm:$0xff]
      %v1086 = vld [vmem:[%s636 + $0xd78] sm:$0xff]
      %v1087 = vld [vmem:[%s636 + $0xd80] sm:$0xff]
      %v1088 = vld [vmem:[%s636 + $0xd88] sm:$0xff]
      %v1089 = vld [vmem:[%s636 + $0xd90] sm:$0xff]
      %v1090 = vld [vmem:[%s636 + $0xd98] sm:$0xff]
      %v1091 = vld [vmem:[%s636 + $0xda0] sm:$0xff]
      %v1092 = vld [vmem:[%s636 + $0xda8] sm:$0xff]
      %v1093 = vld [vmem:[%s636 + $0xdb0] sm:$0xff]
      %v1094 = vld [vmem:[%s636 + $0xdb8] sm:$0xff]
      %v1095 = vld [vmem:[%s636 + $0xdc0] sm:$0xff]
      %v1096 = vld [vmem:[%s636 + $0xdc8] sm:$0xff]
      %v1097 = vld [vmem:[%s636 + $0xdd0] sm:$0xff]
      %v1098 = vld [vmem:[%s636 + $0xdd8] sm:$0xff]
      %v1099 = vld [vmem:[%s636 + $0xde0] sm:$0xff]
      %v1100 = vld [vmem:[%s636 + $0xde8] sm:$0xff]
      %v1101 = vld [vmem:[%s636 + $0xdf0] sm:$0xff]
      %v1102 = vld [vmem:[%s636 + $0xdf8] sm:$0xff]
      %v1103 = vld [vmem:[%s636 + $0xe00] sm:$0xff]
      %v1104 = vld [vmem:[%s636 + $0xe08] sm:$0xff]
      %v1105 = vld [vmem:[%s636 + $0xe10] sm:$0xff]
      %v1106 = vld [vmem:[%s636 + $0xe18] sm:$0xff]
      %v1107 = vld [vmem:[%s636 + $0xe20] sm:$0xff]
      %v1108 = vld [vmem:[%s636 + $0xe28] sm:$0xff]
      %v1109 = vld [vmem:[%s636 + $0xe30] sm:$0xff]
      %v1110 = vld [vmem:[%s636 + $0xe38] sm:$0xff]
      %v1111 = vld [vmem:[%s636 + $0xe40] sm:$0xff]
      %v1112 = vld [vmem:[%s636 + $0xe48] sm:$0xff]
      %v1113 = vld [vmem:[%s636 + $0xe50] sm:$0xff]
      %v1114 = vld [vmem:[%s636 + $0xe58] sm:$0xff]
      %v1115 = vld [vmem:[%s636 + $0xe60] sm:$0xff]
      %v1116 = vld [vmem:[%s636 + $0xe68] sm:$0xff]
      %v1117 = vld [vmem:[%s636 + $0xe70] sm:$0xff]
      %v1118 = vld [vmem:[%s636 + $0xe78] sm:$0xff]
      %v1119 = vld [vmem:[%s636 + $0xe80] sm:$0xff]
      %v1120 = vld [vmem:[%s636 + $0xe88] sm:$0xff]
      %v1121 = vld [vmem:[%s636 + $0xe90] sm:$0xff]
      %v1122 = vld [vmem:[%s636 + $0xe98] sm:$0xff]
      %v1123 = vld [vmem:[%s636 + $0xea0] sm:$0xff]
      %v1124 = vld [vmem:[%s636 + $0xea8] sm:$0xff]
      %v1125 = vld [vmem:[%s636 + $0xeb0] sm:$0xff]
      %v1126 = vld [vmem:[%s636 + $0xeb8] sm:$0xff]
      %v1127 = vld [vmem:[%s636 + $0xec0] sm:$0xff]
      %v1128 = vld [vmem:[%s636 + $0xec8] sm:$0xff]
      %v1129 = vld [vmem:[%s636 + $0xed0] sm:$0xff]
      %v1130 = vld [vmem:[%s636 + $0xed8] sm:$0xff]
      %v1131 = vld [vmem:[%s636 + $0xee0] sm:$0xff]
      %v1132 = vld [vmem:[%s636 + $0xee8] sm:$0xff]
      %v1133 = vld [vmem:[%s636 + $0xef0] sm:$0xff]
      %v1134 = vld [vmem:[%s636 + $0xef8] sm:$0xff]
      %v1135 = vld [vmem:[%s636 + $0xf00] sm:$0xff]
      %v1136 = vld [vmem:[%s636 + $0xf08] sm:$0xff]
      %v1137 = vld [vmem:[%s636 + $0xf10] sm:$0xff]
      %v1138 = vld [vmem:[%s636 + $0xf18] sm:$0xff]
      %v1139 = vld [vmem:[%s636 + $0xf20] sm:$0xff]
      %v1140 = vld [vmem:[%s636 + $0xf28] sm:$0xff]
      %v1141 = vld [vmem:[%s636 + $0xf30] sm:$0xff]
      %v1142 = vld [vmem:[%s636 + $0xf38] sm:$0xff]
      %v1143 = vld [vmem:[%s636 + $0xf40] sm:$0xff]
      %v1144 = vld [vmem:[%s636 + $0xf48] sm:$0xff]
      %v1145 = vld [vmem:[%s636 + $0xf50] sm:$0xff]
      %v1146 = vld [vmem:[%s636 + $0xf58] sm:$0xff]
      %v1147 = vld [vmem:[%s636 + $0xf60] sm:$0xff]
      %v1148 = vld [vmem:[%s636 + $0xf68] sm:$0xff]
      %v1149 = vld [vmem:[%s636 + $0xf70] sm:$0xff]
      %v1150 = vld [vmem:[%s636 + $0xf78] sm:$0xff]
      %v1151 = vld [vmem:[%s636 + $0xf80] sm:$0xff]
      %v1152 = vld [vmem:[%s636 + $0xf88] sm:$0xff]
      %v1153 = vld [vmem:[%s636 + $0xf90] sm:$0xff]
      %v1154 = vld [vmem:[%s636 + $0xf98] sm:$0xff]
      %v1155 = vld [vmem:[%s636 + $0xfa0] sm:$0xff]
      %v1156 = vld [vmem:[%s636 + $0xfa8] sm:$0xff]
      %v1157 = vld [vmem:[%s636 + $0xfb0] sm:$0xff]
      %v1158 = vld [vmem:[%s636 + $0xfb8] sm:$0xff]
      %v1159 = vld [vmem:[%s636 + $0xfc0] sm:$0xff]
      %v1160 = vld [vmem:[%s636 + $0xfc8] sm:$0xff]
      %v1161 = vld [vmem:[%s636 + $0xfd0] sm:$0xff]
      %v1162 = vld [vmem:[%s636 + $0xfd8] sm:$0xff]
      %v1163 = vld [vmem:[%s636 + $0xfe0] sm:$0xff]
      %v1164 = vld [vmem:[%s636 + $0xfe8] sm:$0xff]
      %v1165 = vld [vmem:[%s636 + $0xff0] sm:$0xff]
      %v1166 = vld [vmem:[%s636 + $0xff8] sm:$0xff]
      %v1167 = vld [vmem:[#allocation2] sm:$0x1]
      %v1172 = vlaneseq
      %v1173 = vshrl.u32 %v1172, 7
      %v1174 = vsub.s32 0, %v1173
      %v1175 = vrot.slane %v651, %v1174
      %v1176 = vlaneseq
      %v1177 = vshrl.u32 %v1176, 7
      %v1178 = vsub.s32 1, %v1177
      %v1179 = vrot.slane %v651, %v1178
      %v1180 = vlaneseq
      %v1181 = vshrl.u32 %v1180, 7
      %v1182 = vsub.s32 2, %v1181
      %v1183 = vrot.slane %v651, %v1182
      %v1184 = vlaneseq
      %v1185 = vshrl.u32 %v1184, 7
      %v1186 = vsub.s32 3, %v1185
      %v1187 = vrot.slane %v651, %v1186
      %v1188 = vlaneseq
      %v1189 = vshrl.u32 %v1188, 7
      %v1190 = vsub.s32 4, %v1189
      %v1191 = vrot.slane %v651, %v1190
      %v1192 = vlaneseq
      %v1193 = vshrl.u32 %v1192, 7
      %v1194 = vsub.s32 5, %v1193
      %v1195 = vrot.slane %v651, %v1194
      %v1196 = vlaneseq
      %v1197 = vshrl.u32 %v1196, 7
      %v1198 = vsub.s32 6, %v1197
      %v1199 = vrot.slane %v651, %v1198
      %v1200 = vlaneseq
      %v1201 = vshrl.u32 %v1200, 7
      %v1202 = vsub.s32 7, %v1201
      %v1203 = vrot.slane %v651, %v1202
      %v1204 = vlaneseq
      %v1205 = vshrl.u32 %v1204, 7
      %v1206 = vsub.s32 0, %v1205
      %v1207 = vrot.slane %v652, %v1206
      %v1208 = vlaneseq
      %v1209 = vshrl.u32 %v1208, 7
      %v1210 = vsub.s32 1, %v1209
      %v1211 = vrot.slane %v652, %v1210
      %v1212 = vlaneseq
      %v1213 = vshrl.u32 %v1212, 7
      %v1214 = vsub.s32 2, %v1213
      %v1215 = vrot.slane %v652, %v1214
      %v1216 = vlaneseq
      %v1217 = vshrl.u32 %v1216, 7
      %v1218 = vsub.s32 3, %v1217
      %v1219 = vrot.slane %v652, %v1218
      %v1220 = vlaneseq
      %v1221 = vshrl.u32 %v1220, 7
      %v1222 = vsub.s32 4, %v1221
      %v1223 = vrot.slane %v652, %v1222
      %v1224 = vlaneseq
      %v1225 = vshrl.u32 %v1224, 7
      %v1226 = vsub.s32 5, %v1225
      %v1227 = vrot.slane %v652, %v1226
      %v1228 = vlaneseq
      %v1229 = vshrl.u32 %v1228, 7
      %v1230 = vsub.s32 6, %v1229
      %v1231 = vrot.slane %v652, %v1230
      %v1232 = vlaneseq
      %v1233 = vshrl.u32 %v1232, 7
      %v1234 = vsub.s32 7, %v1233
      %v1235 = vrot.slane %v652, %v1234
      %v1236 = vlaneseq
      %v1237 = vshrl.u32 %v1236, 7
      %v1238 = vsub.s32 0, %v1237
      %v1239 = vrot.slane %v653, %v1238
      %v1240 = vlaneseq
      %v1241 = vshrl.u32 %v1240, 7
      %v1242 = vsub.s32 1, %v1241
      %v1243 = vrot.slane %v653, %v1242
      %v1244 = vlaneseq
      %v1245 = vshrl.u32 %v1244, 7
      %v1246 = vsub.s32 2, %v1245
      %v1247 = vrot.slane %v653, %v1246
      %v1248 = vlaneseq
      %v1249 = vshrl.u32 %v1248, 7
      %v1250 = vsub.s32 3, %v1249
      %v1251 = vrot.slane %v653, %v1250
      %v1252 = vlaneseq
      %v1253 = vshrl.u32 %v1252, 7
      %v1254 = vsub.s32 4, %v1253
      %v1255 = vrot.slane %v653, %v1254
      %v1256 = vlaneseq
      %v1257 = vshrl.u32 %v1256, 7
      %v1258 = vsub.s32 5, %v1257
      %v1259 = vrot.slane %v653, %v1258
      %v1260 = vlaneseq
      %v1261 = vshrl.u32 %v1260, 7
      %v1262 = vsub.s32 6, %v1261
      %v1263 = vrot.slane %v653, %v1262
      %v1264 = vlaneseq
      %v1265 = vshrl.u32 %v1264, 7
      %v1266 = vsub.s32 7, %v1265
      %v1267 = vrot.slane %v653, %v1266
      %v1268 = vlaneseq
      %v1269 = vshrl.u32 %v1268, 7
      %v1270 = vsub.s32 0, %v1269
      %v1271 = vrot.slane %v654, %v1270
      %v1272 = vlaneseq
      %v1273 = vshrl.u32 %v1272, 7
      %v1274 = vsub.s32 1, %v1273
      %v1275 = vrot.slane %v654, %v1274
      %v1276 = vlaneseq
      %v1277 = vshrl.u32 %v1276, 7
      %v1278 = vsub.s32 2, %v1277
      %v1279 = vrot.slane %v654, %v1278
      %v1280 = vlaneseq
      %v1281 = vshrl.u32 %v1280, 7
      %v1282 = vsub.s32 3, %v1281
      %v1283 = vrot.slane %v654, %v1282
      %v1284 = vlaneseq
      %v1285 = vshrl.u32 %v1284, 7
      %v1286 = vsub.s32 4, %v1285
      %v1287 = vrot.slane %v654, %v1286
      %v1288 = vlaneseq
      %v1289 = vshrl.u32 %v1288, 7
      %v1290 = vsub.s32 5, %v1289
      %v1291 = vrot.slane %v654, %v1290
      %v1292 = vlaneseq
      %v1293 = vshrl.u32 %v1292, 7
      %v1294 = vsub.s32 6, %v1293
      %v1295 = vrot.slane %v654, %v1294
      %v1296 = vlaneseq
      %v1297 = vshrl.u32 %v1296, 7
      %v1298 = vsub.s32 7, %v1297
      %v1299 = vrot.slane %v654, %v1298
      %1332 = vmatprep.subr.mxu0 0.0
      %1333 = vmatpush1.msra.mxu0 %v670
      %1334 = vmatprep.subr.mxu0 0.0
      %1335 = vmatpush1.msra.mxu0 %v669
      %1336 = vmatprep.subr.mxu0 0.0
      %1337 = vmatpush1.msra.mxu0 %v668
      %1338 = vmatprep.subr.mxu0 0.0
      %1339 = vmatpush1.msra.mxu0 %v667
      %1340 = vmatprep.subr.mxu0 0.0
      %1341 = vmatpush1.msra.mxu0 %v666
      %1342 = vmatprep.subr.mxu0 0.0
      %1343 = vmatpush1.msra.mxu0 %v665
      %1344 = vmatprep.subr.mxu0 0.0
      %1345 = vmatpush1.msra.mxu0 %v664
      %1346 = vmatprep.subr.mxu0 0.0
      %1347 = vmatpush1.msra.mxu0 %v663
      %1348 = vmatprep.subr.mxu0 0.0
      %1349 = vmatpush1.msra.mxu0 %v662
      %1350 = vmatprep.subr.mxu0 0.0
      %1351 = vmatpush1.msra.mxu0 %v661
      %1352 = vmatprep.subr.mxu0 0.0
      %1353 = vmatpush1.msra.mxu0 %v660
      %1354 = vmatprep.subr.mxu0 0.0
      %1355 = vmatpush1.msra.mxu0 %v659
      %1356 = vmatprep.subr.mxu0 0.0
      %1357 = vmatpush1.msra.mxu0 %v658
      %1358 = vmatprep.subr.mxu0 0.0
      %1359 = vmatpush1.msra.mxu0 %v657
      %1360 = vmatprep.subr.mxu0 0.0
      %1361 = vmatpush1.msra.mxu0 %v656
      %1362 = vmatprep.subr.mxu0 0.0
      %1363 = vmatpush1.msra.mxu0 %v655
      %1364 = vmatprep.subr.mxu0 0.0
      %1365 = vmatpush2.msra.mxu0 %v686
      %1366 = vmatprep.subr.mxu0 0.0
      %1367 = vmatpush2.msra.mxu0 %v685
      %1368 = vmatprep.subr.mxu0 0.0
      %1369 = vmatpush2.msra.mxu0 %v684
      %1370 = vmatprep.subr.mxu0 0.0
      %1371 = vmatpush2.msra.mxu0 %v683
      %1372 = vmatprep.subr.mxu0 0.0
      %1373 = vmatpush2.msra.mxu0 %v682
      %1374 = vmatprep.subr.mxu0 0.0
      %1375 = vmatpush2.msra.mxu0 %v681
      %1376 = vmatprep.subr.mxu0 0.0
      %1377 = vmatpush2.msra.mxu0 %v680
      %1378 = vmatprep.subr.mxu0 0.0
      %1379 = vmatpush2.msra.mxu0 %v679
      %1380 = vmatprep.subr.mxu0 0.0
      %1381 = vmatpush2.msra.mxu0 %v678
      %1382 = vmatprep.subr.mxu0 0.0
      %1383 = vmatpush2.msra.mxu0 %v677
      %1384 = vmatprep.subr.mxu0 0.0
      %1385 = vmatpush2.msra.mxu0 %v676
      %1386 = vmatprep.subr.mxu0 0.0
      %1387 = vmatpush2.msra.mxu0 %v675
      %1388 = vmatprep.subr.mxu0 0.0
      %1389 = vmatpush2.msra.mxu0 %v674
      %1390 = vmatprep.subr.mxu0 0.0
      %1391 = vmatpush2.msra.mxu0 %v673
      %1392 = vmatprep.subr.mxu0 0.0
      %1393 = vmatpush2.msra.mxu0 %v672
      %1394 = vmatprep.subr.mxu0 0.0
      %1395 = vmatpush2.msra.mxu0 %v671
      %1396 = vmatprep.mubr.f32.mxu0 %v1179
      %1397 = vmatmul.mubr.f32.gmra.mxu0 %v1175
      %v1398 = vpop.f32.mrf.mxu0
      %v1399 = vadd.f32 0.0, %v1398
      %v1400 = vpop.f32.mrf.mxu0
      %1401 = vdwg.mxu0
      %1402 = vmatprep.subr.mxu0 0.0
      %1403 = vmatpush1.msra.mxu0 %v702
      %1404 = vmatprep.subr.mxu0 0.0
      %1405 = vmatpush1.msra.mxu0 %v701
      %1406 = vmatprep.subr.mxu0 0.0
      %1407 = vmatpush1.msra.mxu0 %v700
      %1408 = vmatprep.subr.mxu0 0.0
      %1409 = vmatpush1.msra.mxu0 %v699
      %1410 = vmatprep.subr.mxu0 0.0
      %1411 = vmatpush1.msra.mxu0 %v698
      %1412 = vmatprep.subr.mxu0 0.0
      %1413 = vmatpush1.msra.mxu0 %v697
      %1414 = vmatprep.subr.mxu0 0.0
      %1415 = vmatpush1.msra.mxu0 %v696
      %1416 = vmatprep.subr.mxu0 0.0
      %1417 = vmatpush1.msra.mxu0 %v695
      %1418 = vmatprep.subr.mxu0 0.0
      %1419 = vmatpush1.msra.mxu0 %v694
      %1420 = vmatprep.subr.mxu0 0.0
      %1421 = vmatpush1.msra.mxu0 %v693
      %1422 = vmatprep.subr.mxu0 0.0
      %1423 = vmatpush1.msra.mxu0 %v692
      %1424 = vmatprep.subr.mxu0 0.0
      %1425 = vmatpush1.msra.mxu0 %v691
      %1426 = vmatprep.subr.mxu0 0.0
      %1427 = vmatpush1.msra.mxu0 %v690
      %1428 = vmatprep.subr.mxu0 0.0
      %1429 = vmatpush1.msra.mxu0 %v689
      %1430 = vmatprep.subr.mxu0 0.0
      %1431 = vmatpush1.msra.mxu0 %v688
      %1432 = vmatprep.subr.mxu0 0.0
      %1433 = vmatpush1.msra.mxu0 %v687
      %1434 = vmatprep.subr.mxu0 0.0
      %1435 = vmatpush2.msra.mxu0 %v718
      %1436 = vmatprep.subr.mxu0 0.0
      %1437 = vmatpush2.msra.mxu0 %v717
      %1438 = vmatprep.subr.mxu0 0.0
      %1439 = vmatpush2.msra.mxu0 %v716
      %1440 = vmatprep.subr.mxu0 0.0
      %1441 = vmatpush2.msra.mxu0 %v715
      %1442 = vmatprep.subr.mxu0 0.0
      %1443 = vmatpush2.msra.mxu0 %v714
      %1444 = vmatprep.subr.mxu0 0.0
      %1445 = vmatpush2.msra.mxu0 %v713
      %1446 = vmatprep.subr.mxu0 0.0
      %1447 = vmatpush2.msra.mxu0 %v712
      %1448 = vmatprep.subr.mxu0 0.0
      %1449 = vmatpush2.msra.mxu0 %v711
      %1450 = vmatprep.subr.mxu0 0.0
      %1451 = vmatpush2.msra.mxu0 %v710
      %1452 = vmatprep.subr.mxu0 0.0
      %1453 = vmatpush2.msra.mxu0 %v709
      %1454 = vmatprep.subr.mxu0 0.0
      %1455 = vmatpush2.msra.mxu0 %v708
      %1456 = vmatprep.subr.mxu0 0.0
      %1457 = vmatpush2.msra.mxu0 %v707
      %1458 = vmatprep.subr.mxu0 0.0
      %1459 = vmatpush2.msra.mxu0 %v706
      %1460 = vmatprep.subr.mxu0 0.0
      %1461 = vmatpush2.msra.mxu0 %v705
      %1462 = vmatprep.subr.mxu0 0.0
      %1463 = vmatpush2.msra.mxu0 %v704
      %1464 = vmatprep.subr.mxu0 0.0
      %1465 = vmatpush2.msra.mxu0 %v703
      %1466 = vmatprep.mubr.f32.mxu0 %v1187
      %1467 = vmatmul.mubr.f32.gmra.mxu0 %v1183
      %v1468 = vpop.f32.mrf.mxu0
      %v1469 = vadd.f32 %v1399, %v1468
      %v1470 = vpop.f32.mrf.mxu0
      %1471 = vdwg.mxu0
      %1472 = vmatprep.subr.mxu0 0.0
      %1473 = vmatpush1.msra.mxu0 %v734
      %1474 = vmatprep.subr.mxu0 0.0
      %1475 = vmatpush1.msra.mxu0 %v733
      %1476 = vmatprep.subr.mxu0 0.0
      %1477 = vmatpush1.msra.mxu0 %v732
      %1478 = vmatprep.subr.mxu0 0.0
      %1479 = vmatpush1.msra.mxu0 %v731
      %1480 = vmatprep.subr.mxu0 0.0
      %1481 = vmatpush1.msra.mxu0 %v730
      %1482 = vmatprep.subr.mxu0 0.0
      %1483 = vmatpush1.msra.mxu0 %v729
      %1484 = vmatprep.subr.mxu0 0.0
      %1485 = vmatpush1.msra.mxu0 %v728
      %1486 = vmatprep.subr.mxu0 0.0
      %1487 = vmatpush1.msra.mxu0 %v727
      %1488 = vmatprep.subr.mxu0 0.0
      %1489 = vmatpush1.msra.mxu0 %v726
      %1490 = vmatprep.subr.mxu0 0.0
      %1491 = vmatpush1.msra.mxu0 %v725
      %1492 = vmatprep.subr.mxu0 0.0
      %1493 = vmatpush1.msra.mxu0 %v724
      %1494 = vmatprep.subr.mxu0 0.0
      %1495 = vmatpush1.msra.mxu0 %v723
      %1496 = vmatprep.subr.mxu0 0.0
      %1497 = vmatpush1.msra.mxu0 %v722
      %1498 = vmatprep.subr.mxu0 0.0
      %1499 = vmatpush1.msra.mxu0 %v721
      %1500 = vmatprep.subr.mxu0 0.0
      %1501 = vmatpush1.msra.mxu0 %v720
      %1502 = vmatprep.subr.mxu0 0.0
      %1503 = vmatpush1.msra.mxu0 %v719
      %1504 = vmatprep.subr.mxu0 0.0
      %1505 = vmatpush2.msra.mxu0 %v750
      %1506 = vmatprep.subr.mxu0 0.0
      %1507 = vmatpush2.msra.mxu0 %v749
      %1508 = vmatprep.subr.mxu0 0.0
      %1509 = vmatpush2.msra.mxu0 %v748
      %1510 = vmatprep.subr.mxu0 0.0
      %1511 = vmatpush2.msra.mxu0 %v747
      %1512 = vmatprep.subr.mxu0 0.0
      %1513 = vmatpush2.msra.mxu0 %v746
      %1514 = vmatprep.subr.mxu0 0.0
      %1515 = vmatpush2.msra.mxu0 %v745
      %1516 = vmatprep.subr.mxu0 0.0
      %1517 = vmatpush2.msra.mxu0 %v744
      %1518 = vmatprep.subr.mxu0 0.0
      %1519 = vmatpush2.msra.mxu0 %v743
      %1520 = vmatprep.subr.mxu0 0.0
      %1521 = vmatpush2.msra.mxu0 %v742
      %1522 = vmatprep.subr.mxu0 0.0
      %1523 = vmatpush2.msra.mxu0 %v741
      %1524 = vmatprep.subr.mxu0 0.0
      %1525 = vmatpush2.msra.mxu0 %v740
      %1526 = vmatprep.subr.mxu0 0.0
      %1527 = vmatpush2.msra.mxu0 %v739
      %1528 = vmatprep.subr.mxu0 0.0
      %1529 = vmatpush2.msra.mxu0 %v738
      %1530 = vmatprep.subr.mxu0 0.0
      %1531 = vmatpush2.msra.mxu0 %v737
      %1532 = vmatprep.subr.mxu0 0.0
      %1533 = vmatpush2.msra.mxu0 %v736
      %1534 = vmatprep.subr.mxu0 0.0
      %1535 = vmatpush2.msra.mxu0 %v735
      %1536 = vmatprep.mubr.f32.mxu0 %v1195
      %1537 = vmatmul.mubr.f32.gmra.mxu0 %v1191
      %v1538 = vpop.f32.mrf.mxu0
      %v1539 = vadd.f32 %v1469, %v1538
      %v1540 = vpop.f32.mrf.mxu0
      %1541 = vdwg.mxu0
      %1542 = vmatprep.subr.mxu0 0.0
      %1543 = vmatpush1.msra.mxu0 %v766
      %1544 = vmatprep.subr.mxu0 0.0
      %1545 = vmatpush1.msra.mxu0 %v765
      %1546 = vmatprep.subr.mxu0 0.0
      %1547 = vmatpush1.msra.mxu0 %v764
      %1548 = vmatprep.subr.mxu0 0.0
      %1549 = vmatpush1.msra.mxu0 %v763
      %1550 = vmatprep.subr.mxu0 0.0
      %1551 = vmatpush1.msra.mxu0 %v762
      %1552 = vmatprep.subr.mxu0 0.0
      %1553 = vmatpush1.msra.mxu0 %v761
      %1554 = vmatprep.subr.mxu0 0.0
      %1555 = vmatpush1.msra.mxu0 %v760
      %1556 = vmatprep.subr.mxu0 0.0
      %1557 = vmatpush1.msra.mxu0 %v759
      %1558 = vmatprep.subr.mxu0 0.0
      %1559 = vmatpush1.msra.mxu0 %v758
      %1560 = vmatprep.subr.mxu0 0.0
      %1561 = vmatpush1.msra.mxu0 %v757
      %1562 = vmatprep.subr.mxu0 0.0
      %1563 = vmatpush1.msra.mxu0 %v756
      %1564 = vmatprep.subr.mxu0 0.0
      %1565 = vmatpush1.msra.mxu0 %v755
      %1566 = vmatprep.subr.mxu0 0.0
      %1567 = vmatpush1.msra.mxu0 %v754
      %1568 = vmatprep.subr.mxu0 0.0
      %1569 = vmatpush1.msra.mxu0 %v753
      %1570 = vmatprep.subr.mxu0 0.0
      %1571 = vmatpush1.msra.mxu0 %v752
      %1572 = vmatprep.subr.mxu0 0.0
      %1573 = vmatpush1.msra.mxu0 %v751
      %1574 = vmatprep.subr.mxu0 0.0
      %1575 = vmatpush2.msra.mxu0 %v782
      %1576 = vmatprep.subr.mxu0 0.0
      %1577 = vmatpush2.msra.mxu0 %v781
      %1578 = vmatprep.subr.mxu0 0.0
      %1579 = vmatpush2.msra.mxu0 %v780
      %1580 = vmatprep.subr.mxu0 0.0
      %1581 = vmatpush2.msra.mxu0 %v779
      %1582 = vmatprep.subr.mxu0 0.0
      %1583 = vmatpush2.msra.mxu0 %v778
      %1584 = vmatprep.subr.mxu0 0.0
      %1585 = vmatpush2.msra.mxu0 %v777
      %1586 = vmatprep.subr.mxu0 0.0
      %1587 = vmatpush2.msra.mxu0 %v776
      %1588 = vmatprep.subr.mxu0 0.0
      %1589 = vmatpush2.msra.mxu0 %v775
      %1590 = vmatprep.subr.mxu0 0.0
      %1591 = vmatpush2.msra.mxu0 %v774
      %1592 = vmatprep.subr.mxu0 0.0
      %1593 = vmatpush2.msra.mxu0 %v773
      %1594 = vmatprep.subr.mxu0 0.0
      %1595 = vmatpush2.msra.mxu0 %v772
      %1596 = vmatprep.subr.mxu0 0.0
      %1597 = vmatpush2.msra.mxu0 %v771
      %1598 = vmatprep.subr.mxu0 0.0
      %1599 = vmatpush2.msra.mxu0 %v770
      %1600 = vmatprep.subr.mxu0 0.0
      %1601 = vmatpush2.msra.mxu0 %v769
      %1602 = vmatprep.subr.mxu0 0.0
      %1603 = vmatpush2.msra.mxu0 %v768
      %1604 = vmatprep.subr.mxu0 0.0
      %1605 = vmatpush2.msra.mxu0 %v767
      %1606 = vmatprep.mubr.f32.mxu0 %v1203
      %1607 = vmatmul.mubr.f32.gmra.mxu0 %v1199
      %v1608 = vpop.f32.mrf.mxu0
      %v1609 = vadd.f32 %v1539, %v1608
      %v1610 = vpop.f32.mrf.mxu0
      %1611 = vdwg.mxu0
      %1612 = vmatprep.subr.mxu0 0.0
      %1613 = vmatpush1.msra.mxu0 %v798
      %1614 = vmatprep.subr.mxu0 0.0
      %1615 = vmatpush1.msra.mxu0 %v797
      %1616 = vmatprep.subr.mxu0 0.0
      %1617 = vmatpush1.msra.mxu0 %v796
      %1618 = vmatprep.subr.mxu0 0.0
      %1619 = vmatpush1.msra.mxu0 %v795
      %1620 = vmatprep.subr.mxu0 0.0
      %1621 = vmatpush1.msra.mxu0 %v794
      %1622 = vmatprep.subr.mxu0 0.0
      %1623 = vmatpush1.msra.mxu0 %v793
      %1624 = vmatprep.subr.mxu0 0.0
      %1625 = vmatpush1.msra.mxu0 %v792
      %1626 = vmatprep.subr.mxu0 0.0
      %1627 = vmatpush1.msra.mxu0 %v791
      %1628 = vmatprep.subr.mxu0 0.0
      %1629 = vmatpush1.msra.mxu0 %v790
      %1630 = vmatprep.subr.mxu0 0.0
      %1631 = vmatpush1.msra.mxu0 %v789
      %1632 = vmatprep.subr.mxu0 0.0
      %1633 = vmatpush1.msra.mxu0 %v788
      %1634 = vmatprep.subr.mxu0 0.0
      %1635 = vmatpush1.msra.mxu0 %v787
      %1636 = vmatprep.subr.mxu0 0.0
      %1637 = vmatpush1.msra.mxu0 %v786
      %1638 = vmatprep.subr.mxu0 0.0
      %1639 = vmatpush1.msra.mxu0 %v785
      %1640 = vmatprep.subr.mxu0 0.0
      %1641 = vmatpush1.msra.mxu0 %v784
      %1642 = vmatprep.subr.mxu0 0.0
      %1643 = vmatpush1.msra.mxu0 %v783
      %1644 = vmatprep.subr.mxu0 0.0
      %1645 = vmatpush2.msra.mxu0 %v814
      %1646 = vmatprep.subr.mxu0 0.0
      %1647 = vmatpush2.msra.mxu0 %v813
      %1648 = vmatprep.subr.mxu0 0.0
      %1649 = vmatpush2.msra.mxu0 %v812
      %1650 = vmatprep.subr.mxu0 0.0
      %1651 = vmatpush2.msra.mxu0 %v811
      %1652 = vmatprep.subr.mxu0 0.0
      %1653 = vmatpush2.msra.mxu0 %v810
      %1654 = vmatprep.subr.mxu0 0.0
      %1655 = vmatpush2.msra.mxu0 %v809
      %1656 = vmatprep.subr.mxu0 0.0
      %1657 = vmatpush2.msra.mxu0 %v808
      %1658 = vmatprep.subr.mxu0 0.0
      %1659 = vmatpush2.msra.mxu0 %v807
      %1660 = vmatprep.subr.mxu0 0.0
      %1661 = vmatpush2.msra.mxu0 %v806
      %1662 = vmatprep.subr.mxu0 0.0
      %1663 = vmatpush2.msra.mxu0 %v805
      %1664 = vmatprep.subr.mxu0 0.0
      %1665 = vmatpush2.msra.mxu0 %v804
      %1666 = vmatprep.subr.mxu0 0.0
      %1667 = vmatpush2.msra.mxu0 %v803
      %1668 = vmatprep.subr.mxu0 0.0
      %1669 = vmatpush2.msra.mxu0 %v802
      %1670 = vmatprep.subr.mxu0 0.0
      %1671 = vmatpush2.msra.mxu0 %v801
      %1672 = vmatprep.subr.mxu0 0.0
      %1673 = vmatpush2.msra.mxu0 %v800
      %1674 = vmatprep.subr.mxu0 0.0
      %1675 = vmatpush2.msra.mxu0 %v799
      %1676 = vmatprep.mubr.f32.mxu0 %v1211
      %1677 = vmatmul.mubr.f32.gmra.mxu0 %v1207
      %v1678 = vpop.f32.mrf.mxu0
      %v1679 = vadd.f32 %v1609, %v1678
      %v1680 = vpop.f32.mrf.mxu0
      %1681 = vdwg.mxu0
      %1682 = vmatprep.subr.mxu0 0.0
      %1683 = vmatpush1.msra.mxu0 %v830
      %1684 = vmatprep.subr.mxu0 0.0
      %1685 = vmatpush1.msra.mxu0 %v829
      %1686 = vmatprep.subr.mxu0 0.0
      %1687 = vmatpush1.msra.mxu0 %v828
      %1688 = vmatprep.subr.mxu0 0.0
      %1689 = vmatpush1.msra.mxu0 %v827
      %1690 = vmatprep.subr.mxu0 0.0
      %1691 = vmatpush1.msra.mxu0 %v826
      %1692 = vmatprep.subr.mxu0 0.0
      %1693 = vmatpush1.msra.mxu0 %v825
      %1694 = vmatprep.subr.mxu0 0.0
      %1695 = vmatpush1.msra.mxu0 %v824
      %1696 = vmatprep.subr.mxu0 0.0
      %1697 = vmatpush1.msra.mxu0 %v823
      %1698 = vmatprep.subr.mxu0 0.0
      %1699 = vmatpush1.msra.mxu0 %v822
      %1700 = vmatprep.subr.mxu0 0.0
      %1701 = vmatpush1.msra.mxu0 %v821
      %1702 = vmatprep.subr.mxu0 0.0
      %1703 = vmatpush1.msra.mxu0 %v820
      %1704 = vmatprep.subr.mxu0 0.0
      %1705 = vmatpush1.msra.mxu0 %v819
      %1706 = vmatprep.subr.mxu0 0.0
      %1707 = vmatpush1.msra.mxu0 %v818
      %1708 = vmatprep.subr.mxu0 0.0
      %1709 = vmatpush1.msra.mxu0 %v817
      %1710 = vmatprep.subr.mxu0 0.0
      %1711 = vmatpush1.msra.mxu0 %v816
      %1712 = vmatprep.subr.mxu0 0.0
      %1713 = vmatpush1.msra.mxu0 %v815
      %1714 = vmatprep.subr.mxu0 0.0
      %1715 = vmatpush2.msra.mxu0 %v846
      %1716 = vmatprep.subr.mxu0 0.0
      %1717 = vmatpush2.msra.mxu0 %v845
      %1718 = vmatprep.subr.mxu0 0.0
      %1719 = vmatpush2.msra.mxu0 %v844
      %1720 = vmatprep.subr.mxu0 0.0
      %1721 = vmatpush2.msra.mxu0 %v843
      %1722 = vmatprep.subr.mxu0 0.0
      %1723 = vmatpush2.msra.mxu0 %v842
      %1724 = vmatprep.subr.mxu0 0.0
      %1725 = vmatpush2.msra.mxu0 %v841
      %1726 = vmatprep.subr.mxu0 0.0
      %1727 = vmatpush2.msra.mxu0 %v840
      %1728 = vmatprep.subr.mxu0 0.0
      %1729 = vmatpush2.msra.mxu0 %v839
      %1730 = vmatprep.subr.mxu0 0.0
      %1731 = vmatpush2.msra.mxu0 %v838
      %1732 = vmatprep.subr.mxu0 0.0
      %1733 = vmatpush2.msra.mxu0 %v837
      %1734 = vmatprep.subr.mxu0 0.0
      %1735 = vmatpush2.msra.mxu0 %v836
      %1736 = vmatprep.subr.mxu0 0.0
      %1737 = vmatpush2.msra.mxu0 %v835
      %1738 = vmatprep.subr.mxu0 0.0
      %1739 = vmatpush2.msra.mxu0 %v834
      %1740 = vmatprep.subr.mxu0 0.0
      %1741 = vmatpush2.msra.mxu0 %v833
      %1742 = vmatprep.subr.mxu0 0.0
      %1743 = vmatpush2.msra.mxu0 %v832
      %1744 = vmatprep.subr.mxu0 0.0
      %1745 = vmatpush2.msra.mxu0 %v831
      %1746 = vmatprep.mubr.f32.mxu0 %v1219
      %1747 = vmatmul.mubr.f32.gmra.mxu0 %v1215
      %v1748 = vpop.f32.mrf.mxu0
      %v1749 = vadd.f32 %v1679, %v1748
      %v1750 = vpop.f32.mrf.mxu0
      %1751 = vdwg.mxu0
      %1752 = vmatprep.subr.mxu0 0.0
      %1753 = vmatpush1.msra.mxu0 %v862
      %1754 = vmatprep.subr.mxu0 0.0
      %1755 = vmatpush1.msra.mxu0 %v861
      %1756 = vmatprep.subr.mxu0 0.0
      %1757 = vmatpush1.msra.mxu0 %v860
      %1758 = vmatprep.subr.mxu0 0.0
      %1759 = vmatpush1.msra.mxu0 %v859
      %1760 = vmatprep.subr.mxu0 0.0
      %1761 = vmatpush1.msra.mxu0 %v858
      %1762 = vmatprep.subr.mxu0 0.0
      %1763 = vmatpush1.msra.mxu0 %v857
      %1764 = vmatprep.subr.mxu0 0.0
      %1765 = vmatpush1.msra.mxu0 %v856
      %1766 = vmatprep.subr.mxu0 0.0
      %1767 = vmatpush1.msra.mxu0 %v855
      %1768 = vmatprep.subr.mxu0 0.0
      %1769 = vmatpush1.msra.mxu0 %v854
      %1770 = vmatprep.subr.mxu0 0.0
      %1771 = vmatpush1.msra.mxu0 %v853
      %1772 = vmatprep.subr.mxu0 0.0
      %1773 = vmatpush1.msra.mxu0 %v852
      %1774 = vmatprep.subr.mxu0 0.0
      %1775 = vmatpush1.msra.mxu0 %v851
      %1776 = vmatprep.subr.mxu0 0.0
      %1777 = vmatpush1.msra.mxu0 %v850
      %1778 = vmatprep.subr.mxu0 0.0
      %1779 = vmatpush1.msra.mxu0 %v849
      %1780 = vmatprep.subr.mxu0 0.0
      %1781 = vmatpush1.msra.mxu0 %v848
      %1782 = vmatprep.subr.mxu0 0.0
      %1783 = vmatpush1.msra.mxu0 %v847
      %1784 = vmatprep.subr.mxu0 0.0
      %1785 = vmatpush2.msra.mxu0 %v878
      %1786 = vmatprep.subr.mxu0 0.0
      %1787 = vmatpush2.msra.mxu0 %v877
      %1788 = vmatprep.subr.mxu0 0.0
      %1789 = vmatpush2.msra.mxu0 %v876
      %1790 = vmatprep.subr.mxu0 0.0
      %1791 = vmatpush2.msra.mxu0 %v875
      %1792 = vmatprep.subr.mxu0 0.0
      %1793 = vmatpush2.msra.mxu0 %v874
      %1794 = vmatprep.subr.mxu0 0.0
      %1795 = vmatpush2.msra.mxu0 %v873
      %1796 = vmatprep.subr.mxu0 0.0
      %1797 = vmatpush2.msra.mxu0 %v872
      %1798 = vmatprep.subr.mxu0 0.0
      %1799 = vmatpush2.msra.mxu0 %v871
      %1800 = vmatprep.subr.mxu0 0.0
      %1801 = vmatpush2.msra.mxu0 %v870
      %1802 = vmatprep.subr.mxu0 0.0
      %1803 = vmatpush2.msra.mxu0 %v869
      %1804 = vmatprep.subr.mxu0 0.0
      %1805 = vmatpush2.msra.mxu0 %v868
      %1806 = vmatprep.subr.mxu0 0.0
      %1807 = vmatpush2.msra.mxu0 %v867
      %1808 = vmatprep.subr.mxu0 0.0
      %1809 = vmatpush2.msra.mxu0 %v866
      %1810 = vmatprep.subr.mxu0 0.0
      %1811 = vmatpush2.msra.mxu0 %v865
      %1812 = vmatprep.subr.mxu0 0.0
      %1813 = vmatpush2.msra.mxu0 %v864
      %1814 = vmatprep.subr.mxu0 0.0
      %1815 = vmatpush2.msra.mxu0 %v863
      %1816 = vmatprep.mubr.f32.mxu0 %v1227
      %1817 = vmatmul.mubr.f32.gmra.mxu0 %v1223
      %v1818 = vpop.f32.mrf.mxu0
      %v1819 = vadd.f32 %v1749, %v1818
      %v1820 = vpop.f32.mrf.mxu0
      %1821 = vdwg.mxu0
      %1822 = vmatprep.subr.mxu0 0.0
      %1823 = vmatpush1.msra.mxu0 %v894
      %1824 = vmatprep.subr.mxu0 0.0
      %1825 = vmatpush1.msra.mxu0 %v893
      %1826 = vmatprep.subr.mxu0 0.0
      %1827 = vmatpush1.msra.mxu0 %v892
      %1828 = vmatprep.subr.mxu0 0.0
      %1829 = vmatpush1.msra.mxu0 %v891
      %1830 = vmatprep.subr.mxu0 0.0
      %1831 = vmatpush1.msra.mxu0 %v890
      %1832 = vmatprep.subr.mxu0 0.0
      %1833 = vmatpush1.msra.mxu0 %v889
      %1834 = vmatprep.subr.mxu0 0.0
      %1835 = vmatpush1.msra.mxu0 %v888
      %1836 = vmatprep.subr.mxu0 0.0
      %1837 = vmatpush1.msra.mxu0 %v887
      %1838 = vmatprep.subr.mxu0 0.0
      %1839 = vmatpush1.msra.mxu0 %v886
      %1840 = vmatprep.subr.mxu0 0.0
      %1841 = vmatpush1.msra.mxu0 %v885
      %1842 = vmatprep.subr.mxu0 0.0
      %1843 = vmatpush1.msra.mxu0 %v884
      %1844 = vmatprep.subr.mxu0 0.0
      %1845 = vmatpush1.msra.mxu0 %v883
      %1846 = vmatprep.subr.mxu0 0.0
      %1847 = vmatpush1.msra.mxu0 %v882
      %1848 = vmatprep.subr.mxu0 0.0
      %1849 = vmatpush1.msra.mxu0 %v881
      %1850 = vmatprep.subr.mxu0 0.0
      %1851 = vmatpush1.msra.mxu0 %v880
      %1852 = vmatprep.subr.mxu0 0.0
      %1853 = vmatpush1.msra.mxu0 %v879
      %1854 = vmatprep.subr.mxu0 0.0
      %1855 = vmatpush2.msra.mxu0 %v910
      %1856 = vmatprep.subr.mxu0 0.0
      %1857 = vmatpush2.msra.mxu0 %v909
      %1858 = vmatprep.subr.mxu0 0.0
      %1859 = vmatpush2.msra.mxu0 %v908
      %1860 = vmatprep.subr.mxu0 0.0
      %1861 = vmatpush2.msra.mxu0 %v907
      %1862 = vmatprep.subr.mxu0 0.0
      %1863 = vmatpush2.msra.mxu0 %v906
      %1864 = vmatprep.subr.mxu0 0.0
      %1865 = vmatpush2.msra.mxu0 %v905
      %1866 = vmatprep.subr.mxu0 0.0
      %1867 = vmatpush2.msra.mxu0 %v904
      %1868 = vmatprep.subr.mxu0 0.0
      %1869 = vmatpush2.msra.mxu0 %v903
      %1870 = vmatprep.subr.mxu0 0.0
      %1871 = vmatpush2.msra.mxu0 %v902
      %1872 = vmatprep.subr.mxu0 0.0
      %1873 = vmatpush2.msra.mxu0 %v901
      %1874 = vmatprep.subr.mxu0 0.0
      %1875 = vmatpush2.msra.mxu0 %v900
      %1876 = vmatprep.subr.mxu0 0.0
      %1877 = vmatpush2.msra.mxu0 %v899
      %1878 = vmatprep.subr.mxu0 0.0
      %1879 = vmatpush2.msra.mxu0 %v898
      %1880 = vmatprep.subr.mxu0 0.0
      %1881 = vmatpush2.msra.mxu0 %v897
      %1882 = vmatprep.subr.mxu0 0.0
      %1883 = vmatpush2.msra.mxu0 %v896
      %1884 = vmatprep.subr.mxu0 0.0
      %1885 = vmatpush2.msra.mxu0 %v895
      %1886 = vmatprep.mubr.f32.mxu0 %v1235
      %1887 = vmatmul.mubr.f32.gmra.mxu0 %v1231
      %v1888 = vpop.f32.mrf.mxu0
      %v1889 = vadd.f32 %v1819, %v1888
      %v1890 = vpop.f32.mrf.mxu0
      %1891 = vdwg.mxu0
      %1892 = vmatprep.subr.mxu0 0.0
      %1893 = vmatpush1.msra.mxu0 %v926
      %1894 = vmatprep.subr.mxu0 0.0
      %1895 = vmatpush1.msra.mxu0 %v925
      %1896 = vmatprep.subr.mxu0 0.0
      %1897 = vmatpush1.msra.mxu0 %v924
      %1898 = vmatprep.subr.mxu0 0.0
      %1899 = vmatpush1.msra.mxu0 %v923
      %1900 = vmatprep.subr.mxu0 0.0
      %1901 = vmatpush1.msra.mxu0 %v922
      %1902 = vmatprep.subr.mxu0 0.0
      %1903 = vmatpush1.msra.mxu0 %v921
      %1904 = vmatprep.subr.mxu0 0.0
      %1905 = vmatpush1.msra.mxu0 %v920
      %1906 = vmatprep.subr.mxu0 0.0
      %1907 = vmatpush1.msra.mxu0 %v919
      %1908 = vmatprep.subr.mxu0 0.0
      %1909 = vmatpush1.msra.mxu0 %v918
      %1910 = vmatprep.subr.mxu0 0.0
      %1911 = vmatpush1.msra.mxu0 %v917
      %1912 = vmatprep.subr.mxu0 0.0
      %1913 = vmatpush1.msra.mxu0 %v916
      %1914 = vmatprep.subr.mxu0 0.0
      %1915 = vmatpush1.msra.mxu0 %v915
      %1916 = vmatprep.subr.mxu0 0.0
      %1917 = vmatpush1.msra.mxu0 %v914
      %1918 = vmatprep.subr.mxu0 0.0
      %1919 = vmatpush1.msra.mxu0 %v913
      %1920 = vmatprep.subr.mxu0 0.0
      %1921 = vmatpush1.msra.mxu0 %v912
      %1922 = vmatprep.subr.mxu0 0.0
      %1923 = vmatpush1.msra.mxu0 %v911
      %1924 = vmatprep.subr.mxu0 0.0
      %1925 = vmatpush2.msra.mxu0 %v942
      %1926 = vmatprep.subr.mxu0 0.0
      %1927 = vmatpush2.msra.mxu0 %v941
      %1928 = vmatprep.subr.mxu0 0.0
      %1929 = vmatpush2.msra.mxu0 %v940
      %1930 = vmatprep.subr.mxu0 0.0
      %1931 = vmatpush2.msra.mxu0 %v939
      %1932 = vmatprep.subr.mxu0 0.0
      %1933 = vmatpush2.msra.mxu0 %v938
      %1934 = vmatprep.subr.mxu0 0.0
      %1935 = vmatpush2.msra.mxu0 %v937
      %1936 = vmatprep.subr.mxu0 0.0
      %1937 = vmatpush2.msra.mxu0 %v936
      %1938 = vmatprep.subr.mxu0 0.0
      %1939 = vmatpush2.msra.mxu0 %v935
      %1940 = vmatprep.subr.mxu0 0.0
      %1941 = vmatpush2.msra.mxu0 %v934
      %1942 = vmatprep.subr.mxu0 0.0
      %1943 = vmatpush2.msra.mxu0 %v933
      %1944 = vmatprep.subr.mxu0 0.0
      %1945 = vmatpush2.msra.mxu0 %v932
      %1946 = vmatprep.subr.mxu0 0.0
      %1947 = vmatpush2.msra.mxu0 %v931
      %1948 = vmatprep.subr.mxu0 0.0
      %1949 = vmatpush2.msra.mxu0 %v930
      %1950 = vmatprep.subr.mxu0 0.0
      %1951 = vmatpush2.msra.mxu0 %v929
      %1952 = vmatprep.subr.mxu0 0.0
      %1953 = vmatpush2.msra.mxu0 %v928
      %1954 = vmatprep.subr.mxu0 0.0
      %1955 = vmatpush2.msra.mxu0 %v927
      %1956 = vmatprep.mubr.f32.mxu0 %v1243
      %1957 = vmatmul.mubr.f32.gmra.mxu0 %v1239
      %v1958 = vpop.f32.mrf.mxu0
      %v1959 = vadd.f32 %v1889, %v1958
      %v1960 = vpop.f32.mrf.mxu0
      %1961 = vdwg.mxu0
      %1962 = vmatprep.subr.mxu0 0.0
      %1963 = vmatpush1.msra.mxu0 %v958
      %1964 = vmatprep.subr.mxu0 0.0
      %1965 = vmatpush1.msra.mxu0 %v957
      %1966 = vmatprep.subr.mxu0 0.0
      %1967 = vmatpush1.msra.mxu0 %v956
      %1968 = vmatprep.subr.mxu0 0.0
      %1969 = vmatpush1.msra.mxu0 %v955
      %1970 = vmatprep.subr.mxu0 0.0
      %1971 = vmatpush1.msra.mxu0 %v954
      %1972 = vmatprep.subr.mxu0 0.0
      %1973 = vmatpush1.msra.mxu0 %v953
      %1974 = vmatprep.subr.mxu0 0.0
      %1975 = vmatpush1.msra.mxu0 %v952
      %1976 = vmatprep.subr.mxu0 0.0
      %1977 = vmatpush1.msra.mxu0 %v951
      %1978 = vmatprep.subr.mxu0 0.0
      %1979 = vmatpush1.msra.mxu0 %v950
      %1980 = vmatprep.subr.mxu0 0.0
      %1981 = vmatpush1.msra.mxu0 %v949
      %1982 = vmatprep.subr.mxu0 0.0
      %1983 = vmatpush1.msra.mxu0 %v948
      %1984 = vmatprep.subr.mxu0 0.0
      %1985 = vmatpush1.msra.mxu0 %v947
      %1986 = vmatprep.subr.mxu0 0.0
      %1987 = vmatpush1.msra.mxu0 %v946
      %1988 = vmatprep.subr.mxu0 0.0
      %1989 = vmatpush1.msra.mxu0 %v945
      %1990 = vmatprep.subr.mxu0 0.0
      %1991 = vmatpush1.msra.mxu0 %v944
      %1992 = vmatprep.subr.mxu0 0.0
      %1993 = vmatpush1.msra.mxu0 %v943
      %1994 = vmatprep.subr.mxu0 0.0
      %1995 = vmatpush2.msra.mxu0 %v974
      %1996 = vmatprep.subr.mxu0 0.0
      %1997 = vmatpush2.msra.mxu0 %v973
      %1998 = vmatprep.subr.mxu0 0.0
      %1999 = vmatpush2.msra.mxu0 %v972
      %2000 = vmatprep.subr.mxu0 0.0
      %2001 = vmatpush2.msra.mxu0 %v971
      %2002 = vmatprep.subr.mxu0 0.0
      %2003 = vmatpush2.msra.mxu0 %v970
      %2004 = vmatprep.subr.mxu0 0.0
      %2005 = vmatpush2.msra.mxu0 %v969
      %2006 = vmatprep.subr.mxu0 0.0
      %2007 = vmatpush2.msra.mxu0 %v968
      %2008 = vmatprep.subr.mxu0 0.0
      %2009 = vmatpush2.msra.mxu0 %v967
      %2010 = vmatprep.subr.mxu0 0.0
      %2011 = vmatpush2.msra.mxu0 %v966
      %2012 = vmatprep.subr.mxu0 0.0
      %2013 = vmatpush2.msra.mxu0 %v965
      %2014 = vmatprep.subr.mxu0 0.0
      %2015 = vmatpush2.msra.mxu0 %v964
      %2016 = vmatprep.subr.mxu0 0.0
      %2017 = vmatpush2.msra.mxu0 %v963
      %2018 = vmatprep.subr.mxu0 0.0
      %2019 = vmatpush2.msra.mxu0 %v962
      %2020 = vmatprep.subr.mxu0 0.0
      %2021 = vmatpush2.msra.mxu0 %v961
      %2022 = vmatprep.subr.mxu0 0.0
      %2023 = vmatpush2.msra.mxu0 %v960
      %2024 = vmatprep.subr.mxu0 0.0
      %2025 = vmatpush2.msra.mxu0 %v959
      %2026 = vmatprep.mubr.f32.mxu0 %v1251
      %2027 = vmatmul.mubr.f32.gmra.mxu0 %v1247
      %v2028 = vpop.f32.mrf.mxu0
      %v2029 = vadd.f32 %v1959, %v2028
      %v2030 = vpop.f32.mrf.mxu0
      %2031 = vdwg.mxu0
      %2032 = vmatprep.subr.mxu0 0.0
      %2033 = vmatpush1.msra.mxu0 %v990
      %2034 = vmatprep.subr.mxu0 0.0
      %2035 = vmatpush1.msra.mxu0 %v989
      %2036 = vmatprep.subr.mxu0 0.0
      %2037 = vmatpush1.msra.mxu0 %v988
      %2038 = vmatprep.subr.mxu0 0.0
      %2039 = vmatpush1.msra.mxu0 %v987
      %2040 = vmatprep.subr.mxu0 0.0
      %2041 = vmatpush1.msra.mxu0 %v986
      %2042 = vmatprep.subr.mxu0 0.0
      %2043 = vmatpush1.msra.mxu0 %v985
      %2044 = vmatprep.subr.mxu0 0.0
      %2045 = vmatpush1.msra.mxu0 %v984
      %2046 = vmatprep.subr.mxu0 0.0
      %2047 = vmatpush1.msra.mxu0 %v983
      %2048 = vmatprep.subr.mxu0 0.0
      %2049 = vmatpush1.msra.mxu0 %v982
      %2050 = vmatprep.subr.mxu0 0.0
      %2051 = vmatpush1.msra.mxu0 %v981
      %2052 = vmatprep.subr.mxu0 0.0
      %2053 = vmatpush1.msra.mxu0 %v980
      %2054 = vmatprep.subr.mxu0 0.0
      %2055 = vmatpush1.msra.mxu0 %v979
      %2056 = vmatprep.subr.mxu0 0.0
      %2057 = vmatpush1.msra.mxu0 %v978
      %2058 = vmatprep.subr.mxu0 0.0
      %2059 = vmatpush1.msra.mxu0 %v977
      %2060 = vmatprep.subr.mxu0 0.0
      %2061 = vmatpush1.msra.mxu0 %v976
      %2062 = vmatprep.subr.mxu0 0.0
      %2063 = vmatpush1.msra.mxu0 %v975
      %2064 = vmatprep.subr.mxu0 0.0
      %2065 = vmatpush2.msra.mxu0 %v1006
      %2066 = vmatprep.subr.mxu0 0.0
      %2067 = vmatpush2.msra.mxu0 %v1005
      %2068 = vmatprep.subr.mxu0 0.0
      %2069 = vmatpush2.msra.mxu0 %v1004
      %2070 = vmatprep.subr.mxu0 0.0
      %2071 = vmatpush2.msra.mxu0 %v1003
      %2072 = vmatprep.subr.mxu0 0.0
      %2073 = vmatpush2.msra.mxu0 %v1002
      %2074 = vmatprep.subr.mxu0 0.0
      %2075 = vmatpush2.msra.mxu0 %v1001
      %2076 = vmatprep.subr.mxu0 0.0
      %2077 = vmatpush2.msra.mxu0 %v1000
      %2078 = vmatprep.subr.mxu0 0.0
      %2079 = vmatpush2.msra.mxu0 %v999
      %2080 = vmatprep.subr.mxu0 0.0
      %2081 = vmatpush2.msra.mxu0 %v998
      %2082 = vmatprep.subr.mxu0 0.0
      %2083 = vmatpush2.msra.mxu0 %v997
      %2084 = vmatprep.subr.mxu0 0.0
      %2085 = vmatpush2.msra.mxu0 %v996
      %2086 = vmatprep.subr.mxu0 0.0
      %2087 = vmatpush2.msra.mxu0 %v995
      %2088 = vmatprep.subr.mxu0 0.0
      %2089 = vmatpush2.msra.mxu0 %v994
      %2090 = vmatprep.subr.mxu0 0.0
      %2091 = vmatpush2.msra.mxu0 %v993
      %2092 = vmatprep.subr.mxu0 0.0
      %2093 = vmatpush2.msra.mxu0 %v992
      %2094 = vmatprep.subr.mxu0 0.0
      %2095 = vmatpush2.msra.mxu0 %v991
      %2096 = vmatprep.mubr.f32.mxu0 %v1259
      %2097 = vmatmul.mubr.f32.gmra.mxu0 %v1255
      %v2098 = vpop.f32.mrf.mxu0
      %v2099 = vadd.f32 %v2029, %v2098
      %v2100 = vpop.f32.mrf.mxu0
      %2101 = vdwg.mxu0
      %2102 = vmatprep.subr.mxu0 0.0
      %2103 = vmatpush1.msra.mxu0 %v1022
      %2104 = vmatprep.subr.mxu0 0.0
      %2105 = vmatpush1.msra.mxu0 %v1021
      %2106 = vmatprep.subr.mxu0 0.0
      %2107 = vmatpush1.msra.mxu0 %v1020
      %2108 = vmatprep.subr.mxu0 0.0
      %2109 = vmatpush1.msra.mxu0 %v1019
      %2110 = vmatprep.subr.mxu0 0.0
      %2111 = vmatpush1.msra.mxu0 %v1018
      %2112 = vmatprep.subr.mxu0 0.0
      %2113 = vmatpush1.msra.mxu0 %v1017
      %2114 = vmatprep.subr.mxu0 0.0
      %2115 = vmatpush1.msra.mxu0 %v1016
      %2116 = vmatprep.subr.mxu0 0.0
      %2117 = vmatpush1.msra.mxu0 %v1015
      %2118 = vmatprep.subr.mxu0 0.0
      %2119 = vmatpush1.msra.mxu0 %v1014
      %2120 = vmatprep.subr.mxu0 0.0
      %2121 = vmatpush1.msra.mxu0 %v1013
      %2122 = vmatprep.subr.mxu0 0.0
      %2123 = vmatpush1.msra.mxu0 %v1012
      %2124 = vmatprep.subr.mxu0 0.0
      %2125 = vmatpush1.msra.mxu0 %v1011
      %2126 = vmatprep.subr.mxu0 0.0
      %2127 = vmatpush1.msra.mxu0 %v1010
      %2128 = vmatprep.subr.mxu0 0.0
      %2129 = vmatpush1.msra.mxu0 %v1009
      %2130 = vmatprep.subr.mxu0 0.0
      %2131 = vmatpush1.msra.mxu0 %v1008
      %2132 = vmatprep.subr.mxu0 0.0
      %2133 = vmatpush1.msra.mxu0 %v1007
      %2134 = vmatprep.subr.mxu0 0.0
      %2135 = vmatpush2.msra.mxu0 %v1038
      %2136 = vmatprep.subr.mxu0 0.0
      %2137 = vmatpush2.msra.mxu0 %v1037
      %2138 = vmatprep.subr.mxu0 0.0
      %2139 = vmatpush2.msra.mxu0 %v1036
      %2140 = vmatprep.subr.mxu0 0.0
      %2141 = vmatpush2.msra.mxu0 %v1035
      %2142 = vmatprep.subr.mxu0 0.0
      %2143 = vmatpush2.msra.mxu0 %v1034
      %2144 = vmatprep.subr.mxu0 0.0
      %2145 = vmatpush2.msra.mxu0 %v1033
      %2146 = vmatprep.subr.mxu0 0.0
      %2147 = vmatpush2.msra.mxu0 %v1032
      %2148 = vmatprep.subr.mxu0 0.0
      %2149 = vmatpush2.msra.mxu0 %v1031
      %2150 = vmatprep.subr.mxu0 0.0
      %2151 = vmatpush2.msra.mxu0 %v1030
      %2152 = vmatprep.subr.mxu0 0.0
      %2153 = vmatpush2.msra.mxu0 %v1029
      %2154 = vmatprep.subr.mxu0 0.0
      %2155 = vmatpush2.msra.mxu0 %v1028
      %2156 = vmatprep.subr.mxu0 0.0
      %2157 = vmatpush2.msra.mxu0 %v1027
      %2158 = vmatprep.subr.mxu0 0.0
      %2159 = vmatpush2.msra.mxu0 %v1026
      %2160 = vmatprep.subr.mxu0 0.0
      %2161 = vmatpush2.msra.mxu0 %v1025
      %2162 = vmatprep.subr.mxu0 0.0
      %2163 = vmatpush2.msra.mxu0 %v1024
      %2164 = vmatprep.subr.mxu0 0.0
      %2165 = vmatpush2.msra.mxu0 %v1023
      %2166 = vmatprep.mubr.f32.mxu0 %v1267
      %2167 = vmatmul.mubr.f32.gmra.mxu0 %v1263
      %v2168 = vpop.f32.mrf.mxu0
      %v2169 = vadd.f32 %v2099, %v2168
      %v2170 = vpop.f32.mrf.mxu0
      %2171 = vdwg.mxu0
      %2172 = vmatprep.subr.mxu0 0.0
      %2173 = vmatpush1.msra.mxu0 %v1054
      %2174 = vmatprep.subr.mxu0 0.0
      %2175 = vmatpush1.msra.mxu0 %v1053
      %2176 = vmatprep.subr.mxu0 0.0
      %2177 = vmatpush1.msra.mxu0 %v1052
      %2178 = vmatprep.subr.mxu0 0.0
      %2179 = vmatpush1.msra.mxu0 %v1051
      %2180 = vmatprep.subr.mxu0 0.0
      %2181 = vmatpush1.msra.mxu0 %v1050
      %2182 = vmatprep.subr.mxu0 0.0
      %2183 = vmatpush1.msra.mxu0 %v1049
      %2184 = vmatprep.subr.mxu0 0.0
      %2185 = vmatpush1.msra.mxu0 %v1048
      %2186 = vmatprep.subr.mxu0 0.0
      %2187 = vmatpush1.msra.mxu0 %v1047
      %2188 = vmatprep.subr.mxu0 0.0
      %2189 = vmatpush1.msra.mxu0 %v1046
      %2190 = vmatprep.subr.mxu0 0.0
      %2191 = vmatpush1.msra.mxu0 %v1045
      %2192 = vmatprep.subr.mxu0 0.0
      %2193 = vmatpush1.msra.mxu0 %v1044
      %2194 = vmatprep.subr.mxu0 0.0
      %2195 = vmatpush1.msra.mxu0 %v1043
      %2196 = vmatprep.subr.mxu0 0.0
      %2197 = vmatpush1.msra.mxu0 %v1042
      %2198 = vmatprep.subr.mxu0 0.0
      %2199 = vmatpush1.msra.mxu0 %v1041
      %2200 = vmatprep.subr.mxu0 0.0
      %2201 = vmatpush1.msra.mxu0 %v1040
      %2202 = vmatprep.subr.mxu0 0.0
      %2203 = vmatpush1.msra.mxu0 %v1039
      %2204 = vmatprep.subr.mxu0 0.0
      %2205 = vmatpush2.msra.mxu0 %v1070
      %2206 = vmatprep.subr.mxu0 0.0
      %2207 = vmatpush2.msra.mxu0 %v1069
      %2208 = vmatprep.subr.mxu0 0.0
      %2209 = vmatpush2.msra.mxu0 %v1068
      %2210 = vmatprep.subr.mxu0 0.0
      %2211 = vmatpush2.msra.mxu0 %v1067
      %2212 = vmatprep.subr.mxu0 0.0
      %2213 = vmatpush2.msra.mxu0 %v1066
      %2214 = vmatprep.subr.mxu0 0.0
      %2215 = vmatpush2.msra.mxu0 %v1065
      %2216 = vmatprep.subr.mxu0 0.0
      %2217 = vmatpush2.msra.mxu0 %v1064
      %2218 = vmatprep.subr.mxu0 0.0
      %2219 = vmatpush2.msra.mxu0 %v1063
      %2220 = vmatprep.subr.mxu0 0.0
      %2221 = vmatpush2.msra.mxu0 %v1062
      %2222 = vmatprep.subr.mxu0 0.0
      %2223 = vmatpush2.msra.mxu0 %v1061
      %2224 = vmatprep.subr.mxu0 0.0
      %2225 = vmatpush2.msra.mxu0 %v1060
      %2226 = vmatprep.subr.mxu0 0.0
      %2227 = vmatpush2.msra.mxu0 %v1059
      %2228 = vmatprep.subr.mxu0 0.0
      %2229 = vmatpush2.msra.mxu0 %v1058
      %2230 = vmatprep.subr.mxu0 0.0
      %2231 = vmatpush2.msra.mxu0 %v1057
      %2232 = vmatprep.subr.mxu0 0.0
      %2233 = vmatpush2.msra.mxu0 %v1056
      %2234 = vmatprep.subr.mxu0 0.0
      %2235 = vmatpush2.msra.mxu0 %v1055
      %2236 = vmatprep.mubr.f32.mxu0 %v1275
      %2237 = vmatmul.mubr.f32.gmra.mxu0 %v1271
      %v2238 = vpop.f32.mrf.mxu0
      %v2239 = vadd.f32 %v2169, %v2238
      %v2240 = vpop.f32.mrf.mxu0
      %2241 = vdwg.mxu0
      %2242 = vmatprep.subr.mxu0 0.0
      %2243 = vmatpush1.msra.mxu0 %v1086
      %2244 = vmatprep.subr.mxu0 0.0
      %2245 = vmatpush1.msra.mxu0 %v1085
      %2246 = vmatprep.subr.mxu0 0.0
      %2247 = vmatpush1.msra.mxu0 %v1084
      %2248 = vmatprep.subr.mxu0 0.0
      %2249 = vmatpush1.msra.mxu0 %v1083
      %2250 = vmatprep.subr.mxu0 0.0
      %2251 = vmatpush1.msra.mxu0 %v1082
      %2252 = vmatprep.subr.mxu0 0.0
      %2253 = vmatpush1.msra.mxu0 %v1081
      %2254 = vmatprep.subr.mxu0 0.0
      %2255 = vmatpush1.msra.mxu0 %v1080
      %2256 = vmatprep.subr.mxu0 0.0
      %2257 = vmatpush1.msra.mxu0 %v1079
      %2258 = vmatprep.subr.mxu0 0.0
      %2259 = vmatpush1.msra.mxu0 %v1078
      %2260 = vmatprep.subr.mxu0 0.0
      %2261 = vmatpush1.msra.mxu0 %v1077
      %2262 = vmatprep.subr.mxu0 0.0
      %2263 = vmatpush1.msra.mxu0 %v1076
      %2264 = vmatprep.subr.mxu0 0.0
      %2265 = vmatpush1.msra.mxu0 %v1075
      %2266 = vmatprep.subr.mxu0 0.0
      %2267 = vmatpush1.msra.mxu0 %v1074
      %2268 = vmatprep.subr.mxu0 0.0
      %2269 = vmatpush1.msra.mxu0 %v1073
      %2270 = vmatprep.subr.mxu0 0.0
      %2271 = vmatpush1.msra.mxu0 %v1072
      %2272 = vmatprep.subr.mxu0 0.0
      %2273 = vmatpush1.msra.mxu0 %v1071
      %2274 = vmatprep.subr.mxu0 0.0
      %2275 = vmatpush2.msra.mxu0 %v1102
      %2276 = vmatprep.subr.mxu0 0.0
      %2277 = vmatpush2.msra.mxu0 %v1101
      %2278 = vmatprep.subr.mxu0 0.0
      %2279 = vmatpush2.msra.mxu0 %v1100
      %2280 = vmatprep.subr.mxu0 0.0
      %2281 = vmatpush2.msra.mxu0 %v1099
      %2282 = vmatprep.subr.mxu0 0.0
      %2283 = vmatpush2.msra.mxu0 %v1098
      %2284 = vmatprep.subr.mxu0 0.0
      %2285 = vmatpush2.msra.mxu0 %v1097
      %2286 = vmatprep.subr.mxu0 0.0
      %2287 = vmatpush2.msra.mxu0 %v1096
      %2288 = vmatprep.subr.mxu0 0.0
      %2289 = vmatpush2.msra.mxu0 %v1095
      %2290 = vmatprep.subr.mxu0 0.0
      %2291 = vmatpush2.msra.mxu0 %v1094
      %2292 = vmatprep.subr.mxu0 0.0
      %2293 = vmatpush2.msra.mxu0 %v1093
      %2294 = vmatprep.subr.mxu0 0.0
      %2295 = vmatpush2.msra.mxu0 %v1092
      %2296 = vmatprep.subr.mxu0 0.0
      %2297 = vmatpush2.msra.mxu0 %v1091
      %2298 = vmatprep.subr.mxu0 0.0
      %2299 = vmatpush2.msra.mxu0 %v1090
      %2300 = vmatprep.subr.mxu0 0.0
      %2301 = vmatpush2.msra.mxu0 %v1089
      %2302 = vmatprep.subr.mxu0 0.0
      %2303 = vmatpush2.msra.mxu0 %v1088
      %2304 = vmatprep.subr.mxu0 0.0
      %2305 = vmatpush2.msra.mxu0 %v1087
      %2306 = vmatprep.mubr.f32.mxu0 %v1283
      %2307 = vmatmul.mubr.f32.gmra.mxu0 %v1279
      %v2308 = vpop.f32.mrf.mxu0
      %v2309 = vadd.f32 %v2239, %v2308
      %v2310 = vpop.f32.mrf.mxu0
      %2311 = vdwg.mxu0
      %2312 = vmatprep.subr.mxu0 0.0
      %2313 = vmatpush1.msra.mxu0 %v1118
      %2314 = vmatprep.subr.mxu0 0.0
      %2315 = vmatpush1.msra.mxu0 %v1117
      %2316 = vmatprep.subr.mxu0 0.0
      %2317 = vmatpush1.msra.mxu0 %v1116
      %2318 = vmatprep.subr.mxu0 0.0
      %2319 = vmatpush1.msra.mxu0 %v1115
      %2320 = vmatprep.subr.mxu0 0.0
      %2321 = vmatpush1.msra.mxu0 %v1114
      %2322 = vmatprep.subr.mxu0 0.0
      %2323 = vmatpush1.msra.mxu0 %v1113
      %2324 = vmatprep.subr.mxu0 0.0
      %2325 = vmatpush1.msra.mxu0 %v1112
      %2326 = vmatprep.subr.mxu0 0.0
      %2327 = vmatpush1.msra.mxu0 %v1111
      %2328 = vmatprep.subr.mxu0 0.0
      %2329 = vmatpush1.msra.mxu0 %v1110
      %2330 = vmatprep.subr.mxu0 0.0
      %2331 = vmatpush1.msra.mxu0 %v1109
      %2332 = vmatprep.subr.mxu0 0.0
      %2333 = vmatpush1.msra.mxu0 %v1108
      %2334 = vmatprep.subr.mxu0 0.0
      %2335 = vmatpush1.msra.mxu0 %v1107
      %2336 = vmatprep.subr.mxu0 0.0
      %2337 = vmatpush1.msra.mxu0 %v1106
      %2338 = vmatprep.subr.mxu0 0.0
      %2339 = vmatpush1.msra.mxu0 %v1105
      %2340 = vmatprep.subr.mxu0 0.0
      %2341 = vmatpush1.msra.mxu0 %v1104
      %2342 = vmatprep.subr.mxu0 0.0
      %2343 = vmatpush1.msra.mxu0 %v1103
      %2344 = vmatprep.subr.mxu0 0.0
      %2345 = vmatpush2.msra.mxu0 %v1134
      %2346 = vmatprep.subr.mxu0 0.0
      %2347 = vmatpush2.msra.mxu0 %v1133
      %2348 = vmatprep.subr.mxu0 0.0
      %2349 = vmatpush2.msra.mxu0 %v1132
      %2350 = vmatprep.subr.mxu0 0.0
      %2351 = vmatpush2.msra.mxu0 %v1131
      %2352 = vmatprep.subr.mxu0 0.0
      %2353 = vmatpush2.msra.mxu0 %v1130
      %2354 = vmatprep.subr.mxu0 0.0
      %2355 = vmatpush2.msra.mxu0 %v1129
      %2356 = vmatprep.subr.mxu0 0.0
      %2357 = vmatpush2.msra.mxu0 %v1128
      %2358 = vmatprep.subr.mxu0 0.0
      %2359 = vmatpush2.msra.mxu0 %v1127
      %2360 = vmatprep.subr.mxu0 0.0
      %2361 = vmatpush2.msra.mxu0 %v1126
      %2362 = vmatprep.subr.mxu0 0.0
      %2363 = vmatpush2.msra.mxu0 %v1125
      %2364 = vmatprep.subr.mxu0 0.0
      %2365 = vmatpush2.msra.mxu0 %v1124
      %2366 = vmatprep.subr.mxu0 0.0
      %2367 = vmatpush2.msra.mxu0 %v1123
      %2368 = vmatprep.subr.mxu0 0.0
      %2369 = vmatpush2.msra.mxu0 %v1122
      %2370 = vmatprep.subr.mxu0 0.0
      %2371 = vmatpush2.msra.mxu0 %v1121
      %2372 = vmatprep.subr.mxu0 0.0
      %2373 = vmatpush2.msra.mxu0 %v1120
      %2374 = vmatprep.subr.mxu0 0.0
      %2375 = vmatpush2.msra.mxu0 %v1119
      %2376 = vmatprep.mubr.f32.mxu0 %v1291
      %2377 = vmatmul.mubr.f32.gmra.mxu0 %v1287
      %v2378 = vpop.f32.mrf.mxu0
      %v2379 = vadd.f32 %v2309, %v2378
      %v2380 = vpop.f32.mrf.mxu0
      %2381 = vdwg.mxu0
      %2382 = vmatprep.subr.mxu0 0.0
      %2383 = vmatpush1.msra.mxu0 %v1150
      %2384 = vmatprep.subr.mxu0 0.0
      %2385 = vmatpush1.msra.mxu0 %v1149
      %2386 = vmatprep.subr.mxu0 0.0
      %2387 = vmatpush1.msra.mxu0 %v1148
      %2388 = vmatprep.subr.mxu0 0.0
      %2389 = vmatpush1.msra.mxu0 %v1147
      %2390 = vmatprep.subr.mxu0 0.0
      %2391 = vmatpush1.msra.mxu0 %v1146
      %2392 = vmatprep.subr.mxu0 0.0
      %2393 = vmatpush1.msra.mxu0 %v1145
      %2394 = vmatprep.subr.mxu0 0.0
      %2395 = vmatpush1.msra.mxu0 %v1144
      %2396 = vmatprep.subr.mxu0 0.0
      %2397 = vmatpush1.msra.mxu0 %v1143
      %2398 = vmatprep.subr.mxu0 0.0
      %2399 = vmatpush1.msra.mxu0 %v1142
      %2400 = vmatprep.subr.mxu0 0.0
      %2401 = vmatpush1.msra.mxu0 %v1141
      %2402 = vmatprep.subr.mxu0 0.0
      %2403 = vmatpush1.msra.mxu0 %v1140
      %2404 = vmatprep.subr.mxu0 0.0
      %2405 = vmatpush1.msra.mxu0 %v1139
      %2406 = vmatprep.subr.mxu0 0.0
      %2407 = vmatpush1.msra.mxu0 %v1138
      %2408 = vmatprep.subr.mxu0 0.0
      %2409 = vmatpush1.msra.mxu0 %v1137
      %2410 = vmatprep.subr.mxu0 0.0
      %2411 = vmatpush1.msra.mxu0 %v1136
      %2412 = vmatprep.subr.mxu0 0.0
      %2413 = vmatpush1.msra.mxu0 %v1135
      %2414 = vmatprep.subr.mxu0 0.0
      %2415 = vmatpush2.msra.mxu0 %v1166
      %2416 = vmatprep.subr.mxu0 0.0
      %2417 = vmatpush2.msra.mxu0 %v1165
      %2418 = vmatprep.subr.mxu0 0.0
      %2419 = vmatpush2.msra.mxu0 %v1164
      %2420 = vmatprep.subr.mxu0 0.0
      %2421 = vmatpush2.msra.mxu0 %v1163
      %2422 = vmatprep.subr.mxu0 0.0
      %2423 = vmatpush2.msra.mxu0 %v1162
      %2424 = vmatprep.subr.mxu0 0.0
      %2425 = vmatpush2.msra.mxu0 %v1161
      %2426 = vmatprep.subr.mxu0 0.0
      %2427 = vmatpush2.msra.mxu0 %v1160
      %2428 = vmatprep.subr.mxu0 0.0
      %2429 = vmatpush2.msra.mxu0 %v1159
      %2430 = vmatprep.subr.mxu0 0.0
      %2431 = vmatpush2.msra.mxu0 %v1158
      %2432 = vmatprep.subr.mxu0 0.0
      %2433 = vmatpush2.msra.mxu0 %v1157
      %2434 = vmatprep.subr.mxu0 0.0
      %2435 = vmatpush2.msra.mxu0 %v1156
      %2436 = vmatprep.subr.mxu0 0.0
      %2437 = vmatpush2.msra.mxu0 %v1155
      %2438 = vmatprep.subr.mxu0 0.0
      %2439 = vmatpush2.msra.mxu0 %v1154
      %2440 = vmatprep.subr.mxu0 0.0
      %2441 = vmatpush2.msra.mxu0 %v1153
      %2442 = vmatprep.subr.mxu0 0.0
      %2443 = vmatpush2.msra.mxu0 %v1152
      %2444 = vmatprep.subr.mxu0 0.0
      %2445 = vmatpush2.msra.mxu0 %v1151
      %2446 = vmatprep.mubr.f32.mxu0 %v1299
      %2447 = vmatmul.mubr.f32.gmra.mxu0 %v1295
      %v2448 = vpop.f32.mrf.mxu0
      %v2449 = vadd.f32 %v2379, %v2448
      %v2450 = vpop.f32.mrf.mxu0
      %2451 = vdwg.mxu0
      %v2452 = vadd.f32 %v1167, %v2449
      %vm2453 = vcmask 262144
      %2454 = vst.msk [vmem:[#allocation2] sm:$0x1] %vm2453, %v2452
      %v2455 = vld [vmem:[#allocation3] sm:$0x1]
      %vm2456 = vcmask 1040384
      %v2457 = vsel %vm2456, %v1175, -inf
      %v2458 = vsel %vm2456, %v1179, -inf
      %v2459 = vsel %vm2456, %v1183, -inf
      %v2460 = vsel %vm2456, %v1187, -inf
      %v2461 = vsel %vm2456, %v1191, -inf
      %v2462 = vmax.f32 %v2457, %v2461
      %v2463 = vsel %vm2456, %v1195, -inf
      %v2464 = vmax.f32 %v2458, %v2463
      %v2465 = vsel %vm2456, %v1199, -inf
      %v2466 = vmax.f32 %v2459, %v2465
      %v2467 = vsel %vm2456, %v1203, -inf
      %v2468 = vmax.f32 %v2460, %v2467
      %v2469 = vsel %vm2456, %v1207, -inf
      %v2470 = vmax.f32 %v2462, %v2469
      %v2471 = vsel %vm2456, %v1211, -inf
      %v2472 = vmax.f32 %v2464, %v2471
      %v2473 = vsel %vm2456, %v1215, -inf
      %v2474 = vmax.f32 %v2466, %v2473
      %v2475 = vsel %vm2456, %v1219, -inf
      %v2476 = vmax.f32 %v2468, %v2475
      %v2477 = vsel %vm2456, %v1223, -inf
      %v2478 = vmax.f32 %v2470, %v2477
      %v2479 = vsel %vm2456, %v1227, -inf
      %v2480 = vmax.f32 %v2472, %v2479
      %v2481 = vsel %vm2456, %v1231, -inf
      %v2482 = vmax.f32 %v2474, %v2481
      %v2483 = vsel %vm2456, %v1235, -inf
      %v2484 = vmax.f32 %v2476, %v2483
      %v2485 = vsel %vm2456, %v1239, -inf
      %v2486 = vmax.f32 %v2478, %v2485
      %v2487 = vsel %vm2456, %v1243, -inf
      %v2488 = vmax.f32 %v2480, %v2487
      %v2489 = vsel %vm2456, %v1247, -inf
      %v2490 = vmax.f32 %v2482, %v2489
      %v2491 = vsel %vm2456, %v1251, -inf
      %v2492 = vmax.f32 %v2484, %v2491
      %v2493 = vsel %vm2456, %v1255, -inf
      %v2494 = vmax.f32 %v2486, %v2493
      %v2495 = vsel %vm2456, %v1259, -inf
      %v2496 = vmax.f32 %v2488, %v2495
      %v2497 = vsel %vm2456, %v1263, -inf
      %v2498 = vmax.f32 %v2490, %v2497
      %v2499 = vsel %vm2456, %v1267, -inf
      %v2500 = vmax.f32 %v2492, %v2499
      %v2501 = vsel %vm2456, %v1271, -inf
      %v2502 = vmax.f32 %v2494, %v2501
      %v2503 = vsel %vm2456, %v1275, -inf
      %v2504 = vmax.f32 %v2496, %v2503
      %v2505 = vsel %vm2456, %v1279, -inf
      %v2506 = vmax.f32 %v2498, %v2505
      %v2507 = vsel %vm2456, %v1283, -inf
      %v2508 = vmax.f32 %v2500, %v2507
      %v2509 = vsel %vm2456, %v1287, -inf
      %v2510 = vmax.f32 %v2502, %v2509
      %v2511 = vsel %vm2456, %v1291, -inf
      %v2512 = vmax.f32 %v2504, %v2511
      %v2513 = vsel %vm2456, %v1295, -inf
      %v2514 = vmax.f32 %v2506, %v2513
      %v2515 = vsel %vm2456, %v1299, -inf
      %v2516 = vmax.f32 %v2508, %v2515
      %v2517 = vmax.f32 %v2510, %v2512
      %v2518 = vmax.f32 %v2514, %v2516
      %v2519 = vmax.f32 %v2517, %v2518
      %2520 = vmax.xlane.f32.xlu0 %v2519
      %v2521 = vpop.xlane.xlu0 %2520
      %v2522 = vmax.f32 %v2455, %v2521
      %vm2523 = vcmask 0
      %2524 = vst.msk [vmem:[#allocation3] sm:$0x1] %vm2523, %v2522
      // Predicated region
      $region93: #{multi_object_3d_bbox_forward.1} parent=87 // pred_check
        %p2525 = pneg %p643
      $region94: #{multi_object_3d_bbox_forward.1} parent=87 // pred_check_branch
        %2527 = sbr.rel (%p2525) target = $region96
      $region95: #{multi_object_3d_bbox_forward.1} parent=87 // pred_region
        %v2528 = vld [vmem:[%s618] sm:$0xf]
        %v2529 = vld [vmem:[%s614] sm:$0xf]
        %2531 = vset.pattern.permute.xlu0 0
        %2532 = vperm.xlu0 %2531, %v2528
        %v2533 = vpop.permute.xlu0 %2532
        %v2535 = vmul.f32 %v2529, %v2533
        %vm2536 = vcmask 19456
        %v2537 = vsel %vm2536, %v2535, 0.0
        %v2538 = vrot.slane %v2537, 4
        %v2539 = vadd.f32 %v2537, %v2538
        %v2540 = vrot.slane %v2539, 2
        %v2541 = vadd.f32 %v2539, %v2540
        %v2542 = vrot.slane %v2541, 1
        %v2543 = vadd.f32 %v2541, %v2542
        %vm2544 = vcmask 3072
        %v2545 = vsel %vm2544, %v2528, 0.0
        %v2546 = vrot.slane %v2545, 4
        %v2547 = vadd.f32 %v2545, %v2546
        %v2548 = vrot.slane %v2547, 2
        %v2549 = vadd.f32 %v2547, %v2548
        %v2550 = vrot.slane %v2549, 1
        %v2551 = vadd.f32 %v2549, %v2550
        %v2552 = vpack.c.bf16 %v2543, %v2543
        %v2553 = vld [vmem:[%s4] sm:$0xff]
        %v2554 = vld [vmem:[%s5] sm:$0xf]
        %2556 = vset.pattern.permute.xlu0 0
        %2557 = vperm.xlu0 %2556, %v2551
        %v2558 = vpop.permute.xlu0 %2557
        %v2560 = vmul.f32 %v2558, %v2554
        %v2562 = vcombine.high %v2553, %v2553
        %v2564 = vunpack.c.l.s4 1983009808
        %v2565 = vunpack.c.0.s8 %v2564
        %v2566 = vlaneseq
        %v2567 = vshrl.u32 %v2566, 7
        %v2568 = vsub.s32 %v2565, %v2567
        %v2569 = vrot.slane %v2553, %v2568
        %v2571 = vunpack.c.l.s4 1983009808
        %v2572 = vunpack.c.0.s8 %v2571
        %v2573 = vlaneseq
        %v2574 = vshrl.u32 %v2573, 7
        %v2575 = vsub.s32 %v2572, %v2574
        %v2576 = vrot.slane %v2562, %v2575
        %v2577 = vcombine.high %v2569, %v2569
        %v2578 = vcombine.high %v2576, %v2576
        %v2580 = vlaneseq
        %v2581 = vshrl.u32 %v2580, 7
        %v2582 = vsub.s32 0, %v2581
        %v2583 = vrot.slane %v2560, %v2582
        %v2584 = vlaneseq
        %v2585 = vshrl.u32 %v2584, 7
        %v2586 = vsub.s32 1, %v2585
        %v2587 = vrot.slane %v2560, %v2586
        %v2588 = vlaneseq
        %v2589 = vshrl.u32 %v2588, 7
        %v2590 = vsub.s32 2, %v2589
        %v2591 = vrot.slane %v2560, %v2590
        %v2592 = vlaneseq
        %v2593 = vshrl.u32 %v2592, 7
        %v2594 = vsub.s32 3, %v2593
        %v2595 = vrot.slane %v2560, %v2594
        %vm2600 = vcmask 23552
        %v2602 = vsel %vm2600, %v2552, 0
        %vm2604 = vcmask 1041408
        %v2605 = vsel %vm2456, 4294967295, 65535
        %v2606 = vsel %vm2604, %v2605, 0
        %v2608 = vand.u32 %v2569, %v2606
        %v2611 = vand.u32 %v2577, %v2606
        %v2614 = vand.u32 %v2576, %v2606
        %v2617 = vand.u32 %v2578, %v2606
        %2619 = vmatprep.subr.bf16.mxu0 0
        %2620 = vmatpush1.bf16.msra.mxu0 0
        %2621 = vmatprep.subr.bf16.mxu0 0
        %2622 = vmatpush1.bf16.msra.mxu0 0
        %2623 = vmatprep.subr.bf16.mxu0 0
        %2624 = vmatpush1.bf16.msra.mxu0 0
        %2625 = vmatprep.subr.bf16.mxu0 0
        %2626 = vmatpush1.bf16.msra.mxu0 0
        %2627 = vmatprep.subr.bf16.mxu0 0
        %2628 = vmatpush1.bf16.msra.mxu0 0
        %2629 = vmatprep.subr.bf16.mxu0 0
        %2630 = vmatpush1.bf16.msra.mxu0 0
        %2631 = vmatprep.subr.bf16.mxu0 0
        %2632 = vmatpush1.bf16.msra.mxu0 0
        %2633 = vmatprep.subr.bf16.mxu0 %v2611
        %2634 = vmatpush1.bf16.msra.mxu0 %v2608
        %2635 = vmatprep.subr.bf16.mxu0 0
        %2636 = vmatpush2.bf16.msra.mxu0 0
        %2637 = vmatprep.subr.bf16.mxu0 0
        %2638 = vmatpush2.bf16.msra.mxu0 0
        %2639 = vmatprep.subr.bf16.mxu0 0
        %2640 = vmatpush2.bf16.msra.mxu0 0
        %2641 = vmatprep.subr.bf16.mxu0 0
        %2642 = vmatpush2.bf16.msra.mxu0 0
        %2643 = vmatprep.subr.bf16.mxu0 0
        %2644 = vmatpush2.bf16.msra.mxu0 0
        %2645 = vmatprep.subr.bf16.mxu0 0
        %2646 = vmatpush2.bf16.msra.mxu0 0
        %2647 = vmatprep.subr.bf16.mxu0 0
        %2648 = vmatpush2.bf16.msra.mxu0 0
        %2649 = vmatprep.subr.bf16.mxu0 0
        %2650 = vmatpush2.bf16.msra.mxu0 0
        %2651 = vmatprep.mubr.bf16.mxu0 0
        %2652 = vmatmul.mubr.bf16.gmra.mxu0 %v2602
        %v2653 = vpop.f32.mrf.mxu0
        %v2654 = vadd.f32 %v2583, %v2653
        %v2655 = vpop.f32.mrf.mxu0
        %v2656 = vadd.f32 %v2587, %v2655
        %v2657 = vpop.f32.mrf.mxu0
        %v2658 = vpop.f32.mrf.mxu0
        %2659 = vdwg.mxu0
        %2660 = vmatprep.subr.bf16.mxu0 0
        %2661 = vmatpush1.bf16.msra.mxu0 0
        %2662 = vmatprep.subr.bf16.mxu0 0
        %2663 = vmatpush1.bf16.msra.mxu0 0
        %2664 = vmatprep.subr.bf16.mxu0 0
        %2665 = vmatpush1.bf16.msra.mxu0 0
        %2666 = vmatprep.subr.bf16.mxu0 0
        %2667 = vmatpush1.bf16.msra.mxu0 0
        %2668 = vmatprep.subr.bf16.mxu0 0
        %2669 = vmatpush1.bf16.msra.mxu0 0
        %2670 = vmatprep.subr.bf16.mxu0 0
        %2671 = vmatpush1.bf16.msra.mxu0 0
        %2672 = vmatprep.subr.bf16.mxu0 0
        %2673 = vmatpush1.bf16.msra.mxu0 0
        %2674 = vmatprep.subr.bf16.mxu0 %v2617
        %2675 = vmatpush1.bf16.msra.mxu0 %v2614
        %2676 = vmatprep.subr.bf16.mxu0 0
        %2677 = vmatpush2.bf16.msra.mxu0 0
        %2678 = vmatprep.subr.bf16.mxu0 0
        %2679 = vmatpush2.bf16.msra.mxu0 0
        %2680 = vmatprep.subr.bf16.mxu0 0
        %2681 = vmatpush2.bf16.msra.mxu0 0
        %2682 = vmatprep.subr.bf16.mxu0 0
        %2683 = vmatpush2.bf16.msra.mxu0 0
        %2684 = vmatprep.subr.bf16.mxu0 0
        %2685 = vmatpush2.bf16.msra.mxu0 0
        %2686 = vmatprep.subr.bf16.mxu0 0
        %2687 = vmatpush2.bf16.msra.mxu0 0
        %2688 = vmatprep.subr.bf16.mxu0 0
        %2689 = vmatpush2.bf16.msra.mxu0 0
        %2690 = vmatprep.subr.bf16.mxu0 0
        %2691 = vmatpush2.bf16.msra.mxu0 0
        %2692 = vmatprep.mubr.bf16.mxu0 0
        %2693 = vmatmul.mubr.bf16.gmra.mxu0 %v2602
        %v2694 = vpop.f32.mrf.mxu0
        %v2695 = vadd.f32 %v2591, %v2694
        %v2696 = vpop.f32.mrf.mxu0
        %v2697 = vadd.f32 %v2595, %v2696
        %v2698 = vpop.f32.mrf.mxu0
        %v2699 = vpop.f32.mrf.mxu0
        %2700 = vdwg.mxu0
        %v2701 = vmul.f32 %v2654, 0.25
        %v2702 = vmul.f32 %v2656, 0.25
        %v2703 = vmul.f32 %v2695, 0.25
        %v2704 = vmul.f32 %v2697, 0.25
        %v2705 = vld [vmem:[%s6] sm:$0xf]
        %v2707 = vlaneseq
        %v2708 = vshrl.u32 %v2707, 7
        %v2709 = vsub.s32 0, %v2708
        %v2710 = vrot.slane %v2705, %v2709
        %v2711 = vlaneseq
        %v2712 = vshrl.u32 %v2711, 7
        %v2713 = vsub.s32 1, %v2712
        %v2714 = vrot.slane %v2705, %v2713
        %v2715 = vlaneseq
        %v2716 = vshrl.u32 %v2715, 7
        %v2717 = vsub.s32 2, %v2716
        %v2718 = vrot.slane %v2705, %v2717
        %v2719 = vlaneseq
        %v2720 = vshrl.u32 %v2719, 7
        %v2721 = vsub.s32 3, %v2720
        %v2722 = vrot.slane %v2705, %v2721
        %v2727 = vadd.f32 %v2701, %v2710
        %v2728 = vadd.f32 %v2702, %v2714
        %v2729 = vadd.f32 %v2703, %v2718
        %v2730 = vadd.f32 %v2704, %v2722
        %v2731 = vld [vmem:[#allocation3] sm:$0x1]
        %v2732 = vadd.f32 %v2731, 1e-08
        %v2733 = vrcp.pop %v2732
        %v2734 = vld [vmem:[#allocation2] sm:$0x1]
        %v2735 = vmul.f32 %v2733, 0.00024414063
        %2737 = vset.pattern.permute.xlu0 0
        %2738 = vperm.xlu0 %2737, %v2735
        %v2739 = vpop.permute.xlu0 %2738
        %v2741 = vlaneseq
        %v2742 = vshrl.u32 %v2741, 7
        %v2743 = vsub.s32 0, %v2742
        %v2744 = vrot.slane %v2739, %v2743
        %v2745 = vmul.f32 %v2734, %v2744
        %v2746 = vpack.c.bf16 %v2745, %v2745
        %v2747 = vld [vmem:[%s7] sm:$0xff]
        %v2748 = vld [vmem:[%s7 + $0x8] sm:$0xff]
        %v2749 = vld [vmem:[%s7 + $0x10] sm:$0xff]
        %v2750 = vld [vmem:[%s7 + $0x18] sm:$0xff]
        %v2751 = vld [vmem:[%s7 + $0x20] sm:$0xff]
        %v2752 = vld [vmem:[%s7 + $0x28] sm:$0xff]
        %v2753 = vld [vmem:[%s7 + $0x30] sm:$0xff]
        %v2754 = vld [vmem:[%s7 + $0x38] sm:$0xff]
        %v2755 = vld [vmem:[%s7 + $0x40] sm:$0x11]
        %v2756 = vld [vmem:[%s7 + $0x48] sm:$0x11]
        %v2757 = vld [vmem:[%s8] sm:$0xf]
        %v2768 = vunpack.c.l.b16 %v2747
        %v2769 = vunpack.c.h.b16 %v2747
        %v2770 = vunpack.c.l.b16 %v2748
        %v2771 = vunpack.c.h.b16 %v2748
        %v2772 = vunpack.c.l.b16 %v2749
        %v2773 = vunpack.c.h.b16 %v2749
        %v2774 = vunpack.c.l.b16 %v2750
        %v2775 = vunpack.c.h.b16 %v2750
        %v2776 = vunpack.c.l.b16 %v2751
        %v2777 = vunpack.c.h.b16 %v2751
        %v2778 = vunpack.c.l.b16 %v2752
        %v2779 = vunpack.c.h.b16 %v2752
        %v2780 = vunpack.c.l.b16 %v2753
        %v2781 = vunpack.c.h.b16 %v2753
        %v2782 = vunpack.c.l.b16 %v2754
        %v2783 = vunpack.c.h.b16 %v2754
        %v2784 = vunpack.c.l.b16 %v2755
        %v2785 = vunpack.c.h.b16 %v2755
        %v2786 = vunpack.c.l.b16 %v2756
        %v2787 = vunpack.c.h.b16 %v2756
        %v2788 = vpack.c.b16 %v2772, %v2768
        %v2789 = vpack.c.b16 %v2773, %v2769
        %v2790 = vpack.c.b16 %v2774, %v2770
        %v2791 = vpack.c.b16 %v2775, %v2771
        %v2792 = vpack.c.b16 %v2780, %v2776
        %v2793 = vpack.c.b16 %v2781, %v2777
        %v2794 = vpack.c.b16 %v2782, %v2778
        %v2795 = vpack.c.b16 %v2783, %v2779
        %v2796 = vpack.c.b16 %v2784, %v2784
        %v2797 = vpack.c.b16 %v2785, %v2785
        %v2798 = vpack.c.b16 %v2786, %v2786
        %v2799 = vpack.c.b16 %v2787, %v2787
        %v2809 = vlaneseq
        %v2810 = vshrl.u32 %v2809, 7
        %v2811 = vsub.s32 0, %v2810
        %v2812 = vrot.slane %v2757, %v2811
        %v2813 = vlaneseq
        %v2814 = vshrl.u32 %v2813, 7
        %v2815 = vsub.s32 1, %v2814
        %v2816 = vrot.slane %v2757, %v2815
        %v2817 = vlaneseq
        %v2818 = vshrl.u32 %v2817, 7
        %v2819 = vsub.s32 2, %v2818
        %v2820 = vrot.slane %v2757, %v2819
        %v2821 = vlaneseq
        %v2822 = vshrl.u32 %v2821, 7
        %v2823 = vsub.s32 3, %v2822
        %v2824 = vrot.slane %v2757, %v2823
        %vm2829 = vcmask 269312
        %v2831 = vsel %vm2829, %v2746, 0
        %v2833 = vsel 0, 4294967295, 65535
        %v2834 = vsel %vm2456, %v2833, 0
        %v2836 = vand.u32 %v2796, %v2834
        %v2839 = vand.u32 %v2797, %v2834
        %v2842 = vand.u32 %v2798, %v2834
        %v2845 = vand.u32 %v2799, %v2834
        %2847 = vmatprep.subr.bf16.mxu0 0
        %2848 = vmatpush1.bf16.msra.mxu0 0
        %2849 = vmatprep.subr.bf16.mxu0 0
        %2850 = vmatpush1.bf16.msra.mxu0 0
        %2851 = vmatprep.subr.bf16.mxu0 0
        %2852 = vmatpush1.bf16.msra.mxu0 0
        %2853 = vmatprep.subr.bf16.mxu0 0
        %2854 = vmatpush1.bf16.msra.mxu0 0
        %2855 = vmatprep.subr.bf16.mxu0 0
        %2856 = vmatpush1.bf16.msra.mxu0 0
        %2857 = vmatprep.subr.bf16.mxu0 %v2839
        %2858 = vmatpush1.bf16.msra.mxu0 %v2836
        %2859 = vmatprep.subr.bf16.mxu0 %v2793
        %2860 = vmatpush1.bf16.msra.mxu0 %v2792
        %2861 = vmatprep.subr.bf16.mxu0 %v2789
        %2862 = vmatpush1.bf16.msra.mxu0 %v2788
        %2863 = vmatprep.subr.bf16.mxu0 0
        %2864 = vmatpush2.bf16.msra.mxu0 0
        %2865 = vmatprep.subr.bf16.mxu0 0
        %2866 = vmatpush2.bf16.msra.mxu0 0
        %2867 = vmatprep.subr.bf16.mxu0 0
        %2868 = vmatpush2.bf16.msra.mxu0 0
        %2869 = vmatprep.subr.bf16.mxu0 0
        %2870 = vmatpush2.bf16.msra.mxu0 0
        %2871 = vmatprep.subr.bf16.mxu0 0
        %2872 = vmatpush2.bf16.msra.mxu0 0
        %2873 = vmatprep.subr.bf16.mxu0 0
        %2874 = vmatpush2.bf16.msra.mxu0 0
        %2875 = vmatprep.subr.bf16.mxu0 0
        %2876 = vmatpush2.bf16.msra.mxu0 0
        %2877 = vmatprep.subr.bf16.mxu0 0
        %2878 = vmatpush2.bf16.msra.mxu0 0
        %2879 = vmatprep.mubr.bf16.mxu0 0
        %2880 = vmatmul.mubr.bf16.gmra.mxu0 %v2831
        %v2881 = vpop.f32.mrf.mxu0
        %v2882 = vadd.f32 %v2812, %v2881
        %v2883 = vpop.f32.mrf.mxu0
        %v2884 = vadd.f32 %v2816, %v2883
        %v2885 = vpop.f32.mrf.mxu0
        %v2886 = vpop.f32.mrf.mxu0
        %2887 = vdwg.mxu0
        %2888 = vmatprep.subr.bf16.mxu0 0
        %2889 = vmatpush1.bf16.msra.mxu0 0
        %2890 = vmatprep.subr.bf16.mxu0 0
        %2891 = vmatpush1.bf16.msra.mxu0 0
        %2892 = vmatprep.subr.bf16.mxu0 0
        %2893 = vmatpush1.bf16.msra.mxu0 0
        %2894 = vmatprep.subr.bf16.mxu0 0
        %2895 = vmatpush1.bf16.msra.mxu0 0
        %2896 = vmatprep.subr.bf16.mxu0 0
        %2897 = vmatpush1.bf16.msra.mxu0 0
        %2898 = vmatprep.subr.bf16.mxu0 %v2845
        %2899 = vmatpush1.bf16.msra.mxu0 %v2842
        %2900 = vmatprep.subr.bf16.mxu0 %v2795
        %2901 = vmatpush1.bf16.msra.mxu0 %v2794
        %2902 = vmatprep.subr.bf16.mxu0 %v2791
        %2903 = vmatpush1.bf16.msra.mxu0 %v2790
        %2904 = vmatprep.subr.bf16.mxu0 0
        %2905 = vmatpush2.bf16.msra.mxu0 0
        %2906 = vmatprep.subr.bf16.mxu0 0
        %2907 = vmatpush2.bf16.msra.mxu0 0
        %2908 = vmatprep.subr.bf16.mxu0 0
        %2909 = vmatpush2.bf16.msra.mxu0 0
        %2910 = vmatprep.subr.bf16.mxu0 0
        %2911 = vmatpush2.bf16.msra.mxu0 0
        %2912 = vmatprep.subr.bf16.mxu0 0
        %2913 = vmatpush2.bf16.msra.mxu0 0
        %2914 = vmatprep.subr.bf16.mxu0 0
        %2915 = vmatpush2.bf16.msra.mxu0 0
        %2916 = vmatprep.subr.bf16.mxu0 0
        %2917 = vmatpush2.bf16.msra.mxu0 0
        %2918 = vmatprep.subr.bf16.mxu0 0
        %2919 = vmatpush2.bf16.msra.mxu0 0
        %2920 = vmatprep.mubr.bf16.mxu0 0
        %2921 = vmatmul.mubr.bf16.gmra.mxu0 %v2831
        %v2922 = vpop.f32.mrf.mxu0
        %v2923 = vadd.f32 %v2820, %v2922
        %v2924 = vpop.f32.mrf.mxu0
        %v2925 = vadd.f32 %v2824, %v2924
        %v2926 = vpop.f32.mrf.mxu0
        %v2927 = vpop.f32.mrf.mxu0
        %2928 = vdwg.mxu0
        %v2929 = vpack.c.bf16 %v2727, %v2727
        %v2930 = vpack.c.bf16 %v2728, %v2728
        %v2931 = vpack.c.bf16 %v2729, %v2729
        %v2932 = vpack.c.bf16 %v2730, %v2730
        %v2933 = vld [vmem:[%s9] sm:$0xff]
        %v2934 = vld [vmem:[%s9 + $0x8] sm:$0xff]
        %v2935 = vld [vmem:[%s9 + $0x10] sm:$0xff]
        %v2936 = vld [vmem:[%s9 + $0x18] sm:$0xff]
        %v2937 = vld [vmem:[%s9 + $0x20] sm:$0xff]
        %v2938 = vld [vmem:[%s9 + $0x28] sm:$0xff]
        %v2939 = vld [vmem:[%s9 + $0x30] sm:$0xff]
        %v2940 = vld [vmem:[%s9 + $0x38] sm:$0xff]
        %v2941 = vld [vmem:[%s9 + $0x40] sm:$0xff]
        %v2942 = vld [vmem:[%s9 + $0x48] sm:$0xff]
        %v2943 = vld [vmem:[%s9 + $0x50] sm:$0xff]
        %v2944 = vld [vmem:[%s9 + $0x58] sm:$0xff]
        %v2945 = vld [vmem:[%s9 + $0x60] sm:$0xff]
        %v2946 = vld [vmem:[%s9 + $0x68] sm:$0xff]
        %v2947 = vld [vmem:[%s9 + $0x70] sm:$0xff]
        %v2948 = vld [vmem:[%s9 + $0x78] sm:$0xff]
        %v2949 = vld [vmem:[%s9 + $0x80] sm:$0xff]
        %v2950 = vld [vmem:[%s9 + $0x88] sm:$0xff]
        %v2951 = vld [vmem:[%s9 + $0x90] sm:$0xff]
        %v2952 = vld [vmem:[%s9 + $0x98] sm:$0xff]
        %v2953 = vld [vmem:[%s9 + $0xa0] sm:$0xff]
        %v2954 = vld [vmem:[%s9 + $0xa8] sm:$0xff]
        %v2955 = vld [vmem:[%s9 + $0xb0] sm:$0xff]
        %v2956 = vld [vmem:[%s9 + $0xb8] sm:$0xff]
        %v2957 = vld [vmem:[%s9 + $0xc0] sm:$0xff]
        %v2958 = vld [vmem:[%s9 + $0xc8] sm:$0xff]
        %v2959 = vld [vmem:[%s9 + $0xd0] sm:$0xff]
        %v2960 = vld [vmem:[%s9 + $0xd8] sm:$0xff]
        %v2961 = vld [vmem:[%s9 + $0xe0] sm:$0xff]
        %v2962 = vld [vmem:[%s9 + $0xe8] sm:$0xff]
        %v2963 = vld [vmem:[%s9 + $0xf0] sm:$0xff]
        %v2964 = vld [vmem:[%s9 + $0xf8] sm:$0xff]
        %v2965 = vld [vmem:[%s9 + $0x100] sm:$0xff]
        %v2966 = vld [vmem:[%s9 + $0x108] sm:$0xff]
        %v2967 = vld [vmem:[%s9 + $0x110] sm:$0xff]
        %v2968 = vld [vmem:[%s9 + $0x118] sm:$0xff]
        %v2969 = vld [vmem:[%s9 + $0x120] sm:$0xff]
        %v2970 = vld [vmem:[%s9 + $0x128] sm:$0xff]
        %v2971 = vld [vmem:[%s9 + $0x130] sm:$0xff]
        %v2972 = vld [vmem:[%s9 + $0x138] sm:$0xff]
        %v2973 = vld [vmem:[%s9 + $0x140] sm:$0xff]
        %v2974 = vld [vmem:[%s9 + $0x148] sm:$0xff]
        %v2975 = vld [vmem:[%s9 + $0x150] sm:$0xff]
        %v2976 = vld [vmem:[%s9 + $0x158] sm:$0xff]
        %v2977 = vld [vmem:[%s9 + $0x160] sm:$0xff]
        %v2978 = vld [vmem:[%s9 + $0x168] sm:$0xff]
        %v2979 = vld [vmem:[%s9 + $0x170] sm:$0xff]
        %v2980 = vld [vmem:[%s9 + $0x178] sm:$0xff]
        %v2981 = vld [vmem:[%s9 + $0x180] sm:$0xff]
        %v2982 = vld [vmem:[%s9 + $0x188] sm:$0xff]
        %v2983 = vld [vmem:[%s9 + $0x190] sm:$0xff]
        %v2984 = vld [vmem:[%s9 + $0x198] sm:$0xff]
        %v2985 = vld [vmem:[%s9 + $0x1a0] sm:$0xff]
        %v2986 = vld [vmem:[%s9 + $0x1a8] sm:$0xff]
        %v2987 = vld [vmem:[%s9 + $0x1b0] sm:$0xff]
        %v2988 = vld [vmem:[%s9 + $0x1b8] sm:$0xff]
        %v2989 = vld [vmem:[%s9 + $0x1c0] sm:$0xff]
        %v2990 = vld [vmem:[%s9 + $0x1c8] sm:$0xff]
        %v2991 = vld [vmem:[%s9 + $0x1d0] sm:$0xff]
        %v2992 = vld [vmem:[%s9 + $0x1d8] sm:$0xff]
        %v2993 = vld [vmem:[%s9 + $0x1e0] sm:$0xff]
        %v2994 = vld [vmem:[%s9 + $0x1e8] sm:$0xff]
        %v2995 = vld [vmem:[%s9 + $0x1f0] sm:$0xff]
        %v2996 = vld [vmem:[%s9 + $0x1f8] sm:$0xff]
        %v2997 = vld [vmem:[%s9 + $0x200] sm:$0xff]
        %v2998 = vld [vmem:[%s9 + $0x208] sm:$0xff]
        %v2999 = vld [vmem:[%s9 + $0x210] sm:$0xff]
        %v3000 = vld [vmem:[%s9 + $0x218] sm:$0xff]
        %v3001 = vld [vmem:[%s9 + $0x220] sm:$0xff]
        %v3002 = vld [vmem:[%s9 + $0x228] sm:$0xff]
        %v3003 = vld [vmem:[%s9 + $0x230] sm:$0xff]
        %v3004 = vld [vmem:[%s9 + $0x238] sm:$0xff]
        %v3005 = vld [vmem:[%s9 + $0x240] sm:$0xff]
        %v3006 = vld [vmem:[%s9 + $0x248] sm:$0xff]
        %v3007 = vld [vmem:[%s9 + $0x250] sm:$0xff]
        %v3008 = vld [vmem:[%s9 + $0x258] sm:$0xff]
        %v3009 = vld [vmem:[%s9 + $0x260] sm:$0xff]
        %v3010 = vld [vmem:[%s9 + $0x268] sm:$0xff]
        %v3011 = vld [vmem:[%s9 + $0x270] sm:$0xff]
        %v3012 = vld [vmem:[%s9 + $0x278] sm:$0xff]
        %v3013 = vld [vmem:[%s9 + $0x280] sm:$0xff]
        %v3014 = vld [vmem:[%s9 + $0x288] sm:$0xff]
        %v3015 = vld [vmem:[%s9 + $0x290] sm:$0xff]
        %v3016 = vld [vmem:[%s9 + $0x298] sm:$0xff]
        %v3017 = vld [vmem:[%s9 + $0x2a0] sm:$0xff]
        %v3018 = vld [vmem:[%s9 + $0x2a8] sm:$0xff]
        %v3019 = vld [vmem:[%s9 + $0x2b0] sm:$0xff]
        %v3020 = vld [vmem:[%s9 + $0x2b8] sm:$0xff]
        %v3021 = vld [vmem:[%s9 + $0x2c0] sm:$0xff]
        %v3022 = vld [vmem:[%s9 + $0x2c8] sm:$0xff]
        %v3023 = vld [vmem:[%s9 + $0x2d0] sm:$0xff]
        %v3024 = vld [vmem:[%s9 + $0x2d8] sm:$0xff]
        %v3025 = vld [vmem:[%s9 + $0x2e0] sm:$0xff]
        %v3026 = vld [vmem:[%s9 + $0x2e8] sm:$0xff]
        %v3027 = vld [vmem:[%s9 + $0x2f0] sm:$0xff]
        %v3028 = vld [vmem:[%s9 + $0x2f8] sm:$0xff]
        %v3029 = vld [vmem:[%s9 + $0x300] sm:$0xff]
        %v3030 = vld [vmem:[%s9 + $0x308] sm:$0xff]
        %v3031 = vld [vmem:[%s9 + $0x310] sm:$0xff]
        %v3032 = vld [vmem:[%s9 + $0x318] sm:$0xff]
        %v3033 = vld [vmem:[%s9 + $0x320] sm:$0xff]
        %v3034 = vld [vmem:[%s9 + $0x328] sm:$0xff]
        %v3035 = vld [vmem:[%s9 + $0x330] sm:$0xff]
        %v3036 = vld [vmem:[%s9 + $0x338] sm:$0xff]
        %v3037 = vld [vmem:[%s9 + $0x340] sm:$0xff]
        %v3038 = vld [vmem:[%s9 + $0x348] sm:$0xff]
        %v3039 = vld [vmem:[%s9 + $0x350] sm:$0xff]
        %v3040 = vld [vmem:[%s9 + $0x358] sm:$0xff]
        %v3041 = vld [vmem:[%s9 + $0x360] sm:$0xff]
        %v3042 = vld [vmem:[%s9 + $0x368] sm:$0xff]
        %v3043 = vld [vmem:[%s9 + $0x370] sm:$0xff]
        %v3044 = vld [vmem:[%s9 + $0x378] sm:$0xff]
        %v3045 = vld [vmem:[%s9 + $0x380] sm:$0xff]
        %v3046 = vld [vmem:[%s9 + $0x388] sm:$0xff]
        %v3047 = vld [vmem:[%s9 + $0x390] sm:$0xff]
        %v3048 = vld [vmem:[%s9 + $0x398] sm:$0xff]
        %v3049 = vld [vmem:[%s9 + $0x3a0] sm:$0xff]
        %v3050 = vld [vmem:[%s9 + $0x3a8] sm:$0xff]
        %v3051 = vld [vmem:[%s9 + $0x3b0] sm:$0xff]
        %v3052 = vld [vmem:[%s9 + $0x3b8] sm:$0xff]
        %v3053 = vld [vmem:[%s9 + $0x3c0] sm:$0xff]
        %v3054 = vld [vmem:[%s9 + $0x3c8] sm:$0xff]
        %v3055 = vld [vmem:[%s9 + $0x3d0] sm:$0xff]
        %v3056 = vld [vmem:[%s9 + $0x3d8] sm:$0xff]
        %v3057 = vld [vmem:[%s9 + $0x3e0] sm:$0xff]
        %v3058 = vld [vmem:[%s9 + $0x3e8] sm:$0xff]
        %v3059 = vld [vmem:[%s9 + $0x3f0] sm:$0xff]
        %v3060 = vld [vmem:[%s9 + $0x3f8] sm:$0xff]
        %v3061 = vpack.c.bf16 %v2882, %v2882
        %v3062 = vpack.c.bf16 %v2884, %v2884
        %v3063 = vpack.c.bf16 %v2923, %v2923
        %v3064 = vpack.c.bf16 %v2925, %v2925
        %v3065 = vld [vmem:[%s9 + $0x400] sm:$0xff]
        %v3066 = vld [vmem:[%s9 + $0x408] sm:$0xff]
        %v3067 = vld [vmem:[%s9 + $0x410] sm:$0xff]
        %v3068 = vld [vmem:[%s9 + $0x418] sm:$0xff]
        %v3069 = vld [vmem:[%s9 + $0x420] sm:$0xff]
        %v3070 = vld [vmem:[%s9 + $0x428] sm:$0xff]
        %v3071 = vld [vmem:[%s9 + $0x430] sm:$0xff]
        %v3072 = vld [vmem:[%s9 + $0x438] sm:$0xff]
        %v3073 = vld [vmem:[%s9 + $0x440] sm:$0xff]
        %v3074 = vld [vmem:[%s9 + $0x448] sm:$0xff]
        %v3075 = vld [vmem:[%s9 + $0x450] sm:$0xff]
        %v3076 = vld [vmem:[%s9 + $0x458] sm:$0xff]
        %v3077 = vld [vmem:[%s9 + $0x460] sm:$0xff]
        %v3078 = vld [vmem:[%s9 + $0x468] sm:$0xff]
        %v3079 = vld [vmem:[%s9 + $0x470] sm:$0xff]
        %v3080 = vld [vmem:[%s9 + $0x478] sm:$0xff]
        %v3081 = vld [vmem:[%s9 + $0x480] sm:$0xff]
        %v3082 = vld [vmem:[%s9 + $0x488] sm:$0xff]
        %v3083 = vld [vmem:[%s9 + $0x490] sm:$0xff]
        %v3084 = vld [vmem:[%s9 + $0x498] sm:$0xff]
        %v3085 = vld [vmem:[%s9 + $0x4a0] sm:$0xff]
        %v3086 = vld [vmem:[%s9 + $0x4a8] sm:$0xff]
        %v3087 = vld [vmem:[%s9 + $0x4b0] sm:$0xff]
        %v3088 = vld [vmem:[%s9 + $0x4b8] sm:$0xff]
        %v3089 = vld [vmem:[%s9 + $0x4c0] sm:$0xff]
        %v3090 = vld [vmem:[%s9 + $0x4c8] sm:$0xff]
        %v3091 = vld [vmem:[%s9 + $0x4d0] sm:$0xff]
        %v3092 = vld [vmem:[%s9 + $0x4d8] sm:$0xff]
        %v3093 = vld [vmem:[%s9 + $0x4e0] sm:$0xff]
        %v3094 = vld [vmem:[%s9 + $0x4e8] sm:$0xff]
        %v3095 = vld [vmem:[%s9 + $0x4f0] sm:$0xff]
        %v3096 = vld [vmem:[%s9 + $0x4f8] sm:$0xff]
        %v3097 = vld [vmem:[%s9 + $0x500] sm:$0xff]
        %v3098 = vld [vmem:[%s9 + $0x508] sm:$0xff]
        %v3099 = vld [vmem:[%s9 + $0x510] sm:$0xff]
        %v3100 = vld [vmem:[%s9 + $0x518] sm:$0xff]
        %v3101 = vld [vmem:[%s9 + $0x520] sm:$0xff]
        %v3102 = vld [vmem:[%s9 + $0x528] sm:$0xff]
        %v3103 = vld [vmem:[%s9 + $0x530] sm:$0xff]
        %v3104 = vld [vmem:[%s9 + $0x538] sm:$0xff]
        %v3105 = vld [vmem:[%s9 + $0x540] sm:$0xff]
        %v3106 = vld [vmem:[%s9 + $0x548] sm:$0xff]
        %v3107 = vld [vmem:[%s9 + $0x550] sm:$0xff]
        %v3108 = vld [vmem:[%s9 + $0x558] sm:$0xff]
        %v3109 = vld [vmem:[%s9 + $0x560] sm:$0xff]
        %v3110 = vld [vmem:[%s9 + $0x568] sm:$0xff]
        %v3111 = vld [vmem:[%s9 + $0x570] sm:$0xff]
        %v3112 = vld [vmem:[%s9 + $0x578] sm:$0xff]
        %v3113 = vld [vmem:[%s9 + $0x580] sm:$0xff]
        %v3114 = vld [vmem:[%s9 + $0x588] sm:$0xff]
        %v3115 = vld [vmem:[%s9 + $0x590] sm:$0xff]
        %v3116 = vld [vmem:[%s9 + $0x598] sm:$0xff]
        %v3117 = vld [vmem:[%s9 + $0x5a0] sm:$0xff]
        %v3118 = vld [vmem:[%s9 + $0x5a8] sm:$0xff]
        %v3119 = vld [vmem:[%s9 + $0x5b0] sm:$0xff]
        %v3120 = vld [vmem:[%s9 + $0x5b8] sm:$0xff]
        %v3121 = vld [vmem:[%s9 + $0x5c0] sm:$0xff]
        %v3122 = vld [vmem:[%s9 + $0x5c8] sm:$0xff]
        %v3123 = vld [vmem:[%s9 + $0x5d0] sm:$0xff]
        %v3124 = vld [vmem:[%s9 + $0x5d8] sm:$0xff]
        %v3125 = vld [vmem:[%s9 + $0x5e0] sm:$0xff]
        %v3126 = vld [vmem:[%s9 + $0x5e8] sm:$0xff]
        %v3127 = vld [vmem:[%s9 + $0x5f0] sm:$0xff]
        %v3128 = vld [vmem:[%s9 + $0x5f8] sm:$0xff]
        %v3129 = vld [vmem:[%s9 + $0x600] sm:$0xff]
        %v3130 = vld [vmem:[%s9 + $0x608] sm:$0xff]
        %v3131 = vld [vmem:[%s9 + $0x610] sm:$0xff]
        %v3132 = vld [vmem:[%s9 + $0x618] sm:$0xff]
        %v3133 = vld [vmem:[%s9 + $0x620] sm:$0xff]
        %v3134 = vld [vmem:[%s9 + $0x628] sm:$0xff]
        %v3135 = vld [vmem:[%s9 + $0x630] sm:$0xff]
        %v3136 = vld [vmem:[%s9 + $0x638] sm:$0xff]
        %v3137 = vld [vmem:[%s9 + $0x640] sm:$0xff]
        %v3138 = vld [vmem:[%s9 + $0x648] sm:$0xff]
        %v3139 = vld [vmem:[%s9 + $0x650] sm:$0xff]
        %v3140 = vld [vmem:[%s9 + $0x658] sm:$0xff]
        %v3141 = vld [vmem:[%s9 + $0x660] sm:$0xff]
        %v3142 = vld [vmem:[%s9 + $0x668] sm:$0xff]
        %v3143 = vld [vmem:[%s9 + $0x670] sm:$0xff]
        %v3144 = vld [vmem:[%s9 + $0x678] sm:$0xff]
        %v3145 = vld [vmem:[%s9 + $0x680] sm:$0xff]
        %v3146 = vld [vmem:[%s9 + $0x688] sm:$0xff]
        %v3147 = vld [vmem:[%s9 + $0x690] sm:$0xff]
        %v3148 = vld [vmem:[%s9 + $0x698] sm:$0xff]
        %v3149 = vld [vmem:[%s9 + $0x6a0] sm:$0xff]
        %v3150 = vld [vmem:[%s9 + $0x6a8] sm:$0xff]
        %v3151 = vld [vmem:[%s9 + $0x6b0] sm:$0xff]
        %v3152 = vld [vmem:[%s9 + $0x6b8] sm:$0xff]
        %v3153 = vld [vmem:[%s9 + $0x6c0] sm:$0xff]
        %v3154 = vld [vmem:[%s9 + $0x6c8] sm:$0xff]
        %v3155 = vld [vmem:[%s9 + $0x6d0] sm:$0xff]
        %v3156 = vld [vmem:[%s9 + $0x6d8] sm:$0xff]
        %v3157 = vld [vmem:[%s9 + $0x6e0] sm:$0xff]
        %v3158 = vld [vmem:[%s9 + $0x6e8] sm:$0xff]
        %v3159 = vld [vmem:[%s9 + $0x6f0] sm:$0xff]
        %v3160 = vld [vmem:[%s9 + $0x6f8] sm:$0xff]
        %v3161 = vld [vmem:[%s9 + $0x700] sm:$0xff]
        %v3162 = vld [vmem:[%s9 + $0x708] sm:$0xff]
        %v3163 = vld [vmem:[%s9 + $0x710] sm:$0xff]
        %v3164 = vld [vmem:[%s9 + $0x718] sm:$0xff]
        %v3165 = vld [vmem:[%s9 + $0x720] sm:$0xff]
        %v3166 = vld [vmem:[%s9 + $0x728] sm:$0xff]
        %v3167 = vld [vmem:[%s9 + $0x730] sm:$0xff]
        %v3168 = vld [vmem:[%s9 + $0x738] sm:$0xff]
        %v3169 = vld [vmem:[%s9 + $0x740] sm:$0xff]
        %v3170 = vld [vmem:[%s9 + $0x748] sm:$0xff]
        %v3171 = vld [vmem:[%s9 + $0x750] sm:$0xff]
        %v3172 = vld [vmem:[%s9 + $0x758] sm:$0xff]
        %v3173 = vld [vmem:[%s9 + $0x760] sm:$0xff]
        %v3174 = vld [vmem:[%s9 + $0x768] sm:$0xff]
        %v3175 = vld [vmem:[%s9 + $0x770] sm:$0xff]
        %v3176 = vld [vmem:[%s9 + $0x778] sm:$0xff]
        %v3177 = vld [vmem:[%s9 + $0x780] sm:$0xff]
        %v3178 = vld [vmem:[%s9 + $0x788] sm:$0xff]
        %v3179 = vld [vmem:[%s9 + $0x790] sm:$0xff]
        %v3180 = vld [vmem:[%s9 + $0x798] sm:$0xff]
        %v3181 = vld [vmem:[%s9 + $0x7a0] sm:$0xff]
        %v3182 = vld [vmem:[%s9 + $0x7a8] sm:$0xff]
        %v3183 = vld [vmem:[%s9 + $0x7b0] sm:$0xff]
        %v3184 = vld [vmem:[%s9 + $0x7b8] sm:$0xff]
        %v3185 = vld [vmem:[%s9 + $0x7c0] sm:$0xff]
        %v3186 = vld [vmem:[%s9 + $0x7c8] sm:$0xff]
        %v3187 = vld [vmem:[%s9 + $0x7d0] sm:$0xff]
        %v3188 = vld [vmem:[%s9 + $0x7d8] sm:$0xff]
        %v3189 = vld [vmem:[%s9 + $0x7e0] sm:$0xff]
        %v3190 = vld [vmem:[%s9 + $0x7e8] sm:$0xff]
        %v3191 = vld [vmem:[%s9 + $0x7f0] sm:$0xff]
        %v3192 = vld [vmem:[%s9 + $0x7f8] sm:$0xff]
        %v3321 = vunpack.c.l.b16 %v3065
        %v3322 = vunpack.c.h.b16 %v3065
        %v3323 = vunpack.c.l.b16 %v3066
        %v3324 = vunpack.c.h.b16 %v3066
        %v3325 = vunpack.c.l.b16 %v3067
        %v3326 = vunpack.c.h.b16 %v3067
        %v3327 = vunpack.c.l.b16 %v3068
        %v3328 = vunpack.c.h.b16 %v3068
        %v3329 = vunpack.c.l.b16 %v3069
        %v3330 = vunpack.c.h.b16 %v3069
        %v3331 = vunpack.c.l.b16 %v3070
        %v3332 = vunpack.c.h.b16 %v3070
        %v3333 = vunpack.c.l.b16 %v3071
        %v3334 = vunpack.c.h.b16 %v3071
        %v3335 = vunpack.c.l.b16 %v3072
        %v3336 = vunpack.c.h.b16 %v3072
        %v3337 = vunpack.c.l.b16 %v3073
        %v3338 = vunpack.c.h.b16 %v3073
        %v3339 = vunpack.c.l.b16 %v3074
        %v3340 = vunpack.c.h.b16 %v3074
        %v3341 = vunpack.c.l.b16 %v3075
        %v3342 = vunpack.c.h.b16 %v3075
        %v3343 = vunpack.c.l.b16 %v3076
        %v3344 = vunpack.c.h.b16 %v3076
        %v3345 = vunpack.c.l.b16 %v3077
        %v3346 = vunpack.c.h.b16 %v3077
        %v3347 = vunpack.c.l.b16 %v3078
        %v3348 = vunpack.c.h.b16 %v3078
        %v3349 = vunpack.c.l.b16 %v3079
        %v3350 = vunpack.c.h.b16 %v3079
        %v3351 = vunpack.c.l.b16 %v3080
        %v3352 = vunpack.c.h.b16 %v3080
        %v3353 = vunpack.c.l.b16 %v3081
        %v3354 = vunpack.c.h.b16 %v3081
        %v3355 = vunpack.c.l.b16 %v3082
        %v3356 = vunpack.c.h.b16 %v3082
        %v3357 = vunpack.c.l.b16 %v3083
        %v3358 = vunpack.c.h.b16 %v3083
        %v3359 = vunpack.c.l.b16 %v3084
        %v3360 = vunpack.c.h.b16 %v3084
        %v3361 = vunpack.c.l.b16 %v3085
        %v3362 = vunpack.c.h.b16 %v3085
        %v3363 = vunpack.c.l.b16 %v3086
        %v3364 = vunpack.c.h.b16 %v3086
        %v3365 = vunpack.c.l.b16 %v3087
        %v3366 = vunpack.c.h.b16 %v3087
        %v3367 = vunpack.c.l.b16 %v3088
        %v3368 = vunpack.c.h.b16 %v3088
        %v3369 = vunpack.c.l.b16 %v3089
        %v3370 = vunpack.c.h.b16 %v3089
        %v3371 = vunpack.c.l.b16 %v3090
        %v3372 = vunpack.c.h.b16 %v3090
        %v3373 = vunpack.c.l.b16 %v3091
        %v3374 = vunpack.c.h.b16 %v3091
        %v3375 = vunpack.c.l.b16 %v3092
        %v3376 = vunpack.c.h.b16 %v3092
        %v3377 = vunpack.c.l.b16 %v3093
        %v3378 = vunpack.c.h.b16 %v3093
        %v3379 = vunpack.c.l.b16 %v3094
        %v3380 = vunpack.c.h.b16 %v3094
        %v3381 = vunpack.c.l.b16 %v3095
        %v3382 = vunpack.c.h.b16 %v3095
        %v3383 = vunpack.c.l.b16 %v3096
        %v3384 = vunpack.c.h.b16 %v3096
        %v3385 = vunpack.c.l.b16 %v3097
        %v3386 = vunpack.c.h.b16 %v3097
        %v3387 = vunpack.c.l.b16 %v3098
        %v3388 = vunpack.c.h.b16 %v3098
        %v3389 = vunpack.c.l.b16 %v3099
        %v3390 = vunpack.c.h.b16 %v3099
        %v3391 = vunpack.c.l.b16 %v3100
        %v3392 = vunpack.c.h.b16 %v3100
        %v3393 = vunpack.c.l.b16 %v3101
        %v3394 = vunpack.c.h.b16 %v3101
        %v3395 = vunpack.c.l.b16 %v3102
        %v3396 = vunpack.c.h.b16 %v3102
        %v3397 = vunpack.c.l.b16 %v3103
        %v3398 = vunpack.c.h.b16 %v3103
        %v3399 = vunpack.c.l.b16 %v3104
        %v3400 = vunpack.c.h.b16 %v3104
        %v3401 = vunpack.c.l.b16 %v3105
        %v3402 = vunpack.c.h.b16 %v3105
        %v3403 = vunpack.c.l.b16 %v3106
        %v3404 = vunpack.c.h.b16 %v3106
        %v3405 = vunpack.c.l.b16 %v3107
        %v3406 = vunpack.c.h.b16 %v3107
        %v3407 = vunpack.c.l.b16 %v3108
        %v3408 = vunpack.c.h.b16 %v3108
        %v3409 = vunpack.c.l.b16 %v3109
        %v3410 = vunpack.c.h.b16 %v3109
        %v3411 = vunpack.c.l.b16 %v3110
        %v3412 = vunpack.c.h.b16 %v3110
        %v3413 = vunpack.c.l.b16 %v3111
        %v3414 = vunpack.c.h.b16 %v3111
        %v3415 = vunpack.c.l.b16 %v3112
        %v3416 = vunpack.c.h.b16 %v3112
        %v3417 = vunpack.c.l.b16 %v3113
        %v3418 = vunpack.c.h.b16 %v3113
        %v3419 = vunpack.c.l.b16 %v3114
        %v3420 = vunpack.c.h.b16 %v3114
        %v3421 = vunpack.c.l.b16 %v3115
        %v3422 = vunpack.c.h.b16 %v3115
        %v3423 = vunpack.c.l.b16 %v3116
        %v3424 = vunpack.c.h.b16 %v3116
        %v3425 = vunpack.c.l.b16 %v3117
        %v3426 = vunpack.c.h.b16 %v3117
        %v3427 = vunpack.c.l.b16 %v3118
        %v3428 = vunpack.c.h.b16 %v3118
        %v3429 = vunpack.c.l.b16 %v3119
        %v3430 = vunpack.c.h.b16 %v3119
        %v3431 = vunpack.c.l.b16 %v3120
        %v3432 = vunpack.c.h.b16 %v3120
        %v3433 = vunpack.c.l.b16 %v3121
        %v3434 = vunpack.c.h.b16 %v3121
        %v3435 = vunpack.c.l.b16 %v3122
        %v3436 = vunpack.c.h.b16 %v3122
        %v3437 = vunpack.c.l.b16 %v3123
        %v3438 = vunpack.c.h.b16 %v3123
        %v3439 = vunpack.c.l.b16 %v3124
        %v3440 = vunpack.c.h.b16 %v3124
        %v3441 = vunpack.c.l.b16 %v3125
        %v3442 = vunpack.c.h.b16 %v3125
        %v3443 = vunpack.c.l.b16 %v3126
        %v3444 = vunpack.c.h.b16 %v3126
        %v3445 = vunpack.c.l.b16 %v3127
        %v3446 = vunpack.c.h.b16 %v3127
        %v3447 = vunpack.c.l.b16 %v3128
        %v3448 = vunpack.c.h.b16 %v3128
        %v3449 = vunpack.c.l.b16 %v3129
        %v3450 = vunpack.c.h.b16 %v3129
        %v3451 = vunpack.c.l.b16 %v3130
        %v3452 = vunpack.c.h.b16 %v3130
        %v3453 = vunpack.c.l.b16 %v3131
        %v3454 = vunpack.c.h.b16 %v3131
        %v3455 = vunpack.c.l.b16 %v3132
        %v3456 = vunpack.c.h.b16 %v3132
        %v3457 = vunpack.c.l.b16 %v3133
        %v3458 = vunpack.c.h.b16 %v3133
        %v3459 = vunpack.c.l.b16 %v3134
        %v3460 = vunpack.c.h.b16 %v3134
        %v3461 = vunpack.c.l.b16 %v3135
        %v3462 = vunpack.c.h.b16 %v3135
        %v3463 = vunpack.c.l.b16 %v3136
        %v3464 = vunpack.c.h.b16 %v3136
        %v3465 = vunpack.c.l.b16 %v3137
        %v3466 = vunpack.c.h.b16 %v3137
        %v3467 = vunpack.c.l.b16 %v3138
        %v3468 = vunpack.c.h.b16 %v3138
        %v3469 = vunpack.c.l.b16 %v3139
        %v3470 = vunpack.c.h.b16 %v3139
        %v3471 = vunpack.c.l.b16 %v3140
        %v3472 = vunpack.c.h.b16 %v3140
        %v3473 = vunpack.c.l.b16 %v3141
        %v3474 = vunpack.c.h.b16 %v3141
        %v3475 = vunpack.c.l.b16 %v3142
        %v3476 = vunpack.c.h.b16 %v3142
        %v3477 = vunpack.c.l.b16 %v3143
        %v3478 = vunpack.c.h.b16 %v3143
        %v3479 = vunpack.c.l.b16 %v3144
        %v3480 = vunpack.c.h.b16 %v3144
        %v3481 = vunpack.c.l.b16 %v3145
        %v3482 = vunpack.c.h.b16 %v3145
        %v3483 = vunpack.c.l.b16 %v3146
        %v3484 = vunpack.c.h.b16 %v3146
        %v3485 = vunpack.c.l.b16 %v3147
        %v3486 = vunpack.c.h.b16 %v3147
        %v3487 = vunpack.c.l.b16 %v3148
        %v3488 = vunpack.c.h.b16 %v3148
        %v3489 = vunpack.c.l.b16 %v3149
        %v3490 = vunpack.c.h.b16 %v3149
        %v3491 = vunpack.c.l.b16 %v3150
        %v3492 = vunpack.c.h.b16 %v3150
        %v3493 = vunpack.c.l.b16 %v3151
        %v3494 = vunpack.c.h.b16 %v3151
        %v3495 = vunpack.c.l.b16 %v3152
        %v3496 = vunpack.c.h.b16 %v3152
        %v3497 = vunpack.c.l.b16 %v3153
        %v3498 = vunpack.c.h.b16 %v3153
        %v3499 = vunpack.c.l.b16 %v3154
        %v3500 = vunpack.c.h.b16 %v3154
        %v3501 = vunpack.c.l.b16 %v3155
        %v3502 = vunpack.c.h.b16 %v3155
        %v3503 = vunpack.c.l.b16 %v3156
        %v3504 = vunpack.c.h.b16 %v3156
        %v3505 = vunpack.c.l.b16 %v3157
        %v3506 = vunpack.c.h.b16 %v3157
        %v3507 = vunpack.c.l.b16 %v3158
        %v3508 = vunpack.c.h.b16 %v3158
        %v3509 = vunpack.c.l.b16 %v3159
        %v3510 = vunpack.c.h.b16 %v3159
        %v3511 = vunpack.c.l.b16 %v3160
        %v3512 = vunpack.c.h.b16 %v3160
        %v3513 = vunpack.c.l.b16 %v3161
        %v3514 = vunpack.c.h.b16 %v3161
        %v3515 = vunpack.c.l.b16 %v3162
        %v3516 = vunpack.c.h.b16 %v3162
        %v3517 = vunpack.c.l.b16 %v3163
        %v3518 = vunpack.c.h.b16 %v3163
        %v3519 = vunpack.c.l.b16 %v3164
        %v3520 = vunpack.c.h.b16 %v3164
        %v3521 = vunpack.c.l.b16 %v3165
        %v3522 = vunpack.c.h.b16 %v3165
        %v3523 = vunpack.c.l.b16 %v3166
        %v3524 = vunpack.c.h.b16 %v3166
        %v3525 = vunpack.c.l.b16 %v3167
        %v3526 = vunpack.c.h.b16 %v3167
        %v3527 = vunpack.c.l.b16 %v3168
        %v3528 = vunpack.c.h.b16 %v3168
        %v3529 = vunpack.c.l.b16 %v3169
        %v3530 = vunpack.c.h.b16 %v3169
        %v3531 = vunpack.c.l.b16 %v3170
        %v3532 = vunpack.c.h.b16 %v3170
        %v3533 = vunpack.c.l.b16 %v3171
        %v3534 = vunpack.c.h.b16 %v3171
        %v3535 = vunpack.c.l.b16 %v3172
        %v3536 = vunpack.c.h.b16 %v3172
        %v3537 = vunpack.c.l.b16 %v3173
        %v3538 = vunpack.c.h.b16 %v3173
        %v3539 = vunpack.c.l.b16 %v3174
        %v3540 = vunpack.c.h.b16 %v3174
        %v3541 = vunpack.c.l.b16 %v3175
        %v3542 = vunpack.c.h.b16 %v3175
        %v3543 = vunpack.c.l.b16 %v3176
        %v3544 = vunpack.c.h.b16 %v3176
        %v3545 = vunpack.c.l.b16 %v3177
        %v3546 = vunpack.c.h.b16 %v3177
        %v3547 = vunpack.c.l.b16 %v3178
        %v3548 = vunpack.c.h.b16 %v3178
        %v3549 = vunpack.c.l.b16 %v3179
        %v3550 = vunpack.c.h.b16 %v3179
        %v3551 = vunpack.c.l.b16 %v3180
        %v3552 = vunpack.c.h.b16 %v3180
        %v3553 = vunpack.c.l.b16 %v3181
        %v3554 = vunpack.c.h.b16 %v3181
        %v3555 = vunpack.c.l.b16 %v3182
        %v3556 = vunpack.c.h.b16 %v3182
        %v3557 = vunpack.c.l.b16 %v3183
        %v3558 = vunpack.c.h.b16 %v3183
        %v3559 = vunpack.c.l.b16 %v3184
        %v3560 = vunpack.c.h.b16 %v3184
        %v3561 = vunpack.c.l.b16 %v3185
        %v3562 = vunpack.c.h.b16 %v3185
        %v3563 = vunpack.c.l.b16 %v3186
        %v3564 = vunpack.c.h.b16 %v3186
        %v3565 = vunpack.c.l.b16 %v3187
        %v3566 = vunpack.c.h.b16 %v3187
        %v3567 = vunpack.c.l.b16 %v3188
        %v3568 = vunpack.c.h.b16 %v3188
        %v3569 = vunpack.c.l.b16 %v3189
        %v3570 = vunpack.c.h.b16 %v3189
        %v3571 = vunpack.c.l.b16 %v3190
        %v3572 = vunpack.c.h.b16 %v3190
        %v3573 = vunpack.c.l.b16 %v3191
        %v3574 = vunpack.c.h.b16 %v3191
        %v3575 = vunpack.c.l.b16 %v3192
        %v3576 = vunpack.c.h.b16 %v3192
        %v3577 = vpack.c.b16 %v3325, %v3321
        %v3578 = vpack.c.b16 %v3326, %v3322
        %v3579 = vpack.c.b16 %v3327, %v3323
        %v3580 = vpack.c.b16 %v3328, %v3324
        %v3581 = vpack.c.b16 %v3333, %v3329
        %v3582 = vpack.c.b16 %v3334, %v3330
        %v3583 = vpack.c.b16 %v3335, %v3331
        %v3584 = vpack.c.b16 %v3336, %v3332
        %v3585 = vpack.c.b16 %v3341, %v3337
        %v3586 = vpack.c.b16 %v3342, %v3338
        %v3587 = vpack.c.b16 %v3343, %v3339
        %v3588 = vpack.c.b16 %v3344, %v3340
        %v3589 = vpack.c.b16 %v3349, %v3345
        %v3590 = vpack.c.b16 %v3350, %v3346
        %v3591 = vpack.c.b16 %v3351, %v3347
        %v3592 = vpack.c.b16 %v3352, %v3348
        %v3593 = vpack.c.b16 %v3357, %v3353
        %v3594 = vpack.c.b16 %v3358, %v3354
        %v3595 = vpack.c.b16 %v3359, %v3355
        %v3596 = vpack.c.b16 %v3360, %v3356
        %v3597 = vpack.c.b16 %v3365, %v3361
        %v3598 = vpack.c.b16 %v3366, %v3362
        %v3599 = vpack.c.b16 %v3367, %v3363
        %v3600 = vpack.c.b16 %v3368, %v3364
        %v3601 = vpack.c.b16 %v3373, %v3369
        %v3602 = vpack.c.b16 %v3374, %v3370
        %v3603 = vpack.c.b16 %v3375, %v3371
        %v3604 = vpack.c.b16 %v3376, %v3372
        %v3605 = vpack.c.b16 %v3381, %v3377
        %v3606 = vpack.c.b16 %v3382, %v3378
        %v3607 = vpack.c.b16 %v3383, %v3379
        %v3608 = vpack.c.b16 %v3384, %v3380
        %v3609 = vpack.c.b16 %v3389, %v3385
        %v3610 = vpack.c.b16 %v3390, %v3386
        %v3611 = vpack.c.b16 %v3391, %v3387
        %v3612 = vpack.c.b16 %v3392, %v3388
        %v3613 = vpack.c.b16 %v3397, %v3393
        %v3614 = vpack.c.b16 %v3398, %v3394
        %v3615 = vpack.c.b16 %v3399, %v3395
        %v3616 = vpack.c.b16 %v3400, %v3396
        %v3617 = vpack.c.b16 %v3405, %v3401
        %v3618 = vpack.c.b16 %v3406, %v3402
        %v3619 = vpack.c.b16 %v3407, %v3403
        %v3620 = vpack.c.b16 %v3408, %v3404
        %v3621 = vpack.c.b16 %v3413, %v3409
        %v3622 = vpack.c.b16 %v3414, %v3410
        %v3623 = vpack.c.b16 %v3415, %v3411
        %v3624 = vpack.c.b16 %v3416, %v3412
        %v3625 = vpack.c.b16 %v3421, %v3417
        %v3626 = vpack.c.b16 %v3422, %v3418
        %v3627 = vpack.c.b16 %v3423, %v3419
        %v3628 = vpack.c.b16 %v3424, %v3420
        %v3629 = vpack.c.b16 %v3429, %v3425
        %v3630 = vpack.c.b16 %v3430, %v3426
        %v3631 = vpack.c.b16 %v3431, %v3427
        %v3632 = vpack.c.b16 %v3432, %v3428
        %v3633 = vpack.c.b16 %v3437, %v3433
        %v3634 = vpack.c.b16 %v3438, %v3434
        %v3635 = vpack.c.b16 %v3439, %v3435
        %v3636 = vpack.c.b16 %v3440, %v3436
        %v3637 = vpack.c.b16 %v3445, %v3441
        %v3638 = vpack.c.b16 %v3446, %v3442
        %v3639 = vpack.c.b16 %v3447, %v3443
        %v3640 = vpack.c.b16 %v3448, %v3444
        %v3641 = vpack.c.b16 %v3453, %v3449
        %v3642 = vpack.c.b16 %v3454, %v3450
        %v3643 = vpack.c.b16 %v3455, %v3451
        %v3644 = vpack.c.b16 %v3456, %v3452
        %v3645 = vpack.c.b16 %v3461, %v3457
        %v3646 = vpack.c.b16 %v3462, %v3458
        %v3647 = vpack.c.b16 %v3463, %v3459
        %v3648 = vpack.c.b16 %v3464, %v3460
        %v3649 = vpack.c.b16 %v3469, %v3465
        %v3650 = vpack.c.b16 %v3470, %v3466
        %v3651 = vpack.c.b16 %v3471, %v3467
        %v3652 = vpack.c.b16 %v3472, %v3468
        %v3653 = vpack.c.b16 %v3477, %v3473
        %v3654 = vpack.c.b16 %v3478, %v3474
        %v3655 = vpack.c.b16 %v3479, %v3475
        %v3656 = vpack.c.b16 %v3480, %v3476
        %v3657 = vpack.c.b16 %v3485, %v3481
        %v3658 = vpack.c.b16 %v3486, %v3482
        %v3659 = vpack.c.b16 %v3487, %v3483
        %v3660 = vpack.c.b16 %v3488, %v3484
        %v3661 = vpack.c.b16 %v3493, %v3489
        %v3662 = vpack.c.b16 %v3494, %v3490
        %v3663 = vpack.c.b16 %v3495, %v3491
        %v3664 = vpack.c.b16 %v3496, %v3492
        %v3665 = vpack.c.b16 %v3501, %v3497
        %v3666 = vpack.c.b16 %v3502, %v3498
        %v3667 = vpack.c.b16 %v3503, %v3499
        %v3668 = vpack.c.b16 %v3504, %v3500
        %v3669 = vpack.c.b16 %v3509, %v3505
        %v3670 = vpack.c.b16 %v3510, %v3506
        %v3671 = vpack.c.b16 %v3511, %v3507
        %v3672 = vpack.c.b16 %v3512, %v3508
        %v3673 = vpack.c.b16 %v3517, %v3513
        %v3674 = vpack.c.b16 %v3518, %v3514
        %v3675 = vpack.c.b16 %v3519, %v3515
        %v3676 = vpack.c.b16 %v3520, %v3516
        %v3677 = vpack.c.b16 %v3525, %v3521
        %v3678 = vpack.c.b16 %v3526, %v3522
        %v3679 = vpack.c.b16 %v3527, %v3523
        %v3680 = vpack.c.b16 %v3528, %v3524
        %v3681 = vpack.c.b16 %v3533, %v3529
        %v3682 = vpack.c.b16 %v3534, %v3530
        %v3683 = vpack.c.b16 %v3535, %v3531
        %v3684 = vpack.c.b16 %v3536, %v3532
        %v3685 = vpack.c.b16 %v3541, %v3537
        %v3686 = vpack.c.b16 %v3542, %v3538
        %v3687 = vpack.c.b16 %v3543, %v3539
        %v3688 = vpack.c.b16 %v3544, %v3540
        %v3689 = vpack.c.b16 %v3549, %v3545
        %v3690 = vpack.c.b16 %v3550, %v3546
        %v3691 = vpack.c.b16 %v3551, %v3547
        %v3692 = vpack.c.b16 %v3552, %v3548
        %v3693 = vpack.c.b16 %v3557, %v3553
        %v3694 = vpack.c.b16 %v3558, %v3554
        %v3695 = vpack.c.b16 %v3559, %v3555
        %v3696 = vpack.c.b16 %v3560, %v3556
        %v3697 = vpack.c.b16 %v3565, %v3561
        %v3698 = vpack.c.b16 %v3566, %v3562
        %v3699 = vpack.c.b16 %v3567, %v3563
        %v3700 = vpack.c.b16 %v3568, %v3564
        %v3701 = vpack.c.b16 %v3573, %v3569
        %v3702 = vpack.c.b16 %v3574, %v3570
        %v3703 = vpack.c.b16 %v3575, %v3571
        %v3704 = vpack.c.b16 %v3576, %v3572
        %3833 = vmatprep.subr.bf16.mxu0 %v3606
        %3834 = vmatpush1.bf16.msra.mxu0 %v3605
        %3835 = vmatprep.subr.bf16.mxu0 %v3602
        %3836 = vmatpush1.bf16.msra.mxu0 %v3601
        %3837 = vmatprep.subr.bf16.mxu0 %v3598
        %3838 = vmatpush1.bf16.msra.mxu0 %v3597
        %3839 = vmatprep.subr.bf16.mxu0 %v3594
        %3840 = vmatpush1.bf16.msra.mxu0 %v3593
        %3841 = vmatprep.subr.bf16.mxu0 %v3590
        %3842 = vmatpush1.bf16.msra.mxu0 %v3589
        %3843 = vmatprep.subr.bf16.mxu0 %v3586
        %3844 = vmatpush1.bf16.msra.mxu0 %v3585
        %3845 = vmatprep.subr.bf16.mxu0 %v3582
        %3846 = vmatpush1.bf16.msra.mxu0 %v3581
        %3847 = vmatprep.subr.bf16.mxu0 %v3578
        %3848 = vmatpush1.bf16.msra.mxu0 %v3577
        %3849 = vmatprep.subr.bf16.mxu0 %v3638
        %3850 = vmatpush2.bf16.msra.mxu0 %v3637
        %3851 = vmatprep.subr.bf16.mxu0 %v3634
        %3852 = vmatpush2.bf16.msra.mxu0 %v3633
        %3853 = vmatprep.subr.bf16.mxu0 %v3630
        %3854 = vmatpush2.bf16.msra.mxu0 %v3629
        %3855 = vmatprep.subr.bf16.mxu0 %v3626
        %3856 = vmatpush2.bf16.msra.mxu0 %v3625
        %3857 = vmatprep.subr.bf16.mxu0 %v3622
        %3858 = vmatpush2.bf16.msra.mxu0 %v3621
        %3859 = vmatprep.subr.bf16.mxu0 %v3618
        %3860 = vmatpush2.bf16.msra.mxu0 %v3617
        %3861 = vmatprep.subr.bf16.mxu0 %v3614
        %3862 = vmatpush2.bf16.msra.mxu0 %v3613
        %3863 = vmatprep.subr.bf16.mxu0 %v3610
        %3864 = vmatpush2.bf16.msra.mxu0 %v3609
        %3865 = vmatprep.mubr.bf16.mxu0 %v3062
        %3866 = vmatmul.mubr.bf16.gmra.mxu0 %v3061
        %v3867 = vpop.f32.mrf.mxu0
        %v3868 = vadd.f32 0.0, %v3867
        %v3869 = vpop.f32.mrf.mxu0
        %v3870 = vadd.f32 0.0, %v3869
        %v3871 = vpop.f32.mrf.mxu0
        %v3872 = vpop.f32.mrf.mxu0
        %3873 = vdwg.mxu0
        %3874 = vmatprep.subr.bf16.mxu0 %v3670
        %3875 = vmatpush1.bf16.msra.mxu0 %v3669
        %3876 = vmatprep.subr.bf16.mxu0 %v3666
        %3877 = vmatpush1.bf16.msra.mxu0 %v3665
        %3878 = vmatprep.subr.bf16.mxu0 %v3662
        %3879 = vmatpush1.bf16.msra.mxu0 %v3661
        %3880 = vmatprep.subr.bf16.mxu0 %v3658
        %3881 = vmatpush1.bf16.msra.mxu0 %v3657
        %3882 = vmatprep.subr.bf16.mxu0 %v3654
        %3883 = vmatpush1.bf16.msra.mxu0 %v3653
        %3884 = vmatprep.subr.bf16.mxu0 %v3650
        %3885 = vmatpush1.bf16.msra.mxu0 %v3649
        %3886 = vmatprep.subr.bf16.mxu0 %v3646
        %3887 = vmatpush1.bf16.msra.mxu0 %v3645
        %3888 = vmatprep.subr.bf16.mxu0 %v3642
        %3889 = vmatpush1.bf16.msra.mxu0 %v3641
        %3890 = vmatprep.subr.bf16.mxu0 %v3702
        %3891 = vmatpush2.bf16.msra.mxu0 %v3701
        %3892 = vmatprep.subr.bf16.mxu0 %v3698
        %3893 = vmatpush2.bf16.msra.mxu0 %v3697
        %3894 = vmatprep.subr.bf16.mxu0 %v3694
        %3895 = vmatpush2.bf16.msra.mxu0 %v3693
        %3896 = vmatprep.subr.bf16.mxu0 %v3690
        %3897 = vmatpush2.bf16.msra.mxu0 %v3689
        %3898 = vmatprep.subr.bf16.mxu0 %v3686
        %3899 = vmatpush2.bf16.msra.mxu0 %v3685
        %3900 = vmatprep.subr.bf16.mxu0 %v3682
        %3901 = vmatpush2.bf16.msra.mxu0 %v3681
        %3902 = vmatprep.subr.bf16.mxu0 %v3678
        %3903 = vmatpush2.bf16.msra.mxu0 %v3677
        %3904 = vmatprep.subr.bf16.mxu0 %v3674
        %3905 = vmatpush2.bf16.msra.mxu0 %v3673
        %3906 = vmatprep.mubr.bf16.mxu0 %v3064
        %3907 = vmatmul.mubr.bf16.gmra.mxu0 %v3063
        %v3908 = vpop.f32.mrf.mxu0
        %v3909 = vadd.f32 %v3868, %v3908
        %v3910 = vpop.f32.mrf.mxu0
        %v3911 = vadd.f32 %v3870, %v3910
        %v3912 = vpop.f32.mrf.mxu0
        %v3913 = vpop.f32.mrf.mxu0
        %3914 = vdwg.mxu0
        %3915 = vmatprep.subr.bf16.mxu0 %v3608
        %3916 = vmatpush1.bf16.msra.mxu0 %v3607
        %3917 = vmatprep.subr.bf16.mxu0 %v3604
        %3918 = vmatpush1.bf16.msra.mxu0 %v3603
        %3919 = vmatprep.subr.bf16.mxu0 %v3600
        %3920 = vmatpush1.bf16.msra.mxu0 %v3599
        %3921 = vmatprep.subr.bf16.mxu0 %v3596
        %3922 = vmatpush1.bf16.msra.mxu0 %v3595
        %3923 = vmatprep.subr.bf16.mxu0 %v3592
        %3924 = vmatpush1.bf16.msra.mxu0 %v3591
        %3925 = vmatprep.subr.bf16.mxu0 %v3588
        %3926 = vmatpush1.bf16.msra.mxu0 %v3587
        %3927 = vmatprep.subr.bf16.mxu0 %v3584
        %3928 = vmatpush1.bf16.msra.mxu0 %v3583
        %3929 = vmatprep.subr.bf16.mxu0 %v3580
        %3930 = vmatpush1.bf16.msra.mxu0 %v3579
        %3931 = vmatprep.subr.bf16.mxu0 %v3640
        %3932 = vmatpush2.bf16.msra.mxu0 %v3639
        %3933 = vmatprep.subr.bf16.mxu0 %v3636
        %3934 = vmatpush2.bf16.msra.mxu0 %v3635
        %3935 = vmatprep.subr.bf16.mxu0 %v3632
        %3936 = vmatpush2.bf16.msra.mxu0 %v3631
        %3937 = vmatprep.subr.bf16.mxu0 %v3628
        %3938 = vmatpush2.bf16.msra.mxu0 %v3627
        %3939 = vmatprep.subr.bf16.mxu0 %v3624
        %3940 = vmatpush2.bf16.msra.mxu0 %v3623
        %3941 = vmatprep.subr.bf16.mxu0 %v3620
        %3942 = vmatpush2.bf16.msra.mxu0 %v3619
        %3943 = vmatprep.subr.bf16.mxu0 %v3616
        %3944 = vmatpush2.bf16.msra.mxu0 %v3615
        %3945 = vmatprep.subr.bf16.mxu0 %v3612
        %3946 = vmatpush2.bf16.msra.mxu0 %v3611
        %3947 = vmatprep.mubr.bf16.mxu0 %v3062
        %3948 = vmatmul.mubr.bf16.gmra.mxu0 %v3061
        %v3949 = vpop.f32.mrf.mxu0
        %v3950 = vadd.f32 0.0, %v3949
        %v3951 = vpop.f32.mrf.mxu0
        %v3952 = vadd.f32 0.0, %v3951
        %v3953 = vpop.f32.mrf.mxu0
        %v3954 = vpop.f32.mrf.mxu0
        %3955 = vdwg.mxu0
        %3956 = vmatprep.subr.bf16.mxu0 %v3672
        %3957 = vmatpush1.bf16.msra.mxu0 %v3671
        %3958 = vmatprep.subr.bf16.mxu0 %v3668
        %3959 = vmatpush1.bf16.msra.mxu0 %v3667
        %3960 = vmatprep.subr.bf16.mxu0 %v3664
        %3961 = vmatpush1.bf16.msra.mxu0 %v3663
        %3962 = vmatprep.subr.bf16.mxu0 %v3660
        %3963 = vmatpush1.bf16.msra.mxu0 %v3659
        %3964 = vmatprep.subr.bf16.mxu0 %v3656
        %3965 = vmatpush1.bf16.msra.mxu0 %v3655
        %3966 = vmatprep.subr.bf16.mxu0 %v3652
        %3967 = vmatpush1.bf16.msra.mxu0 %v3651
        %3968 = vmatprep.subr.bf16.mxu0 %v3648
        %3969 = vmatpush1.bf16.msra.mxu0 %v3647
        %3970 = vmatprep.subr.bf16.mxu0 %v3644
        %3971 = vmatpush1.bf16.msra.mxu0 %v3643
        %3972 = vmatprep.subr.bf16.mxu0 %v3704
        %3973 = vmatpush2.bf16.msra.mxu0 %v3703
        %3974 = vmatprep.subr.bf16.mxu0 %v3700
        %3975 = vmatpush2.bf16.msra.mxu0 %v3699
        %3976 = vmatprep.subr.bf16.mxu0 %v3696
        %3977 = vmatpush2.bf16.msra.mxu0 %v3695
        %3978 = vmatprep.subr.bf16.mxu0 %v3692
        %3979 = vmatpush2.bf16.msra.mxu0 %v3691
        %3980 = vmatprep.subr.bf16.mxu0 %v3688
        %3981 = vmatpush2.bf16.msra.mxu0 %v3687
        %3982 = vmatprep.subr.bf16.mxu0 %v3684
        %3983 = vmatpush2.bf16.msra.mxu0 %v3683
        %3984 = vmatprep.subr.bf16.mxu0 %v3680
        %3985 = vmatpush2.bf16.msra.mxu0 %v3679
        %3986 = vmatprep.subr.bf16.mxu0 %v3676
        %3987 = vmatpush2.bf16.msra.mxu0 %v3675
        %3988 = vmatprep.mubr.bf16.mxu0 %v3064
        %3989 = vmatmul.mubr.bf16.gmra.mxu0 %v3063
        %v3990 = vpop.f32.mrf.mxu0
        %v3991 = vadd.f32 %v3950, %v3990
        %v3992 = vpop.f32.mrf.mxu0
        %v3993 = vadd.f32 %v3952, %v3992
        %v3994 = vpop.f32.mrf.mxu0
        %v3995 = vpop.f32.mrf.mxu0
        %3996 = vdwg.mxu0
        %v4125 = vunpack.c.l.b16 %v2933
        %v4126 = vunpack.c.h.b16 %v2933
        %v4127 = vunpack.c.l.b16 %v2934
        %v4128 = vunpack.c.h.b16 %v2934
        %v4129 = vunpack.c.l.b16 %v2935
        %v4130 = vunpack.c.h.b16 %v2935
        %v4131 = vunpack.c.l.b16 %v2936
        %v4132 = vunpack.c.h.b16 %v2936
        %v4133 = vunpack.c.l.b16 %v2937
        %v4134 = vunpack.c.h.b16 %v2937
        %v4135 = vunpack.c.l.b16 %v2938
        %v4136 = vunpack.c.h.b16 %v2938
        %v4137 = vunpack.c.l.b16 %v2939
        %v4138 = vunpack.c.h.b16 %v2939
        %v4139 = vunpack.c.l.b16 %v2940
        %v4140 = vunpack.c.h.b16 %v2940
        %v4141 = vunpack.c.l.b16 %v2941
        %v4142 = vunpack.c.h.b16 %v2941
        %v4143 = vunpack.c.l.b16 %v2942
        %v4144 = vunpack.c.h.b16 %v2942
        %v4145 = vunpack.c.l.b16 %v2943
        %v4146 = vunpack.c.h.b16 %v2943
        %v4147 = vunpack.c.l.b16 %v2944
        %v4148 = vunpack.c.h.b16 %v2944
        %v4149 = vunpack.c.l.b16 %v2945
        %v4150 = vunpack.c.h.b16 %v2945
        %v4151 = vunpack.c.l.b16 %v2946
        %v4152 = vunpack.c.h.b16 %v2946
        %v4153 = vunpack.c.l.b16 %v2947
        %v4154 = vunpack.c.h.b16 %v2947
        %v4155 = vunpack.c.l.b16 %v2948
        %v4156 = vunpack.c.h.b16 %v2948
        %v4157 = vunpack.c.l.b16 %v2949
        %v4158 = vunpack.c.h.b16 %v2949
        %v4159 = vunpack.c.l.b16 %v2950
        %v4160 = vunpack.c.h.b16 %v2950
        %v4161 = vunpack.c.l.b16 %v2951
        %v4162 = vunpack.c.h.b16 %v2951
        %v4163 = vunpack.c.l.b16 %v2952
        %v4164 = vunpack.c.h.b16 %v2952
        %v4165 = vunpack.c.l.b16 %v2953
        %v4166 = vunpack.c.h.b16 %v2953
        %v4167 = vunpack.c.l.b16 %v2954
        %v4168 = vunpack.c.h.b16 %v2954
        %v4169 = vunpack.c.l.b16 %v2955
        %v4170 = vunpack.c.h.b16 %v2955
        %v4171 = vunpack.c.l.b16 %v2956
        %v4172 = vunpack.c.h.b16 %v2956
        %v4173 = vunpack.c.l.b16 %v2957
        %v4174 = vunpack.c.h.b16 %v2957
        %v4175 = vunpack.c.l.b16 %v2958
        %v4176 = vunpack.c.h.b16 %v2958
        %v4177 = vunpack.c.l.b16 %v2959
        %v4178 = vunpack.c.h.b16 %v2959
        %v4179 = vunpack.c.l.b16 %v2960
        %v4180 = vunpack.c.h.b16 %v2960
        %v4181 = vunpack.c.l.b16 %v2961
        %v4182 = vunpack.c.h.b16 %v2961
        %v4183 = vunpack.c.l.b16 %v2962
        %v4184 = vunpack.c.h.b16 %v2962
        %v4185 = vunpack.c.l.b16 %v2963
        %v4186 = vunpack.c.h.b16 %v2963
        %v4187 = vunpack.c.l.b16 %v2964
        %v4188 = vunpack.c.h.b16 %v2964
        %v4189 = vunpack.c.l.b16 %v2965
        %v4190 = vunpack.c.h.b16 %v2965
        %v4191 = vunpack.c.l.b16 %v2966
        %v4192 = vunpack.c.h.b16 %v2966
        %v4193 = vunpack.c.l.b16 %v2967
        %v4194 = vunpack.c.h.b16 %v2967
        %v4195 = vunpack.c.l.b16 %v2968
        %v4196 = vunpack.c.h.b16 %v2968
        %v4197 = vunpack.c.l.b16 %v2969
        %v4198 = vunpack.c.h.b16 %v2969
        %v4199 = vunpack.c.l.b16 %v2970
        %v4200 = vunpack.c.h.b16 %v2970
        %v4201 = vunpack.c.l.b16 %v2971
        %v4202 = vunpack.c.h.b16 %v2971
        %v4203 = vunpack.c.l.b16 %v2972
        %v4204 = vunpack.c.h.b16 %v2972
        %v4205 = vunpack.c.l.b16 %v2973
        %v4206 = vunpack.c.h.b16 %v2973
        %v4207 = vunpack.c.l.b16 %v2974
        %v4208 = vunpack.c.h.b16 %v2974
        %v4209 = vunpack.c.l.b16 %v2975
        %v4210 = vunpack.c.h.b16 %v2975
        %v4211 = vunpack.c.l.b16 %v2976
        %v4212 = vunpack.c.h.b16 %v2976
        %v4213 = vunpack.c.l.b16 %v2977
        %v4214 = vunpack.c.h.b16 %v2977
        %v4215 = vunpack.c.l.b16 %v2978
        %v4216 = vunpack.c.h.b16 %v2978
        %v4217 = vunpack.c.l.b16 %v2979
        %v4218 = vunpack.c.h.b16 %v2979
        %v4219 = vunpack.c.l.b16 %v2980
        %v4220 = vunpack.c.h.b16 %v2980
        %v4221 = vunpack.c.l.b16 %v2981
        %v4222 = vunpack.c.h.b16 %v2981
        %v4223 = vunpack.c.l.b16 %v2982
        %v4224 = vunpack.c.h.b16 %v2982
        %v4225 = vunpack.c.l.b16 %v2983
        %v4226 = vunpack.c.h.b16 %v2983
        %v4227 = vunpack.c.l.b16 %v2984
        %v4228 = vunpack.c.h.b16 %v2984
        %v4229 = vunpack.c.l.b16 %v2985
        %v4230 = vunpack.c.h.b16 %v2985
        %v4231 = vunpack.c.l.b16 %v2986
        %v4232 = vunpack.c.h.b16 %v2986
        %v4233 = vunpack.c.l.b16 %v2987
        %v4234 = vunpack.c.h.b16 %v2987
        %v4235 = vunpack.c.l.b16 %v2988
        %v4236 = vunpack.c.h.b16 %v2988
        %v4237 = vunpack.c.l.b16 %v2989
        %v4238 = vunpack.c.h.b16 %v2989
        %v4239 = vunpack.c.l.b16 %v2990
        %v4240 = vunpack.c.h.b16 %v2990
        %v4241 = vunpack.c.l.b16 %v2991
        %v4242 = vunpack.c.h.b16 %v2991
        %v4243 = vunpack.c.l.b16 %v2992
        %v4244 = vunpack.c.h.b16 %v2992
        %v4245 = vunpack.c.l.b16 %v2993
        %v4246 = vunpack.c.h.b16 %v2993
        %v4247 = vunpack.c.l.b16 %v2994
        %v4248 = vunpack.c.h.b16 %v2994
        %v4249 = vunpack.c.l.b16 %v2995
        %v4250 = vunpack.c.h.b16 %v2995
        %v4251 = vunpack.c.l.b16 %v2996
        %v4252 = vunpack.c.h.b16 %v2996
        %v4253 = vunpack.c.l.b16 %v2997
        %v4254 = vunpack.c.h.b16 %v2997
        %v4255 = vunpack.c.l.b16 %v2998
        %v4256 = vunpack.c.h.b16 %v2998
        %v4257 = vunpack.c.l.b16 %v2999
        %v4258 = vunpack.c.h.b16 %v2999
        %v4259 = vunpack.c.l.b16 %v3000
        %v4260 = vunpack.c.h.b16 %v3000
        %v4261 = vunpack.c.l.b16 %v3001
        %v4262 = vunpack.c.h.b16 %v3001
        %v4263 = vunpack.c.l.b16 %v3002
        %v4264 = vunpack.c.h.b16 %v3002
        %v4265 = vunpack.c.l.b16 %v3003
        %v4266 = vunpack.c.h.b16 %v3003
        %v4267 = vunpack.c.l.b16 %v3004
        %v4268 = vunpack.c.h.b16 %v3004
        %v4269 = vunpack.c.l.b16 %v3005
        %v4270 = vunpack.c.h.b16 %v3005
        %v4271 = vunpack.c.l.b16 %v3006
        %v4272 = vunpack.c.h.b16 %v3006
        %v4273 = vunpack.c.l.b16 %v3007
        %v4274 = vunpack.c.h.b16 %v3007
        %v4275 = vunpack.c.l.b16 %v3008
        %v4276 = vunpack.c.h.b16 %v3008
        %v4277 = vunpack.c.l.b16 %v3009
        %v4278 = vunpack.c.h.b16 %v3009
        %v4279 = vunpack.c.l.b16 %v3010
        %v4280 = vunpack.c.h.b16 %v3010
        %v4281 = vunpack.c.l.b16 %v3011
        %v4282 = vunpack.c.h.b16 %v3011
        %v4283 = vunpack.c.l.b16 %v3012
        %v4284 = vunpack.c.h.b16 %v3012
        %v4285 = vunpack.c.l.b16 %v3013
        %v4286 = vunpack.c.h.b16 %v3013
        %v4287 = vunpack.c.l.b16 %v3014
        %v4288 = vunpack.c.h.b16 %v3014
        %v4289 = vunpack.c.l.b16 %v3015
        %v4290 = vunpack.c.h.b16 %v3015
        %v4291 = vunpack.c.l.b16 %v3016
        %v4292 = vunpack.c.h.b16 %v3016
        %v4293 = vunpack.c.l.b16 %v3017
        %v4294 = vunpack.c.h.b16 %v3017
        %v4295 = vunpack.c.l.b16 %v3018
        %v4296 = vunpack.c.h.b16 %v3018
        %v4297 = vunpack.c.l.b16 %v3019
        %v4298 = vunpack.c.h.b16 %v3019
        %v4299 = vunpack.c.l.b16 %v3020
        %v4300 = vunpack.c.h.b16 %v3020
        %v4301 = vunpack.c.l.b16 %v3021
        %v4302 = vunpack.c.h.b16 %v3021
        %v4303 = vunpack.c.l.b16 %v3022
        %v4304 = vunpack.c.h.b16 %v3022
        %v4305 = vunpack.c.l.b16 %v3023
        %v4306 = vunpack.c.h.b16 %v3023
        %v4307 = vunpack.c.l.b16 %v3024
        %v4308 = vunpack.c.h.b16 %v3024
        %v4309 = vunpack.c.l.b16 %v3025
        %v4310 = vunpack.c.h.b16 %v3025
        %v4311 = vunpack.c.l.b16 %v3026
        %v4312 = vunpack.c.h.b16 %v3026
        %v4313 = vunpack.c.l.b16 %v3027
        %v4314 = vunpack.c.h.b16 %v3027
        %v4315 = vunpack.c.l.b16 %v3028
        %v4316 = vunpack.c.h.b16 %v3028
        %v4317 = vunpack.c.l.b16 %v3029
        %v4318 = vunpack.c.h.b16 %v3029
        %v4319 = vunpack.c.l.b16 %v3030
        %v4320 = vunpack.c.h.b16 %v3030
        %v4321 = vunpack.c.l.b16 %v3031
        %v4322 = vunpack.c.h.b16 %v3031
        %v4323 = vunpack.c.l.b16 %v3032
        %v4324 = vunpack.c.h.b16 %v3032
        %v4325 = vunpack.c.l.b16 %v3033
        %v4326 = vunpack.c.h.b16 %v3033
        %v4327 = vunpack.c.l.b16 %v3034
        %v4328 = vunpack.c.h.b16 %v3034
        %v4329 = vunpack.c.l.b16 %v3035
        %v4330 = vunpack.c.h.b16 %v3035
        %v4331 = vunpack.c.l.b16 %v3036
        %v4332 = vunpack.c.h.b16 %v3036
        %v4333 = vunpack.c.l.b16 %v3037
        %v4334 = vunpack.c.h.b16 %v3037
        %v4335 = vunpack.c.l.b16 %v3038
        %v4336 = vunpack.c.h.b16 %v3038
        %v4337 = vunpack.c.l.b16 %v3039
        %v4338 = vunpack.c.h.b16 %v3039
        %v4339 = vunpack.c.l.b16 %v3040
        %v4340 = vunpack.c.h.b16 %v3040
        %v4341 = vunpack.c.l.b16 %v3041
        %v4342 = vunpack.c.h.b16 %v3041
        %v4343 = vunpack.c.l.b16 %v3042
        %v4344 = vunpack.c.h.b16 %v3042
        %v4345 = vunpack.c.l.b16 %v3043
        %v4346 = vunpack.c.h.b16 %v3043
        %v4347 = vunpack.c.l.b16 %v3044
        %v4348 = vunpack.c.h.b16 %v3044
        %v4349 = vunpack.c.l.b16 %v3045
        %v4350 = vunpack.c.h.b16 %v3045
        %v4351 = vunpack.c.l.b16 %v3046
        %v4352 = vunpack.c.h.b16 %v3046
        %v4353 = vunpack.c.l.b16 %v3047
        %v4354 = vunpack.c.h.b16 %v3047
        %v4355 = vunpack.c.l.b16 %v3048
        %v4356 = vunpack.c.h.b16 %v3048
        %v4357 = vunpack.c.l.b16 %v3049
        %v4358 = vunpack.c.h.b16 %v3049
        %v4359 = vunpack.c.l.b16 %v3050
        %v4360 = vunpack.c.h.b16 %v3050
        %v4361 = vunpack.c.l.b16 %v3051
        %v4362 = vunpack.c.h.b16 %v3051
        %v4363 = vunpack.c.l.b16 %v3052
        %v4364 = vunpack.c.h.b16 %v3052
        %v4365 = vunpack.c.l.b16 %v3053
        %v4366 = vunpack.c.h.b16 %v3053
        %v4367 = vunpack.c.l.b16 %v3054
        %v4368 = vunpack.c.h.b16 %v3054
        %v4369 = vunpack.c.l.b16 %v3055
        %v4370 = vunpack.c.h.b16 %v3055
        %v4371 = vunpack.c.l.b16 %v3056
        %v4372 = vunpack.c.h.b16 %v3056
        %v4373 = vunpack.c.l.b16 %v3057
        %v4374 = vunpack.c.h.b16 %v3057
        %v4375 = vunpack.c.l.b16 %v3058
        %v4376 = vunpack.c.h.b16 %v3058
        %v4377 = vunpack.c.l.b16 %v3059
        %v4378 = vunpack.c.h.b16 %v3059
        %v4379 = vunpack.c.l.b16 %v3060
        %v4380 = vunpack.c.h.b16 %v3060
        %v4381 = vpack.c.b16 %v4129, %v4125
        %v4382 = vpack.c.b16 %v4130, %v4126
        %v4383 = vpack.c.b16 %v4131, %v4127
        %v4384 = vpack.c.b16 %v4132, %v4128
        %v4385 = vpack.c.b16 %v4137, %v4133
        %v4386 = vpack.c.b16 %v4138, %v4134
        %v4387 = vpack.c.b16 %v4139, %v4135
        %v4388 = vpack.c.b16 %v4140, %v4136
        %v4389 = vpack.c.b16 %v4145, %v4141
        %v4390 = vpack.c.b16 %v4146, %v4142
        %v4391 = vpack.c.b16 %v4147, %v4143
        %v4392 = vpack.c.b16 %v4148, %v4144
        %v4393 = vpack.c.b16 %v4153, %v4149
        %v4394 = vpack.c.b16 %v4154, %v4150
        %v4395 = vpack.c.b16 %v4155, %v4151
        %v4396 = vpack.c.b16 %v4156, %v4152
        %v4397 = vpack.c.b16 %v4161, %v4157
        %v4398 = vpack.c.b16 %v4162, %v4158
        %v4399 = vpack.c.b16 %v4163, %v4159
        %v4400 = vpack.c.b16 %v4164, %v4160
        %v4401 = vpack.c.b16 %v4169, %v4165
        %v4402 = vpack.c.b16 %v4170, %v4166
        %v4403 = vpack.c.b16 %v4171, %v4167
        %v4404 = vpack.c.b16 %v4172, %v4168
        %v4405 = vpack.c.b16 %v4177, %v4173
        %v4406 = vpack.c.b16 %v4178, %v4174
        %v4407 = vpack.c.b16 %v4179, %v4175
        %v4408 = vpack.c.b16 %v4180, %v4176
        %v4409 = vpack.c.b16 %v4185, %v4181
        %v4410 = vpack.c.b16 %v4186, %v4182
        %v4411 = vpack.c.b16 %v4187, %v4183
        %v4412 = vpack.c.b16 %v4188, %v4184
        %v4413 = vpack.c.b16 %v4193, %v4189
        %v4414 = vpack.c.b16 %v4194, %v4190
        %v4415 = vpack.c.b16 %v4195, %v4191
        %v4416 = vpack.c.b16 %v4196, %v4192
        %v4417 = vpack.c.b16 %v4201, %v4197
        %v4418 = vpack.c.b16 %v4202, %v4198
        %v4419 = vpack.c.b16 %v4203, %v4199
        %v4420 = vpack.c.b16 %v4204, %v4200
        %v4421 = vpack.c.b16 %v4209, %v4205
        %v4422 = vpack.c.b16 %v4210, %v4206
        %v4423 = vpack.c.b16 %v4211, %v4207
        %v4424 = vpack.c.b16 %v4212, %v4208
        %v4425 = vpack.c.b16 %v4217, %v4213
        %v4426 = vpack.c.b16 %v4218, %v4214
        %v4427 = vpack.c.b16 %v4219, %v4215
        %v4428 = vpack.c.b16 %v4220, %v4216
        %v4429 = vpack.c.b16 %v4225, %v4221
        %v4430 = vpack.c.b16 %v4226, %v4222
        %v4431 = vpack.c.b16 %v4227, %v4223
        %v4432 = vpack.c.b16 %v4228, %v4224
        %v4433 = vpack.c.b16 %v4233, %v4229
        %v4434 = vpack.c.b16 %v4234, %v4230
        %v4435 = vpack.c.b16 %v4235, %v4231
        %v4436 = vpack.c.b16 %v4236, %v4232
        %v4437 = vpack.c.b16 %v4241, %v4237
        %v4438 = vpack.c.b16 %v4242, %v4238
        %v4439 = vpack.c.b16 %v4243, %v4239
        %v4440 = vpack.c.b16 %v4244, %v4240
        %v4441 = vpack.c.b16 %v4249, %v4245
        %v4442 = vpack.c.b16 %v4250, %v4246
        %v4443 = vpack.c.b16 %v4251, %v4247
        %v4444 = vpack.c.b16 %v4252, %v4248
        %v4445 = vpack.c.b16 %v4257, %v4253
        %v4446 = vpack.c.b16 %v4258, %v4254
        %v4447 = vpack.c.b16 %v4259, %v4255
        %v4448 = vpack.c.b16 %v4260, %v4256
        %v4449 = vpack.c.b16 %v4265, %v4261
        %v4450 = vpack.c.b16 %v4266, %v4262
        %v4451 = vpack.c.b16 %v4267, %v4263
        %v4452 = vpack.c.b16 %v4268, %v4264
        %v4453 = vpack.c.b16 %v4273, %v4269
        %v4454 = vpack.c.b16 %v4274, %v4270
        %v4455 = vpack.c.b16 %v4275, %v4271
        %v4456 = vpack.c.b16 %v4276, %v4272
        %v4457 = vpack.c.b16 %v4281, %v4277
        %v4458 = vpack.c.b16 %v4282, %v4278
        %v4459 = vpack.c.b16 %v4283, %v4279
        %v4460 = vpack.c.b16 %v4284, %v4280
        %v4461 = vpack.c.b16 %v4289, %v4285
        %v4462 = vpack.c.b16 %v4290, %v4286
        %v4463 = vpack.c.b16 %v4291, %v4287
        %v4464 = vpack.c.b16 %v4292, %v4288
        %v4465 = vpack.c.b16 %v4297, %v4293
        %v4466 = vpack.c.b16 %v4298, %v4294
        %v4467 = vpack.c.b16 %v4299, %v4295
        %v4468 = vpack.c.b16 %v4300, %v4296
        %v4469 = vpack.c.b16 %v4305, %v4301
        %v4470 = vpack.c.b16 %v4306, %v4302
        %v4471 = vpack.c.b16 %v4307, %v4303
        %v4472 = vpack.c.b16 %v4308, %v4304
        %v4473 = vpack.c.b16 %v4313, %v4309
        %v4474 = vpack.c.b16 %v4314, %v4310
        %v4475 = vpack.c.b16 %v4315, %v4311
        %v4476 = vpack.c.b16 %v4316, %v4312
        %v4477 = vpack.c.b16 %v4321, %v4317
        %v4478 = vpack.c.b16 %v4322, %v4318
        %v4479 = vpack.c.b16 %v4323, %v4319
        %v4480 = vpack.c.b16 %v4324, %v4320
        %v4481 = vpack.c.b16 %v4329, %v4325
        %v4482 = vpack.c.b16 %v4330, %v4326
        %v4483 = vpack.c.b16 %v4331, %v4327
        %v4484 = vpack.c.b16 %v4332, %v4328
        %v4485 = vpack.c.b16 %v4337, %v4333
        %v4486 = vpack.c.b16 %v4338, %v4334
        %v4487 = vpack.c.b16 %v4339, %v4335
        %v4488 = vpack.c.b16 %v4340, %v4336
        %v4489 = vpack.c.b16 %v4345, %v4341
        %v4490 = vpack.c.b16 %v4346, %v4342
        %v4491 = vpack.c.b16 %v4347, %v4343
        %v4492 = vpack.c.b16 %v4348, %v4344
        %v4493 = vpack.c.b16 %v4353, %v4349
        %v4494 = vpack.c.b16 %v4354, %v4350
        %v4495 = vpack.c.b16 %v4355, %v4351
        %v4496 = vpack.c.b16 %v4356, %v4352
        %v4497 = vpack.c.b16 %v4361, %v4357
        %v4498 = vpack.c.b16 %v4362, %v4358
        %v4499 = vpack.c.b16 %v4363, %v4359
        %v4500 = vpack.c.b16 %v4364, %v4360
        %v4501 = vpack.c.b16 %v4369, %v4365
        %v4502 = vpack.c.b16 %v4370, %v4366
        %v4503 = vpack.c.b16 %v4371, %v4367
        %v4504 = vpack.c.b16 %v4372, %v4368
        %v4505 = vpack.c.b16 %v4377, %v4373
        %v4506 = vpack.c.b16 %v4378, %v4374
        %v4507 = vpack.c.b16 %v4379, %v4375
        %v4508 = vpack.c.b16 %v4380, %v4376
        %4637 = vmatprep.subr.bf16.mxu0 %v4410
        %4638 = vmatpush1.bf16.msra.mxu0 %v4409
        %4639 = vmatprep.subr.bf16.mxu0 %v4406
        %4640 = vmatpush1.bf16.msra.mxu0 %v4405
        %4641 = vmatprep.subr.bf16.mxu0 %v4402
        %4642 = vmatpush1.bf16.msra.mxu0 %v4401
        %4643 = vmatprep.subr.bf16.mxu0 %v4398
        %4644 = vmatpush1.bf16.msra.mxu0 %v4397
        %4645 = vmatprep.subr.bf16.mxu0 %v4394
        %4646 = vmatpush1.bf16.msra.mxu0 %v4393
        %4647 = vmatprep.subr.bf16.mxu0 %v4390
        %4648 = vmatpush1.bf16.msra.mxu0 %v4389
        %4649 = vmatprep.subr.bf16.mxu0 %v4386
        %4650 = vmatpush1.bf16.msra.mxu0 %v4385
        %4651 = vmatprep.subr.bf16.mxu0 %v4382
        %4652 = vmatpush1.bf16.msra.mxu0 %v4381
        %4653 = vmatprep.subr.bf16.mxu0 %v4442
        %4654 = vmatpush2.bf16.msra.mxu0 %v4441
        %4655 = vmatprep.subr.bf16.mxu0 %v4438
        %4656 = vmatpush2.bf16.msra.mxu0 %v4437
        %4657 = vmatprep.subr.bf16.mxu0 %v4434
        %4658 = vmatpush2.bf16.msra.mxu0 %v4433
        %4659 = vmatprep.subr.bf16.mxu0 %v4430
        %4660 = vmatpush2.bf16.msra.mxu0 %v4429
        %4661 = vmatprep.subr.bf16.mxu0 %v4426
        %4662 = vmatpush2.bf16.msra.mxu0 %v4425
        %4663 = vmatprep.subr.bf16.mxu0 %v4422
        %4664 = vmatpush2.bf16.msra.mxu0 %v4421
        %4665 = vmatprep.subr.bf16.mxu0 %v4418
        %4666 = vmatpush2.bf16.msra.mxu0 %v4417
        %4667 = vmatprep.subr.bf16.mxu0 %v4414
        %4668 = vmatpush2.bf16.msra.mxu0 %v4413
        %4669 = vmatprep.mubr.bf16.mxu0 %v2930
        %4670 = vmatmul.mubr.bf16.gmra.mxu0 %v2929
        %v4671 = vpop.f32.mrf.mxu0
        %v4672 = vadd.f32 %v3909, %v4671
        %v4673 = vpop.f32.mrf.mxu0
        %v4674 = vadd.f32 %v3911, %v4673
        %v4675 = vpop.f32.mrf.mxu0
        %v4676 = vpop.f32.mrf.mxu0
        %4677 = vdwg.mxu0
        %4678 = vmatprep.subr.bf16.mxu0 %v4474
        %4679 = vmatpush1.bf16.msra.mxu0 %v4473
        %4680 = vmatprep.subr.bf16.mxu0 %v4470
        %4681 = vmatpush1.bf16.msra.mxu0 %v4469
        %4682 = vmatprep.subr.bf16.mxu0 %v4466
        %4683 = vmatpush1.bf16.msra.mxu0 %v4465
        %4684 = vmatprep.subr.bf16.mxu0 %v4462
        %4685 = vmatpush1.bf16.msra.mxu0 %v4461
        %4686 = vmatprep.subr.bf16.mxu0 %v4458
        %4687 = vmatpush1.bf16.msra.mxu0 %v4457
        %4688 = vmatprep.subr.bf16.mxu0 %v4454
        %4689 = vmatpush1.bf16.msra.mxu0 %v4453
        %4690 = vmatprep.subr.bf16.mxu0 %v4450
        %4691 = vmatpush1.bf16.msra.mxu0 %v4449
        %4692 = vmatprep.subr.bf16.mxu0 %v4446
        %4693 = vmatpush1.bf16.msra.mxu0 %v4445
        %4694 = vmatprep.subr.bf16.mxu0 %v4506
        %4695 = vmatpush2.bf16.msra.mxu0 %v4505
        %4696 = vmatprep.subr.bf16.mxu0 %v4502
        %4697 = vmatpush2.bf16.msra.mxu0 %v4501
        %4698 = vmatprep.subr.bf16.mxu0 %v4498
        %4699 = vmatpush2.bf16.msra.mxu0 %v4497
        %4700 = vmatprep.subr.bf16.mxu0 %v4494
        %4701 = vmatpush2.bf16.msra.mxu0 %v4493
        %4702 = vmatprep.subr.bf16.mxu0 %v4490
        %4703 = vmatpush2.bf16.msra.mxu0 %v4489
        %4704 = vmatprep.subr.bf16.mxu0 %v4486
        %4705 = vmatpush2.bf16.msra.mxu0 %v4485
        %4706 = vmatprep.subr.bf16.mxu0 %v4482
        %4707 = vmatpush2.bf16.msra.mxu0 %v4481
        %4708 = vmatprep.subr.bf16.mxu0 %v4478
        %4709 = vmatpush2.bf16.msra.mxu0 %v4477
        %4710 = vmatprep.mubr.bf16.mxu0 %v2932
        %4711 = vmatmul.mubr.bf16.gmra.mxu0 %v2931
        %v4712 = vpop.f32.mrf.mxu0
        %v4713 = vadd.f32 %v4672, %v4712
        %v4714 = vpop.f32.mrf.mxu0
        %v4715 = vadd.f32 %v4674, %v4714
        %v4716 = vpop.f32.mrf.mxu0
        %v4717 = vpop.f32.mrf.mxu0
        %4718 = vdwg.mxu0
        %4719 = vmatprep.subr.bf16.mxu0 %v4412
        %4720 = vmatpush1.bf16.msra.mxu0 %v4411
        %4721 = vmatprep.subr.bf16.mxu0 %v4408
        %4722 = vmatpush1.bf16.msra.mxu0 %v4407
        %4723 = vmatprep.subr.bf16.mxu0 %v4404
        %4724 = vmatpush1.bf16.msra.mxu0 %v4403
        %4725 = vmatprep.subr.bf16.mxu0 %v4400
        %4726 = vmatpush1.bf16.msra.mxu0 %v4399
        %4727 = vmatprep.subr.bf16.mxu0 %v4396
        %4728 = vmatpush1.bf16.msra.mxu0 %v4395
        %4729 = vmatprep.subr.bf16.mxu0 %v4392
        %4730 = vmatpush1.bf16.msra.mxu0 %v4391
        %4731 = vmatprep.subr.bf16.mxu0 %v4388
        %4732 = vmatpush1.bf16.msra.mxu0 %v4387
        %4733 = vmatprep.subr.bf16.mxu0 %v4384
        %4734 = vmatpush1.bf16.msra.mxu0 %v4383
        %4735 = vmatprep.subr.bf16.mxu0 %v4444
        %4736 = vmatpush2.bf16.msra.mxu0 %v4443
        %4737 = vmatprep.subr.bf16.mxu0 %v4440
        %4738 = vmatpush2.bf16.msra.mxu0 %v4439
        %4739 = vmatprep.subr.bf16.mxu0 %v4436
        %4740 = vmatpush2.bf16.msra.mxu0 %v4435
        %4741 = vmatprep.subr.bf16.mxu0 %v4432
        %4742 = vmatpush2.bf16.msra.mxu0 %v4431
        %4743 = vmatprep.subr.bf16.mxu0 %v4428
        %4744 = vmatpush2.bf16.msra.mxu0 %v4427
        %4745 = vmatprep.subr.bf16.mxu0 %v4424
        %4746 = vmatpush2.bf16.msra.mxu0 %v4423
        %4747 = vmatprep.subr.bf16.mxu0 %v4420
        %4748 = vmatpush2.bf16.msra.mxu0 %v4419
        %4749 = vmatprep.subr.bf16.mxu0 %v4416
        %4750 = vmatpush2.bf16.msra.mxu0 %v4415
        %4751 = vmatprep.mubr.bf16.mxu0 %v2930
        %4752 = vmatmul.mubr.bf16.gmra.mxu0 %v2929
        %v4753 = vpop.f32.mrf.mxu0
        %v4754 = vadd.f32 %v3991, %v4753
        %v4755 = vpop.f32.mrf.mxu0
        %v4756 = vadd.f32 %v3993, %v4755
        %v4757 = vpop.f32.mrf.mxu0
        %v4758 = vpop.f32.mrf.mxu0
        %4759 = vdwg.mxu0
        %4760 = vmatprep.subr.bf16.mxu0 %v4476
        %4761 = vmatpush1.bf16.msra.mxu0 %v4475
        %4762 = vmatprep.subr.bf16.mxu0 %v4472
        %4763 = vmatpush1.bf16.msra.mxu0 %v4471
        %4764 = vmatprep.subr.bf16.mxu0 %v4468
        %4765 = vmatpush1.bf16.msra.mxu0 %v4467
        %4766 = vmatprep.subr.bf16.mxu0 %v4464
        %4767 = vmatpush1.bf16.msra.mxu0 %v4463
        %4768 = vmatprep.subr.bf16.mxu0 %v4460
        %4769 = vmatpush1.bf16.msra.mxu0 %v4459
        %4770 = vmatprep.subr.bf16.mxu0 %v4456
        %4771 = vmatpush1.bf16.msra.mxu0 %v4455
        %4772 = vmatprep.subr.bf16.mxu0 %v4452
        %4773 = vmatpush1.bf16.msra.mxu0 %v4451
        %4774 = vmatprep.subr.bf16.mxu0 %v4448
        %4775 = vmatpush1.bf16.msra.mxu0 %v4447
        %4776 = vmatprep.subr.bf16.mxu0 %v4508
        %4777 = vmatpush2.bf16.msra.mxu0 %v4507
        %4778 = vmatprep.subr.bf16.mxu0 %v4504
        %4779 = vmatpush2.bf16.msra.mxu0 %v4503
        %4780 = vmatprep.subr.bf16.mxu0 %v4500
        %4781 = vmatpush2.bf16.msra.mxu0 %v4499
        %4782 = vmatprep.subr.bf16.mxu0 %v4496
        %4783 = vmatpush2.bf16.msra.mxu0 %v4495
        %4784 = vmatprep.subr.bf16.mxu0 %v4492
        %4785 = vmatpush2.bf16.msra.mxu0 %v4491
        %4786 = vmatprep.subr.bf16.mxu0 %v4488
        %4787 = vmatpush2.bf16.msra.mxu0 %v4487
        %4788 = vmatprep.subr.bf16.mxu0 %v4484
        %4789 = vmatpush2.bf16.msra.mxu0 %v4483
        %4790 = vmatprep.subr.bf16.mxu0 %v4480
        %4791 = vmatpush2.bf16.msra.mxu0 %v4479
        %4792 = vmatprep.mubr.bf16.mxu0 %v2932
        %4793 = vmatmul.mubr.bf16.gmra.mxu0 %v2931
        %v4794 = vpop.f32.mrf.mxu0
        %v4795 = vadd.f32 %v4754, %v4794
        %v4796 = vpop.f32.mrf.mxu0
        %v4797 = vadd.f32 %v4756, %v4796
        %v4798 = vpop.f32.mrf.mxu0
        %v4799 = vpop.f32.mrf.mxu0
        %4800 = vdwg.mxu0
        %v4801 = vld [vmem:[%s10] sm:$0xf]
        %v4803 = vlaneseq
        %v4804 = vshrl.u32 %v4803, 7
        %v4805 = vsub.s32 0, %v4804
        %v4806 = vrot.slane %v4801, %v4805
        %v4807 = vlaneseq
        %v4808 = vshrl.u32 %v4807, 7
        %v4809 = vsub.s32 1, %v4808
        %v4810 = vrot.slane %v4801, %v4809
        %v4811 = vlaneseq
        %v4812 = vshrl.u32 %v4811, 7
        %v4813 = vsub.s32 2, %v4812
        %v4814 = vrot.slane %v4801, %v4813
        %v4815 = vlaneseq
        %v4816 = vshrl.u32 %v4815, 7
        %v4817 = vsub.s32 3, %v4816
        %v4818 = vrot.slane %v4801, %v4817
        %v4823 = vadd.f32 %v4713, %v4806
        %v4824 = vadd.f32 %v4715, %v4810
        %v4825 = vadd.f32 %v4795, %v4814
        %v4826 = vadd.f32 %v4797, %v4818
        %v4827 = vpack.c.bf16 %v4823, %v4823
        %v4828 = vpack.c.bf16 %v4824, %v4824
        %v4829 = vpack.c.bf16 %v4825, %v4825
        %v4830 = vpack.c.bf16 %v4826, %v4826
        %v4831 = vld [vmem:[%s11] sm:$0xff]
        %v4832 = vld [vmem:[%s11 + $0x8] sm:$0xff]
        %v4833 = vld [vmem:[%s11 + $0x10] sm:$0xff]
        %v4834 = vld [vmem:[%s11 + $0x18] sm:$0xff]
        %v4835 = vld [vmem:[%s11 + $0x20] sm:$0xff]
        %v4836 = vld [vmem:[%s11 + $0x28] sm:$0xff]
        %v4837 = vld [vmem:[%s11 + $0x30] sm:$0xff]
        %v4838 = vld [vmem:[%s11 + $0x38] sm:$0xff]
        %v4839 = vld [vmem:[%s11 + $0x40] sm:$0xff]
        %v4840 = vld [vmem:[%s11 + $0x48] sm:$0xff]
        %v4841 = vld [vmem:[%s11 + $0x50] sm:$0xff]
        %v4842 = vld [vmem:[%s11 + $0x58] sm:$0xff]
        %v4843 = vld [vmem:[%s11 + $0x60] sm:$0xff]
        %v4844 = vld [vmem:[%s11 + $0x68] sm:$0xff]
        %v4845 = vld [vmem:[%s11 + $0x70] sm:$0xff]
        %v4846 = vld [vmem:[%s11 + $0x78] sm:$0xff]
        %v4847 = vld [vmem:[%s11 + $0x80] sm:$0xff]
        %v4848 = vld [vmem:[%s11 + $0x88] sm:$0xff]
        %v4849 = vld [vmem:[%s11 + $0x90] sm:$0xff]
        %v4850 = vld [vmem:[%s11 + $0x98] sm:$0xff]
        %v4851 = vld [vmem:[%s11 + $0xa0] sm:$0xff]
        %v4852 = vld [vmem:[%s11 + $0xa8] sm:$0xff]
        %v4853 = vld [vmem:[%s11 + $0xb0] sm:$0xff]
        %v4854 = vld [vmem:[%s11 + $0xb8] sm:$0xff]
        %v4855 = vld [vmem:[%s11 + $0xc0] sm:$0xff]
        %v4856 = vld [vmem:[%s11 + $0xc8] sm:$0xff]
        %v4857 = vld [vmem:[%s11 + $0xd0] sm:$0xff]
        %v4858 = vld [vmem:[%s11 + $0xd8] sm:$0xff]
        %v4859 = vld [vmem:[%s11 + $0xe0] sm:$0xff]
        %v4860 = vld [vmem:[%s11 + $0xe8] sm:$0xff]
        %v4861 = vld [vmem:[%s11 + $0xf0] sm:$0xff]
        %v4862 = vld [vmem:[%s11 + $0xf8] sm:$0xff]
        %v4863 = vld [vmem:[%s11 + $0x100] sm:$0xff]
        %v4864 = vld [vmem:[%s11 + $0x108] sm:$0xff]
        %v4865 = vld [vmem:[%s11 + $0x110] sm:$0xff]
        %v4866 = vld [vmem:[%s11 + $0x118] sm:$0xff]
        %v4867 = vld [vmem:[%s11 + $0x120] sm:$0xff]
        %v4868 = vld [vmem:[%s11 + $0x128] sm:$0xff]
        %v4869 = vld [vmem:[%s11 + $0x130] sm:$0xff]
        %v4870 = vld [vmem:[%s11 + $0x138] sm:$0xff]
        %v4871 = vld [vmem:[%s11 + $0x140] sm:$0xff]
        %v4872 = vld [vmem:[%s11 + $0x148] sm:$0xff]
        %v4873 = vld [vmem:[%s11 + $0x150] sm:$0xff]
        %v4874 = vld [vmem:[%s11 + $0x158] sm:$0xff]
        %v4875 = vld [vmem:[%s11 + $0x160] sm:$0xff]
        %v4876 = vld [vmem:[%s11 + $0x168] sm:$0xff]
        %v4877 = vld [vmem:[%s11 + $0x170] sm:$0xff]
        %v4878 = vld [vmem:[%s11 + $0x178] sm:$0xff]
        %v4879 = vld [vmem:[%s11 + $0x180] sm:$0xff]
        %v4880 = vld [vmem:[%s11 + $0x188] sm:$0xff]
        %v4881 = vld [vmem:[%s11 + $0x190] sm:$0xff]
        %v4882 = vld [vmem:[%s11 + $0x198] sm:$0xff]
        %v4883 = vld [vmem:[%s11 + $0x1a0] sm:$0xff]
        %v4884 = vld [vmem:[%s11 + $0x1a8] sm:$0xff]
        %v4885 = vld [vmem:[%s11 + $0x1b0] sm:$0xff]
        %v4886 = vld [vmem:[%s11 + $0x1b8] sm:$0xff]
        %v4887 = vld [vmem:[%s11 + $0x1c0] sm:$0xff]
        %v4888 = vld [vmem:[%s11 + $0x1c8] sm:$0xff]
        %v4889 = vld [vmem:[%s11 + $0x1d0] sm:$0xff]
        %v4890 = vld [vmem:[%s11 + $0x1d8] sm:$0xff]
        %v4891 = vld [vmem:[%s11 + $0x1e0] sm:$0xff]
        %v4892 = vld [vmem:[%s11 + $0x1e8] sm:$0xff]
        %v4893 = vld [vmem:[%s11 + $0x1f0] sm:$0xff]
        %v4894 = vld [vmem:[%s11 + $0x1f8] sm:$0xff]
        %v4895 = vld [vmem:[%s12] sm:$0x3]
        %v4960 = vunpack.c.l.b16 %v4831
        %v4961 = vunpack.c.h.b16 %v4831
        %v4962 = vunpack.c.l.b16 %v4832
        %v4963 = vunpack.c.h.b16 %v4832
        %v4964 = vunpack.c.l.b16 %v4833
        %v4965 = vunpack.c.h.b16 %v4833
        %v4966 = vunpack.c.l.b16 %v4834
        %v4967 = vunpack.c.h.b16 %v4834
        %v4968 = vunpack.c.l.b16 %v4835
        %v4969 = vunpack.c.h.b16 %v4835
        %v4970 = vunpack.c.l.b16 %v4836
        %v4971 = vunpack.c.h.b16 %v4836
        %v4972 = vunpack.c.l.b16 %v4837
        %v4973 = vunpack.c.h.b16 %v4837
        %v4974 = vunpack.c.l.b16 %v4838
        %v4975 = vunpack.c.h.b16 %v4838
        %v4976 = vunpack.c.l.b16 %v4839
        %v4977 = vunpack.c.h.b16 %v4839
        %v4978 = vunpack.c.l.b16 %v4840
        %v4979 = vunpack.c.h.b16 %v4840
        %v4980 = vunpack.c.l.b16 %v4841
        %v4981 = vunpack.c.h.b16 %v4841
        %v4982 = vunpack.c.l.b16 %v4842
        %v4983 = vunpack.c.h.b16 %v4842
        %v4984 = vunpack.c.l.b16 %v4843
        %v4985 = vunpack.c.h.b16 %v4843
        %v4986 = vunpack.c.l.b16 %v4844
        %v4987 = vunpack.c.h.b16 %v4844
        %v4988 = vunpack.c.l.b16 %v4845
        %v4989 = vunpack.c.h.b16 %v4845
        %v4990 = vunpack.c.l.b16 %v4846
        %v4991 = vunpack.c.h.b16 %v4846
        %v4992 = vunpack.c.l.b16 %v4847
        %v4993 = vunpack.c.h.b16 %v4847
        %v4994 = vunpack.c.l.b16 %v4848
        %v4995 = vunpack.c.h.b16 %v4848
        %v4996 = vunpack.c.l.b16 %v4849
        %v4997 = vunpack.c.h.b16 %v4849
        %v4998 = vunpack.c.l.b16 %v4850
        %v4999 = vunpack.c.h.b16 %v4850
        %v5000 = vunpack.c.l.b16 %v4851
        %v5001 = vunpack.c.h.b16 %v4851
        %v5002 = vunpack.c.l.b16 %v4852
        %v5003 = vunpack.c.h.b16 %v4852
        %v5004 = vunpack.c.l.b16 %v4853
        %v5005 = vunpack.c.h.b16 %v4853
        %v5006 = vunpack.c.l.b16 %v4854
        %v5007 = vunpack.c.h.b16 %v4854
        %v5008 = vunpack.c.l.b16 %v4855
        %v5009 = vunpack.c.h.b16 %v4855
        %v5010 = vunpack.c.l.b16 %v4856
        %v5011 = vunpack.c.h.b16 %v4856
        %v5012 = vunpack.c.l.b16 %v4857
        %v5013 = vunpack.c.h.b16 %v4857
        %v5014 = vunpack.c.l.b16 %v4858
        %v5015 = vunpack.c.h.b16 %v4858
        %v5016 = vunpack.c.l.b16 %v4859
        %v5017 = vunpack.c.h.b16 %v4859
        %v5018 = vunpack.c.l.b16 %v4860
        %v5019 = vunpack.c.h.b16 %v4860
        %v5020 = vunpack.c.l.b16 %v4861
        %v5021 = vunpack.c.h.b16 %v4861
        %v5022 = vunpack.c.l.b16 %v4862
        %v5023 = vunpack.c.h.b16 %v4862
        %v5024 = vunpack.c.l.b16 %v4863
        %v5025 = vunpack.c.h.b16 %v4863
        %v5026 = vunpack.c.l.b16 %v4864
        %v5027 = vunpack.c.h.b16 %v4864
        %v5028 = vunpack.c.l.b16 %v4865
        %v5029 = vunpack.c.h.b16 %v4865
        %v5030 = vunpack.c.l.b16 %v4866
        %v5031 = vunpack.c.h.b16 %v4866
        %v5032 = vunpack.c.l.b16 %v4867
        %v5033 = vunpack.c.h.b16 %v4867
        %v5034 = vunpack.c.l.b16 %v4868
        %v5035 = vunpack.c.h.b16 %v4868
        %v5036 = vunpack.c.l.b16 %v4869
        %v5037 = vunpack.c.h.b16 %v4869
        %v5038 = vunpack.c.l.b16 %v4870
        %v5039 = vunpack.c.h.b16 %v4870
        %v5040 = vunpack.c.l.b16 %v4871
        %v5041 = vunpack.c.h.b16 %v4871
        %v5042 = vunpack.c.l.b16 %v4872
        %v5043 = vunpack.c.h.b16 %v4872
        %v5044 = vunpack.c.l.b16 %v4873
        %v5045 = vunpack.c.h.b16 %v4873
        %v5046 = vunpack.c.l.b16 %v4874
        %v5047 = vunpack.c.h.b16 %v4874
        %v5048 = vunpack.c.l.b16 %v4875
        %v5049 = vunpack.c.h.b16 %v4875
        %v5050 = vunpack.c.l.b16 %v4876
        %v5051 = vunpack.c.h.b16 %v4876
        %v5052 = vunpack.c.l.b16 %v4877
        %v5053 = vunpack.c.h.b16 %v4877
        %v5054 = vunpack.c.l.b16 %v4878
        %v5055 = vunpack.c.h.b16 %v4878
        %v5056 = vunpack.c.l.b16 %v4879
        %v5057 = vunpack.c.h.b16 %v4879
        %v5058 = vunpack.c.l.b16 %v4880
        %v5059 = vunpack.c.h.b16 %v4880
        %v5060 = vunpack.c.l.b16 %v4881
        %v5061 = vunpack.c.h.b16 %v4881
        %v5062 = vunpack.c.l.b16 %v4882
        %v5063 = vunpack.c.h.b16 %v4882
        %v5064 = vunpack.c.l.b16 %v4883
        %v5065 = vunpack.c.h.b16 %v4883
        %v5066 = vunpack.c.l.b16 %v4884
        %v5067 = vunpack.c.h.b16 %v4884
        %v5068 = vunpack.c.l.b16 %v4885
        %v5069 = vunpack.c.h.b16 %v4885
        %v5070 = vunpack.c.l.b16 %v4886
        %v5071 = vunpack.c.h.b16 %v4886
        %v5072 = vunpack.c.l.b16 %v4887
        %v5073 = vunpack.c.h.b16 %v4887
        %v5074 = vunpack.c.l.b16 %v4888
        %v5075 = vunpack.c.h.b16 %v4888
        %v5076 = vunpack.c.l.b16 %v4889
        %v5077 = vunpack.c.h.b16 %v4889
        %v5078 = vunpack.c.l.b16 %v4890
        %v5079 = vunpack.c.h.b16 %v4890
        %v5080 = vunpack.c.l.b16 %v4891
        %v5081 = vunpack.c.h.b16 %v4891
        %v5082 = vunpack.c.l.b16 %v4892
        %v5083 = vunpack.c.h.b16 %v4892
        %v5084 = vunpack.c.l.b16 %v4893
        %v5085 = vunpack.c.h.b16 %v4893
        %v5086 = vunpack.c.l.b16 %v4894
        %v5087 = vunpack.c.h.b16 %v4894
        %v5088 = vpack.c.b16 %v4962, %v4960
        %v5089 = vpack.c.b16 %v4963, %v4961
        %v5090 = vpack.c.b16 %v4966, %v4964
        %v5091 = vpack.c.b16 %v4967, %v4965
        %v5092 = vpack.c.b16 %v4970, %v4968
        %v5093 = vpack.c.b16 %v4971, %v4969
        %v5094 = vpack.c.b16 %v4974, %v4972
        %v5095 = vpack.c.b16 %v4975, %v4973
        %v5096 = vpack.c.b16 %v4978, %v4976
        %v5097 = vpack.c.b16 %v4979, %v4977
        %v5098 = vpack.c.b16 %v4982, %v4980
        %v5099 = vpack.c.b16 %v4983, %v4981
        %v5100 = vpack.c.b16 %v4986, %v4984
        %v5101 = vpack.c.b16 %v4987, %v4985
        %v5102 = vpack.c.b16 %v4990, %v4988
        %v5103 = vpack.c.b16 %v4991, %v4989
        %v5104 = vpack.c.b16 %v4994, %v4992
        %v5105 = vpack.c.b16 %v4995, %v4993
        %v5106 = vpack.c.b16 %v4998, %v4996
        %v5107 = vpack.c.b16 %v4999, %v4997
        %v5108 = vpack.c.b16 %v5002, %v5000
        %v5109 = vpack.c.b16 %v5003, %v5001
        %v5110 = vpack.c.b16 %v5006, %v5004
        %v5111 = vpack.c.b16 %v5007, %v5005
        %v5112 = vpack.c.b16 %v5010, %v5008
        %v5113 = vpack.c.b16 %v5011, %v5009
        %v5114 = vpack.c.b16 %v5014, %v5012
        %v5115 = vpack.c.b16 %v5015, %v5013
        %v5116 = vpack.c.b16 %v5018, %v5016
        %v5117 = vpack.c.b16 %v5019, %v5017
        %v5118 = vpack.c.b16 %v5022, %v5020
        %v5119 = vpack.c.b16 %v5023, %v5021
        %v5120 = vpack.c.b16 %v5026, %v5024
        %v5121 = vpack.c.b16 %v5027, %v5025
        %v5122 = vpack.c.b16 %v5030, %v5028
        %v5123 = vpack.c.b16 %v5031, %v5029
        %v5124 = vpack.c.b16 %v5034, %v5032
        %v5125 = vpack.c.b16 %v5035, %v5033
        %v5126 = vpack.c.b16 %v5038, %v5036
        %v5127 = vpack.c.b16 %v5039, %v5037
        %v5128 = vpack.c.b16 %v5042, %v5040
        %v5129 = vpack.c.b16 %v5043, %v5041
        %v5130 = vpack.c.b16 %v5046, %v5044
        %v5131 = vpack.c.b16 %v5047, %v5045
        %v5132 = vpack.c.b16 %v5050, %v5048
        %v5133 = vpack.c.b16 %v5051, %v5049
        %v5134 = vpack.c.b16 %v5054, %v5052
        %v5135 = vpack.c.b16 %v5055, %v5053
        %v5136 = vpack.c.b16 %v5058, %v5056
        %v5137 = vpack.c.b16 %v5059, %v5057
        %v5138 = vpack.c.b16 %v5062, %v5060
        %v5139 = vpack.c.b16 %v5063, %v5061
        %v5140 = vpack.c.b16 %v5066, %v5064
        %v5141 = vpack.c.b16 %v5067, %v5065
        %v5142 = vpack.c.b16 %v5070, %v5068
        %v5143 = vpack.c.b16 %v5071, %v5069
        %v5144 = vpack.c.b16 %v5074, %v5072
        %v5145 = vpack.c.b16 %v5075, %v5073
        %v5146 = vpack.c.b16 %v5078, %v5076
        %v5147 = vpack.c.b16 %v5079, %v5077
        %v5148 = vpack.c.b16 %v5082, %v5080
        %v5149 = vpack.c.b16 %v5083, %v5081
        %v5150 = vpack.c.b16 %v5086, %v5084
        %v5151 = vpack.c.b16 %v5087, %v5085
        %v5217 = vlaneseq
        %v5218 = vshrl.u32 %v5217, 7
        %v5219 = vsub.s32 0, %v5218
        %v5220 = vrot.slane %v4895, %v5219
        %v5221 = vlaneseq
        %v5222 = vshrl.u32 %v5221, 7
        %v5223 = vsub.s32 1, %v5222
        %v5224 = vrot.slane %v4895, %v5223
        %5227 = vmatprep.subr.bf16.mxu0 %v5103
        %5228 = vmatpush1.bf16.msra.mxu0 %v5102
        %5229 = vmatprep.subr.bf16.mxu0 %v5101
        %5230 = vmatpush1.bf16.msra.mxu0 %v5100
        %5231 = vmatprep.subr.bf16.mxu0 %v5099
        %5232 = vmatpush1.bf16.msra.mxu0 %v5098
        %5233 = vmatprep.subr.bf16.mxu0 %v5097
        %5234 = vmatpush1.bf16.msra.mxu0 %v5096
        %5235 = vmatprep.subr.bf16.mxu0 %v5095
        %5236 = vmatpush1.bf16.msra.mxu0 %v5094
        %5237 = vmatprep.subr.bf16.mxu0 %v5093
        %5238 = vmatpush1.bf16.msra.mxu0 %v5092
        %5239 = vmatprep.subr.bf16.mxu0 %v5091
        %5240 = vmatpush1.bf16.msra.mxu0 %v5090
        %5241 = vmatprep.subr.bf16.mxu0 %v5089
        %5242 = vmatpush1.bf16.msra.mxu0 %v5088
        %5243 = vmatprep.subr.bf16.mxu0 %v5119
        %5244 = vmatpush2.bf16.msra.mxu0 %v5118
        %5245 = vmatprep.subr.bf16.mxu0 %v5117
        %5246 = vmatpush2.bf16.msra.mxu0 %v5116
        %5247 = vmatprep.subr.bf16.mxu0 %v5115
        %5248 = vmatpush2.bf16.msra.mxu0 %v5114
        %5249 = vmatprep.subr.bf16.mxu0 %v5113
        %5250 = vmatpush2.bf16.msra.mxu0 %v5112
        %5251 = vmatprep.subr.bf16.mxu0 %v5111
        %5252 = vmatpush2.bf16.msra.mxu0 %v5110
        %5253 = vmatprep.subr.bf16.mxu0 %v5109
        %5254 = vmatpush2.bf16.msra.mxu0 %v5108
        %5255 = vmatprep.subr.bf16.mxu0 %v5107
        %5256 = vmatpush2.bf16.msra.mxu0 %v5106
        %5257 = vmatprep.subr.bf16.mxu0 %v5105
        %5258 = vmatpush2.bf16.msra.mxu0 %v5104
        %5259 = vmatprep.mubr.bf16.mxu0 %v4828
        %5260 = vmatmul.mubr.bf16.gmra.mxu0 %v4827
        %v5261 = vpop.f32.mrf.mxu0
        %v5262 = vadd.f32 %v5220, %v5261
        %v5263 = vpop.f32.mrf.mxu0
        %v5264 = vadd.f32 %v5224, %v5263
        %v5265 = vpop.f32.mrf.mxu0
        %v5266 = vpop.f32.mrf.mxu0
        %5267 = vdwg.mxu0
        %5268 = vmatprep.subr.bf16.mxu0 %v5135
        %5269 = vmatpush1.bf16.msra.mxu0 %v5134
        %5270 = vmatprep.subr.bf16.mxu0 %v5133
        %5271 = vmatpush1.bf16.msra.mxu0 %v5132
        %5272 = vmatprep.subr.bf16.mxu0 %v5131
        %5273 = vmatpush1.bf16.msra.mxu0 %v5130
        %5274 = vmatprep.subr.bf16.mxu0 %v5129
        %5275 = vmatpush1.bf16.msra.mxu0 %v5128
        %5276 = vmatprep.subr.bf16.mxu0 %v5127
        %5277 = vmatpush1.bf16.msra.mxu0 %v5126
        %5278 = vmatprep.subr.bf16.mxu0 %v5125
        %5279 = vmatpush1.bf16.msra.mxu0 %v5124
        %5280 = vmatprep.subr.bf16.mxu0 %v5123
        %5281 = vmatpush1.bf16.msra.mxu0 %v5122
        %5282 = vmatprep.subr.bf16.mxu0 %v5121
        %5283 = vmatpush1.bf16.msra.mxu0 %v5120
        %5284 = vmatprep.subr.bf16.mxu0 %v5151
        %5285 = vmatpush2.bf16.msra.mxu0 %v5150
        %5286 = vmatprep.subr.bf16.mxu0 %v5149
        %5287 = vmatpush2.bf16.msra.mxu0 %v5148
        %5288 = vmatprep.subr.bf16.mxu0 %v5147
        %5289 = vmatpush2.bf16.msra.mxu0 %v5146
        %5290 = vmatprep.subr.bf16.mxu0 %v5145
        %5291 = vmatpush2.bf16.msra.mxu0 %v5144
        %5292 = vmatprep.subr.bf16.mxu0 %v5143
        %5293 = vmatpush2.bf16.msra.mxu0 %v5142
        %5294 = vmatprep.subr.bf16.mxu0 %v5141
        %5295 = vmatpush2.bf16.msra.mxu0 %v5140
        %5296 = vmatprep.subr.bf16.mxu0 %v5139
        %5297 = vmatpush2.bf16.msra.mxu0 %v5138
        %5298 = vmatprep.subr.bf16.mxu0 %v5137
        %5299 = vmatpush2.bf16.msra.mxu0 %v5136
        %5300 = vmatprep.mubr.bf16.mxu0 %v4830
        %5301 = vmatmul.mubr.bf16.gmra.mxu0 %v4829
        %v5302 = vpop.f32.mrf.mxu0
        %v5303 = vadd.f32 %v5262, %v5302
        %v5304 = vpop.f32.mrf.mxu0
        %v5305 = vadd.f32 %v5264, %v5304
        %v5306 = vpop.f32.mrf.mxu0
        %v5307 = vpop.f32.mrf.mxu0
        %5308 = vdwg.mxu0
        %v5309 = vmax.f32 %v5303, 0.0
        %v5310 = vmax.f32 %v5305, 0.0
        %v5311 = vpack.c.bf16 %v5309, %v5309
        %v5312 = vpack.c.bf16 %v5310, %v5310
        %v5313 = vld [vmem:[%s13] sm:$0xff]
        %v5314 = vld [vmem:[%s13 + $0x8] sm:$0xff]
        %v5315 = vld [vmem:[%s13 + $0x10] sm:$0xff]
        %v5316 = vld [vmem:[%s13 + $0x18] sm:$0xff]
        %v5317 = vld [vmem:[%s13 + $0x20] sm:$0xff]
        %v5318 = vld [vmem:[%s13 + $0x28] sm:$0xff]
        %v5319 = vld [vmem:[%s13 + $0x30] sm:$0xff]
        %v5320 = vld [vmem:[%s13 + $0x38] sm:$0xff]
        %v5321 = vld [vmem:[%s13 + $0x40] sm:$0xff]
        %v5322 = vld [vmem:[%s13 + $0x48] sm:$0xff]
        %v5323 = vld [vmem:[%s13 + $0x50] sm:$0xff]
        %v5324 = vld [vmem:[%s13 + $0x58] sm:$0xff]
        %v5325 = vld [vmem:[%s13 + $0x60] sm:$0xff]
        %v5326 = vld [vmem:[%s13 + $0x68] sm:$0xff]
        %v5327 = vld [vmem:[%s13 + $0x70] sm:$0xff]
        %v5328 = vld [vmem:[%s13 + $0x78] sm:$0xff]
        %v5329 = vld [vmem:[%s13 + $0x80] sm:$0xff]
        %v5330 = vld [vmem:[%s13 + $0x88] sm:$0xff]
        %v5331 = vld [vmem:[%s13 + $0x90] sm:$0xff]
        %v5332 = vld [vmem:[%s13 + $0x98] sm:$0xff]
        %v5333 = vld [vmem:[%s13 + $0xa0] sm:$0xff]
        %v5334 = vld [vmem:[%s13 + $0xa8] sm:$0xff]
        %v5335 = vld [vmem:[%s13 + $0xb0] sm:$0xff]
        %v5336 = vld [vmem:[%s13 + $0xb8] sm:$0xff]
        %v5337 = vld [vmem:[%s13 + $0xc0] sm:$0xff]
        %v5338 = vld [vmem:[%s13 + $0xc8] sm:$0xff]
        %v5339 = vld [vmem:[%s13 + $0xd0] sm:$0xff]
        %v5340 = vld [vmem:[%s13 + $0xd8] sm:$0xff]
        %v5341 = vld [vmem:[%s13 + $0xe0] sm:$0xff]
        %v5342 = vld [vmem:[%s13 + $0xe8] sm:$0xff]
        %v5343 = vld [vmem:[%s13 + $0xf0] sm:$0xff]
        %v5344 = vld [vmem:[%s13 + $0xf8] sm:$0xff]
        %v5345 = vld [vmem:[%s14] sm:$0x3]
        %v5378 = vunpack.c.l.b16 %v5313
        %v5379 = vunpack.c.h.b16 %v5313
        %v5380 = vunpack.c.l.b16 %v5314
        %v5381 = vunpack.c.h.b16 %v5314
        %v5382 = vunpack.c.l.b16 %v5315
        %v5383 = vunpack.c.h.b16 %v5315
        %v5384 = vunpack.c.l.b16 %v5316
        %v5385 = vunpack.c.h.b16 %v5316
        %v5386 = vunpack.c.l.b16 %v5317
        %v5387 = vunpack.c.h.b16 %v5317
        %v5388 = vunpack.c.l.b16 %v5318
        %v5389 = vunpack.c.h.b16 %v5318
        %v5390 = vunpack.c.l.b16 %v5319
        %v5391 = vunpack.c.h.b16 %v5319
        %v5392 = vunpack.c.l.b16 %v5320
        %v5393 = vunpack.c.h.b16 %v5320
        %v5394 = vunpack.c.l.b16 %v5321
        %v5395 = vunpack.c.h.b16 %v5321
        %v5396 = vunpack.c.l.b16 %v5322
        %v5397 = vunpack.c.h.b16 %v5322
        %v5398 = vunpack.c.l.b16 %v5323
        %v5399 = vunpack.c.h.b16 %v5323
        %v5400 = vunpack.c.l.b16 %v5324
        %v5401 = vunpack.c.h.b16 %v5324
        %v5402 = vunpack.c.l.b16 %v5325
        %v5403 = vunpack.c.h.b16 %v5325
        %v5404 = vunpack.c.l.b16 %v5326
        %v5405 = vunpack.c.h.b16 %v5326
        %v5406 = vunpack.c.l.b16 %v5327
        %v5407 = vunpack.c.h.b16 %v5327
        %v5408 = vunpack.c.l.b16 %v5328
        %v5409 = vunpack.c.h.b16 %v5328
        %v5410 = vunpack.c.l.b16 %v5329
        %v5411 = vunpack.c.h.b16 %v5329
        %v5412 = vunpack.c.l.b16 %v5330
        %v5413 = vunpack.c.h.b16 %v5330
        %v5414 = vunpack.c.l.b16 %v5331
        %v5415 = vunpack.c.h.b16 %v5331
        %v5416 = vunpack.c.l.b16 %v5332
        %v5417 = vunpack.c.h.b16 %v5332
        %v5418 = vunpack.c.l.b16 %v5333
        %v5419 = vunpack.c.h.b16 %v5333
        %v5420 = vunpack.c.l.b16 %v5334
        %v5421 = vunpack.c.h.b16 %v5334
        %v5422 = vunpack.c.l.b16 %v5335
        %v5423 = vunpack.c.h.b16 %v5335
        %v5424 = vunpack.c.l.b16 %v5336
        %v5425 = vunpack.c.h.b16 %v5336
        %v5426 = vunpack.c.l.b16 %v5337
        %v5427 = vunpack.c.h.b16 %v5337
        %v5428 = vunpack.c.l.b16 %v5338
        %v5429 = vunpack.c.h.b16 %v5338
        %v5430 = vunpack.c.l.b16 %v5339
        %v5431 = vunpack.c.h.b16 %v5339
        %v5432 = vunpack.c.l.b16 %v5340
        %v5433 = vunpack.c.h.b16 %v5340
        %v5434 = vunpack.c.l.b16 %v5341
        %v5435 = vunpack.c.h.b16 %v5341
        %v5436 = vunpack.c.l.b16 %v5342
        %v5437 = vunpack.c.h.b16 %v5342
        %v5438 = vunpack.c.l.b16 %v5343
        %v5439 = vunpack.c.h.b16 %v5343
        %v5440 = vunpack.c.l.b16 %v5344
        %v5441 = vunpack.c.h.b16 %v5344
        %v5442 = vpack.c.b16 %v5380, %v5378
        %v5443 = vpack.c.b16 %v5381, %v5379
        %v5444 = vpack.c.b16 %v5384, %v5382
        %v5445 = vpack.c.b16 %v5385, %v5383
        %v5446 = vpack.c.b16 %v5388, %v5386
        %v5447 = vpack.c.b16 %v5389, %v5387
        %v5448 = vpack.c.b16 %v5392, %v5390
        %v5449 = vpack.c.b16 %v5393, %v5391
        %v5450 = vpack.c.b16 %v5396, %v5394
        %v5451 = vpack.c.b16 %v5397, %v5395
        %v5452 = vpack.c.b16 %v5400, %v5398
        %v5453 = vpack.c.b16 %v5401, %v5399
        %v5454 = vpack.c.b16 %v5404, %v5402
        %v5455 = vpack.c.b16 %v5405, %v5403
        %v5456 = vpack.c.b16 %v5408, %v5406
        %v5457 = vpack.c.b16 %v5409, %v5407
        %v5458 = vpack.c.b16 %v5412, %v5410
        %v5459 = vpack.c.b16 %v5413, %v5411
        %v5460 = vpack.c.b16 %v5416, %v5414
        %v5461 = vpack.c.b16 %v5417, %v5415
        %v5462 = vpack.c.b16 %v5420, %v5418
        %v5463 = vpack.c.b16 %v5421, %v5419
        %v5464 = vpack.c.b16 %v5424, %v5422
        %v5465 = vpack.c.b16 %v5425, %v5423
        %v5466 = vpack.c.b16 %v5428, %v5426
        %v5467 = vpack.c.b16 %v5429, %v5427
        %v5468 = vpack.c.b16 %v5432, %v5430
        %v5469 = vpack.c.b16 %v5433, %v5431
        %v5470 = vpack.c.b16 %v5436, %v5434
        %v5471 = vpack.c.b16 %v5437, %v5435
        %v5472 = vpack.c.b16 %v5440, %v5438
        %v5473 = vpack.c.b16 %v5441, %v5439
        %v5507 = vlaneseq
        %v5508 = vshrl.u32 %v5507, 7
        %v5509 = vsub.s32 0, %v5508
        %v5510 = vrot.slane %v5345, %v5509
        %v5511 = vlaneseq
        %v5512 = vshrl.u32 %v5511, 7
        %v5513 = vsub.s32 1, %v5512
        %v5514 = vrot.slane %v5345, %v5513
        %5517 = vmatprep.subr.bf16.mxu0 %v5457
        %5518 = vmatpush1.bf16.msra.mxu0 %v5456
        %5519 = vmatprep.subr.bf16.mxu0 %v5455
        %5520 = vmatpush1.bf16.msra.mxu0 %v5454
        %5521 = vmatprep.subr.bf16.mxu0 %v5453
        %5522 = vmatpush1.bf16.msra.mxu0 %v5452
        %5523 = vmatprep.subr.bf16.mxu0 %v5451
        %5524 = vmatpush1.bf16.msra.mxu0 %v5450
        %5525 = vmatprep.subr.bf16.mxu0 %v5449
        %5526 = vmatpush1.bf16.msra.mxu0 %v5448
        %5527 = vmatprep.subr.bf16.mxu0 %v5447
        %5528 = vmatpush1.bf16.msra.mxu0 %v5446
        %5529 = vmatprep.subr.bf16.mxu0 %v5445
        %5530 = vmatpush1.bf16.msra.mxu0 %v5444
        %5531 = vmatprep.subr.bf16.mxu0 %v5443
        %5532 = vmatpush1.bf16.msra.mxu0 %v5442
        %5533 = vmatprep.subr.bf16.mxu0 %v5473
        %5534 = vmatpush2.bf16.msra.mxu0 %v5472
        %5535 = vmatprep.subr.bf16.mxu0 %v5471
        %5536 = vmatpush2.bf16.msra.mxu0 %v5470
        %5537 = vmatprep.subr.bf16.mxu0 %v5469
        %5538 = vmatpush2.bf16.msra.mxu0 %v5468
        %5539 = vmatprep.subr.bf16.mxu0 %v5467
        %5540 = vmatpush2.bf16.msra.mxu0 %v5466
        %5541 = vmatprep.subr.bf16.mxu0 %v5465
        %5542 = vmatpush2.bf16.msra.mxu0 %v5464
        %5543 = vmatprep.subr.bf16.mxu0 %v5463
        %5544 = vmatpush2.bf16.msra.mxu0 %v5462
        %5545 = vmatprep.subr.bf16.mxu0 %v5461
        %5546 = vmatpush2.bf16.msra.mxu0 %v5460
        %5547 = vmatprep.subr.bf16.mxu0 %v5459
        %5548 = vmatpush2.bf16.msra.mxu0 %v5458
        %5549 = vmatprep.mubr.bf16.mxu0 %v5312
        %5550 = vmatmul.mubr.bf16.gmra.mxu0 %v5311
        %v5551 = vpop.f32.mrf.mxu0
        %v5552 = vadd.f32 %v5510, %v5551
        %v5553 = vpop.f32.mrf.mxu0
        %v5554 = vadd.f32 %v5514, %v5553
        %v5555 = vpop.f32.mrf.mxu0
        %v5556 = vpop.f32.mrf.mxu0
        %5557 = vdwg.mxu0
        %v5558 = vmax.f32 %v5552, 0.0
        %v5559 = vmax.f32 %v5554, 0.0
        %v5560 = vpack.c.bf16 %v5558, %v5558
        %v5561 = vpack.c.bf16 %v5559, %v5559
        %v5562 = vld [vmem:[%s15] sm:$0xff]
        %v5563 = vld [vmem:[%s15 + $0x8] sm:$0xff]
        %v5564 = vld [vmem:[%s15 + $0x10] sm:$0xf]
        %v5565 = vld [vmem:[%s15 + $0x14] sm:$0xff]
        %v5566 = vld [vmem:[%s15 + $0x1c] sm:$0xff]
        %v5567 = vld [vmem:[%s15 + $0x24] sm:$0xf]
        %v5568 = vld [vmem:[%s15 + $0x28] sm:$0xff]
        %v5569 = vld [vmem:[%s15 + $0x30] sm:$0xff]
        %v5570 = vld [vmem:[%s15 + $0x38] sm:$0xf]
        %v5571 = vld [vmem:[%s15 + $0x3c] sm:$0xff]
        %v5572 = vld [vmem:[%s15 + $0x44] sm:$0xff]
        %v5573 = vld [vmem:[%s15 + $0x4c] sm:$0xf]
        %v5574 = vld [vmem:[%s15 + $0x50] sm:$0xff]
        %v5575 = vld [vmem:[%s15 + $0x58] sm:$0xff]
        %v5576 = vld [vmem:[%s15 + $0x60] sm:$0xf]
        %v5577 = vld [vmem:[%s15 + $0x64] sm:$0xff]
        %v5578 = vld [vmem:[%s15 + $0x6c] sm:$0xff]
        %v5579 = vld [vmem:[%s15 + $0x74] sm:$0xf]
        %v5580 = vld [vmem:[%s15 + $0x78] sm:$0xff]
        %v5581 = vld [vmem:[%s15 + $0x80] sm:$0xff]
        %v5582 = vld [vmem:[%s15 + $0x88] sm:$0xf]
        %v5583 = vld [vmem:[%s15 + $0x8c] sm:$0xff]
        %v5584 = vld [vmem:[%s15 + $0x94] sm:$0xff]
        %v5585 = vld [vmem:[%s15 + $0x9c] sm:$0xf]
        %v5586 = vld [vmem:[%s15 + $0xa0] sm:$0xff]
        %v5587 = vld [vmem:[%s15 + $0xa8] sm:$0xff]
        %v5588 = vld [vmem:[%s15 + $0xb0] sm:$0xf]
        %v5589 = vld [vmem:[%s15 + $0xb4] sm:$0xff]
        %v5590 = vld [vmem:[%s15 + $0xbc] sm:$0xff]
        %v5591 = vld [vmem:[%s15 + $0xc4] sm:$0xf]
        %v5592 = vld [vmem:[%s15 + $0xc8] sm:$0xff]
        %v5593 = vld [vmem:[%s15 + $0xd0] sm:$0xff]
        %v5594 = vld [vmem:[%s15 + $0xd8] sm:$0xf]
        %v5595 = vld [vmem:[%s15 + $0xdc] sm:$0xff]
        %v5596 = vld [vmem:[%s15 + $0xe4] sm:$0xff]
        %v5597 = vld [vmem:[%s15 + $0xec] sm:$0xf]
        %v5598 = vld [vmem:[%s15 + $0xf0] sm:$0xff]
        %v5599 = vld [vmem:[%s15 + $0xf8] sm:$0xff]
        %v5600 = vld [vmem:[%s15 + $0x100] sm:$0xf]
        %v5601 = vld [vmem:[%s15 + $0x104] sm:$0xff]
        %v5602 = vld [vmem:[%s15 + $0x10c] sm:$0xff]
        %v5603 = vld [vmem:[%s15 + $0x114] sm:$0xf]
        %v5604 = vld [vmem:[%s15 + $0x118] sm:$0xff]
        %v5605 = vld [vmem:[%s15 + $0x120] sm:$0xff]
        %v5606 = vld [vmem:[%s15 + $0x128] sm:$0xf]
        %v5607 = vld [vmem:[%s15 + $0x12c] sm:$0xff]
        %v5608 = vld [vmem:[%s15 + $0x134] sm:$0xff]
        %v5609 = vld [vmem:[%s15 + $0x13c] sm:$0xf]
        %v5610 = vld [vmem:[%s15 + $0x140] sm:$0xff]
        %v5611 = vld [vmem:[%s15 + $0x148] sm:$0xff]
        %v5612 = vld [vmem:[%s15 + $0x150] sm:$0xf]
        %v5613 = vld [vmem:[%s15 + $0x154] sm:$0xff]
        %v5614 = vld [vmem:[%s15 + $0x15c] sm:$0xff]
        %v5615 = vld [vmem:[%s15 + $0x164] sm:$0xf]
        %v5616 = vld [vmem:[%s15 + $0x168] sm:$0xff]
        %v5617 = vld [vmem:[%s15 + $0x170] sm:$0xff]
        %v5618 = vld [vmem:[%s15 + $0x178] sm:$0xf]
        %v5619 = vld [vmem:[%s15 + $0x17c] sm:$0xff]
        %v5620 = vld [vmem:[%s15 + $0x184] sm:$0xff]
        %v5621 = vld [vmem:[%s15 + $0x18c] sm:$0xf]
        %v5622 = vld [vmem:[%s15 + $0x190] sm:$0xff]
        %v5623 = vld [vmem:[%s15 + $0x198] sm:$0xff]
        %v5624 = vld [vmem:[%s15 + $0x1a0] sm:$0xf]
        %v5625 = vld [vmem:[%s15 + $0x1a4] sm:$0xff]
        %v5626 = vld [vmem:[%s15 + $0x1ac] sm:$0xff]
        %v5627 = vld [vmem:[%s15 + $0x1b4] sm:$0xf]
        %v5628 = vld [vmem:[%s15 + $0x1b8] sm:$0xff]
        %v5629 = vld [vmem:[%s15 + $0x1c0] sm:$0xff]
        %v5630 = vld [vmem:[%s15 + $0x1c8] sm:$0xf]
        %v5631 = vld [vmem:[%s15 + $0x1cc] sm:$0xff]
        %v5632 = vld [vmem:[%s15 + $0x1d4] sm:$0xff]
        %v5633 = vld [vmem:[%s15 + $0x1dc] sm:$0xf]
        %v5634 = vld [vmem:[%s15 + $0x1e0] sm:$0xff]
        %v5635 = vld [vmem:[%s15 + $0x1e8] sm:$0xff]
        %v5636 = vld [vmem:[%s15 + $0x1f0] sm:$0xf]
        %v5637 = vld [vmem:[%s15 + $0x1f4] sm:$0xff]
        %v5638 = vld [vmem:[%s15 + $0x1fc] sm:$0xff]
        %v5639 = vld [vmem:[%s15 + $0x204] sm:$0xf]
        %v5640 = vld [vmem:[%s15 + $0x208] sm:$0xff]
        %v5641 = vld [vmem:[%s15 + $0x210] sm:$0xff]
        %v5642 = vld [vmem:[%s15 + $0x218] sm:$0xf]
        %v5643 = vld [vmem:[%s15 + $0x21c] sm:$0xff]
        %v5644 = vld [vmem:[%s15 + $0x224] sm:$0xff]
        %v5645 = vld [vmem:[%s15 + $0x22c] sm:$0xf]
        %v5646 = vld [vmem:[%s15 + $0x230] sm:$0xff]
        %v5647 = vld [vmem:[%s15 + $0x238] sm:$0xff]
        %v5648 = vld [vmem:[%s15 + $0x240] sm:$0xf]
        %v5649 = vld [vmem:[%s15 + $0x244] sm:$0xff]
        %v5650 = vld [vmem:[%s15 + $0x24c] sm:$0xff]
        %v5651 = vld [vmem:[%s15 + $0x254] sm:$0xf]
        %v5652 = vld [vmem:[%s15 + $0x258] sm:$0xff]
        %v5653 = vld [vmem:[%s15 + $0x260] sm:$0xff]
        %v5654 = vld [vmem:[%s15 + $0x268] sm:$0xf]
        %v5655 = vld [vmem:[%s15 + $0x26c] sm:$0xff]
        %v5656 = vld [vmem:[%s15 + $0x274] sm:$0xff]
        %v5657 = vld [vmem:[%s15 + $0x27c] sm:$0xf]
        %v5658 = vld [vmem:[%s16] sm:$0x1f]
        %v5755 = vunpack.c.l.b16 %v5562
        %v5756 = vunpack.c.h.b16 %v5562
        %v5757 = vunpack.c.l.b16 %v5563
        %v5758 = vunpack.c.h.b16 %v5563
        %v5759 = vunpack.c.l.b16 %v5564
        %v5760 = vunpack.c.l.b16 %v5565
        %v5761 = vunpack.c.h.b16 %v5565
        %v5762 = vunpack.c.l.b16 %v5566
        %v5763 = vunpack.c.h.b16 %v5566
        %v5764 = vunpack.c.l.b16 %v5567
        %v5765 = vunpack.c.l.b16 %v5568
        %v5766 = vunpack.c.h.b16 %v5568
        %v5767 = vunpack.c.l.b16 %v5569
        %v5768 = vunpack.c.h.b16 %v5569
        %v5769 = vunpack.c.l.b16 %v5570
        %v5770 = vunpack.c.l.b16 %v5571
        %v5771 = vunpack.c.h.b16 %v5571
        %v5772 = vunpack.c.l.b16 %v5572
        %v5773 = vunpack.c.h.b16 %v5572
        %v5774 = vunpack.c.l.b16 %v5573
        %v5775 = vunpack.c.l.b16 %v5574
        %v5776 = vunpack.c.h.b16 %v5574
        %v5777 = vunpack.c.l.b16 %v5575
        %v5778 = vunpack.c.h.b16 %v5575
        %v5779 = vunpack.c.l.b16 %v5576
        %v5780 = vunpack.c.l.b16 %v5577
        %v5781 = vunpack.c.h.b16 %v5577
        %v5782 = vunpack.c.l.b16 %v5578
        %v5783 = vunpack.c.h.b16 %v5578
        %v5784 = vunpack.c.l.b16 %v5579
        %v5785 = vunpack.c.l.b16 %v5580
        %v5786 = vunpack.c.h.b16 %v5580
        %v5787 = vunpack.c.l.b16 %v5581
        %v5788 = vunpack.c.h.b16 %v5581
        %v5789 = vunpack.c.l.b16 %v5582
        %v5790 = vunpack.c.l.b16 %v5583
        %v5791 = vunpack.c.h.b16 %v5583
        %v5792 = vunpack.c.l.b16 %v5584
        %v5793 = vunpack.c.h.b16 %v5584
        %v5794 = vunpack.c.l.b16 %v5585
        %v5795 = vunpack.c.l.b16 %v5586
        %v5796 = vunpack.c.h.b16 %v5586
        %v5797 = vunpack.c.l.b16 %v5587
        %v5798 = vunpack.c.h.b16 %v5587
        %v5799 = vunpack.c.l.b16 %v5588
        %v5800 = vunpack.c.l.b16 %v5589
        %v5801 = vunpack.c.h.b16 %v5589
        %v5802 = vunpack.c.l.b16 %v5590
        %v5803 = vunpack.c.h.b16 %v5590
        %v5804 = vunpack.c.l.b16 %v5591
        %v5805 = vunpack.c.l.b16 %v5592
        %v5806 = vunpack.c.h.b16 %v5592
        %v5807 = vunpack.c.l.b16 %v5593
        %v5808 = vunpack.c.h.b16 %v5593
        %v5809 = vunpack.c.l.b16 %v5594
        %v5810 = vunpack.c.l.b16 %v5595
        %v5811 = vunpack.c.h.b16 %v5595
        %v5812 = vunpack.c.l.b16 %v5596
        %v5813 = vunpack.c.h.b16 %v5596
        %v5814 = vunpack.c.l.b16 %v5597
        %v5815 = vunpack.c.l.b16 %v5598
        %v5816 = vunpack.c.h.b16 %v5598
        %v5817 = vunpack.c.l.b16 %v5599
        %v5818 = vunpack.c.h.b16 %v5599
        %v5819 = vunpack.c.l.b16 %v5600
        %v5820 = vunpack.c.l.b16 %v5601
        %v5821 = vunpack.c.h.b16 %v5601
        %v5822 = vunpack.c.l.b16 %v5602
        %v5823 = vunpack.c.h.b16 %v5602
        %v5824 = vunpack.c.l.b16 %v5603
        %v5825 = vunpack.c.l.b16 %v5604
        %v5826 = vunpack.c.h.b16 %v5604
        %v5827 = vunpack.c.l.b16 %v5605
        %v5828 = vunpack.c.h.b16 %v5605
        %v5829 = vunpack.c.l.b16 %v5606
        %v5830 = vunpack.c.l.b16 %v5607
        %v5831 = vunpack.c.h.b16 %v5607
        %v5832 = vunpack.c.l.b16 %v5608
        %v5833 = vunpack.c.h.b16 %v5608
        %v5834 = vunpack.c.l.b16 %v5609
        %v5835 = vunpack.c.l.b16 %v5610
        %v5836 = vunpack.c.h.b16 %v5610
        %v5837 = vunpack.c.l.b16 %v5611
        %v5838 = vunpack.c.h.b16 %v5611
        %v5839 = vunpack.c.l.b16 %v5612
        %v5840 = vunpack.c.l.b16 %v5613
        %v5841 = vunpack.c.h.b16 %v5613
        %v5842 = vunpack.c.l.b16 %v5614
        %v5843 = vunpack.c.h.b16 %v5614
        %v5844 = vunpack.c.l.b16 %v5615
        %v5845 = vunpack.c.l.b16 %v5616
        %v5846 = vunpack.c.h.b16 %v5616
        %v5847 = vunpack.c.l.b16 %v5617
        %v5848 = vunpack.c.h.b16 %v5617
        %v5849 = vunpack.c.l.b16 %v5618
        %v5850 = vunpack.c.l.b16 %v5619
        %v5851 = vunpack.c.h.b16 %v5619
        %v5852 = vunpack.c.l.b16 %v5620
        %v5853 = vunpack.c.h.b16 %v5620
        %v5854 = vunpack.c.l.b16 %v5621
        %v5855 = vunpack.c.l.b16 %v5622
        %v5856 = vunpack.c.h.b16 %v5622
        %v5857 = vunpack.c.l.b16 %v5623
        %v5858 = vunpack.c.h.b16 %v5623
        %v5859 = vunpack.c.l.b16 %v5624
        %v5860 = vunpack.c.l.b16 %v5625
        %v5861 = vunpack.c.h.b16 %v5625
        %v5862 = vunpack.c.l.b16 %v5626
        %v5863 = vunpack.c.h.b16 %v5626
        %v5864 = vunpack.c.l.b16 %v5627
        %v5865 = vunpack.c.l.b16 %v5628
        %v5866 = vunpack.c.h.b16 %v5628
        %v5867 = vunpack.c.l.b16 %v5629
        %v5868 = vunpack.c.h.b16 %v5629
        %v5869 = vunpack.c.l.b16 %v5630
        %v5870 = vunpack.c.l.b16 %v5631
        %v5871 = vunpack.c.h.b16 %v5631
        %v5872 = vunpack.c.l.b16 %v5632
        %v5873 = vunpack.c.h.b16 %v5632
        %v5874 = vunpack.c.l.b16 %v5633
        %v5875 = vunpack.c.l.b16 %v5634
        %v5876 = vunpack.c.h.b16 %v5634
        %v5877 = vunpack.c.l.b16 %v5635
        %v5878 = vunpack.c.h.b16 %v5635
        %v5879 = vunpack.c.l.b16 %v5636
        %v5880 = vunpack.c.l.b16 %v5637
        %v5881 = vunpack.c.h.b16 %v5637
        %v5882 = vunpack.c.l.b16 %v5638
        %v5883 = vunpack.c.h.b16 %v5638
        %v5884 = vunpack.c.l.b16 %v5639
        %v5885 = vunpack.c.l.b16 %v5640
        %v5886 = vunpack.c.h.b16 %v5640
        %v5887 = vunpack.c.l.b16 %v5641
        %v5888 = vunpack.c.h.b16 %v5641
        %v5889 = vunpack.c.l.b16 %v5642
        %v5890 = vunpack.c.l.b16 %v5643
        %v5891 = vunpack.c.h.b16 %v5643
        %v5892 = vunpack.c.l.b16 %v5644
        %v5893 = vunpack.c.h.b16 %v5644
        %v5894 = vunpack.c.l.b16 %v5645
        %v5895 = vunpack.c.l.b16 %v5646
        %v5896 = vunpack.c.h.b16 %v5646
        %v5897 = vunpack.c.l.b16 %v5647
        %v5898 = vunpack.c.h.b16 %v5647
        %v5899 = vunpack.c.l.b16 %v5648
        %v5900 = vunpack.c.l.b16 %v5649
        %v5901 = vunpack.c.h.b16 %v5649
        %v5902 = vunpack.c.l.b16 %v5650
        %v5903 = vunpack.c.h.b16 %v5650
        %v5904 = vunpack.c.l.b16 %v5651
        %v5905 = vunpack.c.l.b16 %v5652
        %v5906 = vunpack.c.h.b16 %v5652
        %v5907 = vunpack.c.l.b16 %v5653
        %v5908 = vunpack.c.h.b16 %v5653
        %v5909 = vunpack.c.l.b16 %v5654
        %v5910 = vunpack.c.l.b16 %v5655
        %v5911 = vunpack.c.h.b16 %v5655
        %v5912 = vunpack.c.l.b16 %v5656
        %v5913 = vunpack.c.h.b16 %v5656
        %v5914 = vunpack.c.l.b16 %v5657
        %v5915 = vpack.c.b16 %v5760, %v5755
        %v5916 = vpack.c.b16 %v5761, %v5756
        %v5917 = vpack.c.b16 %v5762, %v5757
        %v5918 = vpack.c.b16 %v5763, %v5758
        %v5919 = vpack.c.b16 %v5764, %v5759
        %v5920 = vpack.c.b16 %v5770, %v5765
        %v5921 = vpack.c.b16 %v5771, %v5766
        %v5922 = vpack.c.b16 %v5772, %v5767
        %v5923 = vpack.c.b16 %v5773, %v5768
        %v5924 = vpack.c.b16 %v5774, %v5769
        %v5925 = vpack.c.b16 %v5780, %v5775
        %v5926 = vpack.c.b16 %v5781, %v5776
        %v5927 = vpack.c.b16 %v5782, %v5777
        %v5928 = vpack.c.b16 %v5783, %v5778
        %v5929 = vpack.c.b16 %v5784, %v5779
        %v5930 = vpack.c.b16 %v5790, %v5785
        %v5931 = vpack.c.b16 %v5791, %v5786
        %v5932 = vpack.c.b16 %v5792, %v5787
        %v5933 = vpack.c.b16 %v5793, %v5788
        %v5934 = vpack.c.b16 %v5794, %v5789
        %v5935 = vpack.c.b16 %v5800, %v5795
        %v5936 = vpack.c.b16 %v5801, %v5796
        %v5937 = vpack.c.b16 %v5802, %v5797
        %v5938 = vpack.c.b16 %v5803, %v5798
        %v5939 = vpack.c.b16 %v5804, %v5799
        %v5940 = vpack.c.b16 %v5810, %v5805
        %v5941 = vpack.c.b16 %v5811, %v5806
        %v5942 = vpack.c.b16 %v5812, %v5807
        %v5943 = vpack.c.b16 %v5813, %v5808
        %v5944 = vpack.c.b16 %v5814, %v5809
        %v5945 = vpack.c.b16 %v5820, %v5815
        %v5946 = vpack.c.b16 %v5821, %v5816
        %v5947 = vpack.c.b16 %v5822, %v5817
        %v5948 = vpack.c.b16 %v5823, %v5818
        %v5949 = vpack.c.b16 %v5824, %v5819
        %v5950 = vpack.c.b16 %v5830, %v5825
        %v5951 = vpack.c.b16 %v5831, %v5826
        %v5952 = vpack.c.b16 %v5832, %v5827
        %v5953 = vpack.c.b16 %v5833, %v5828
        %v5954 = vpack.c.b16 %v5834, %v5829
        %v5955 = vpack.c.b16 %v5840, %v5835
        %v5956 = vpack.c.b16 %v5841, %v5836
        %v5957 = vpack.c.b16 %v5842, %v5837
        %v5958 = vpack.c.b16 %v5843, %v5838
        %v5959 = vpack.c.b16 %v5844, %v5839
        %v5960 = vpack.c.b16 %v5850, %v5845
        %v5961 = vpack.c.b16 %v5851, %v5846
        %v5962 = vpack.c.b16 %v5852, %v5847
        %v5963 = vpack.c.b16 %v5853, %v5848
        %v5964 = vpack.c.b16 %v5854, %v5849
        %v5965 = vpack.c.b16 %v5860, %v5855
        %v5966 = vpack.c.b16 %v5861, %v5856
        %v5967 = vpack.c.b16 %v5862, %v5857
        %v5968 = vpack.c.b16 %v5863, %v5858
        %v5969 = vpack.c.b16 %v5864, %v5859
        %v5970 = vpack.c.b16 %v5870, %v5865
        %v5971 = vpack.c.b16 %v5871, %v5866
        %v5972 = vpack.c.b16 %v5872, %v5867
        %v5973 = vpack.c.b16 %v5873, %v5868
        %v5974 = vpack.c.b16 %v5874, %v5869
        %v5975 = vpack.c.b16 %v5880, %v5875
        %v5976 = vpack.c.b16 %v5881, %v5876
        %v5977 = vpack.c.b16 %v5882, %v5877
        %v5978 = vpack.c.b16 %v5883, %v5878
        %v5979 = vpack.c.b16 %v5884, %v5879
        %v5980 = vpack.c.b16 %v5890, %v5885
        %v5981 = vpack.c.b16 %v5891, %v5886
        %v5982 = vpack.c.b16 %v5892, %v5887
        %v5983 = vpack.c.b16 %v5893, %v5888
        %v5984 = vpack.c.b16 %v5894, %v5889
        %v5985 = vpack.c.b16 %v5900, %v5895
        %v5986 = vpack.c.b16 %v5901, %v5896
        %v5987 = vpack.c.b16 %v5902, %v5897
        %v5988 = vpack.c.b16 %v5903, %v5898
        %v5989 = vpack.c.b16 %v5904, %v5899
        %v5990 = vpack.c.b16 %v5910, %v5905
        %v5991 = vpack.c.b16 %v5911, %v5906
        %v5992 = vpack.c.b16 %v5912, %v5907
        %v5993 = vpack.c.b16 %v5913, %v5908
        %v5994 = vpack.c.b16 %v5914, %v5909
        %v6076 = vlaneseq
        %v6077 = vshrl.u32 %v6076, 7
        %v6078 = vsub.s32 0, %v6077
        %v6079 = vrot.slane %v5658, %v6078
        %v6080 = vlaneseq
        %v6081 = vshrl.u32 %v6080, 7
        %v6082 = vsub.s32 1, %v6081
        %v6083 = vrot.slane %v5658, %v6082
        %v6084 = vlaneseq
        %v6085 = vshrl.u32 %v6084, 7
        %v6086 = vsub.s32 2, %v6085
        %v6087 = vrot.slane %v5658, %v6086
        %v6088 = vlaneseq
        %v6089 = vshrl.u32 %v6088, 7
        %v6090 = vsub.s32 3, %v6089
        %v6091 = vrot.slane %v5658, %v6090
        %v6092 = vlaneseq
        %v6093 = vshrl.u32 %v6092, 7
        %v6094 = vsub.s32 4, %v6093
        %v6095 = vrot.slane %v5658, %v6094
        %6101 = vmatprep.subr.bf16.mxu0 %v5951
        %6102 = vmatpush1.bf16.msra.mxu0 %v5950
        %6103 = vmatprep.subr.bf16.mxu0 %v5946
        %6104 = vmatpush1.bf16.msra.mxu0 %v5945
        %6105 = vmatprep.subr.bf16.mxu0 %v5941
        %6106 = vmatpush1.bf16.msra.mxu0 %v5940
        %6107 = vmatprep.subr.bf16.mxu0 %v5936
        %6108 = vmatpush1.bf16.msra.mxu0 %v5935
        %6109 = vmatprep.subr.bf16.mxu0 %v5931
        %6110 = vmatpush1.bf16.msra.mxu0 %v5930
        %6111 = vmatprep.subr.bf16.mxu0 %v5926
        %6112 = vmatpush1.bf16.msra.mxu0 %v5925
        %6113 = vmatprep.subr.bf16.mxu0 %v5921
        %6114 = vmatpush1.bf16.msra.mxu0 %v5920
        %6115 = vmatprep.subr.bf16.mxu0 %v5916
        %6116 = vmatpush1.bf16.msra.mxu0 %v5915
        %6117 = vmatprep.subr.bf16.mxu0 %v5991
        %6118 = vmatpush2.bf16.msra.mxu0 %v5990
        %6119 = vmatprep.subr.bf16.mxu0 %v5986
        %6120 = vmatpush2.bf16.msra.mxu0 %v5985
        %6121 = vmatprep.subr.bf16.mxu0 %v5981
        %6122 = vmatpush2.bf16.msra.mxu0 %v5980
        %6123 = vmatprep.subr.bf16.mxu0 %v5976
        %6124 = vmatpush2.bf16.msra.mxu0 %v5975
        %6125 = vmatprep.subr.bf16.mxu0 %v5971
        %6126 = vmatpush2.bf16.msra.mxu0 %v5970
        %6127 = vmatprep.subr.bf16.mxu0 %v5966
        %6128 = vmatpush2.bf16.msra.mxu0 %v5965
        %6129 = vmatprep.subr.bf16.mxu0 %v5961
        %6130 = vmatpush2.bf16.msra.mxu0 %v5960
        %6131 = vmatprep.subr.bf16.mxu0 %v5956
        %6132 = vmatpush2.bf16.msra.mxu0 %v5955
        %6133 = vmatprep.mubr.bf16.mxu0 %v5561
        %6134 = vmatmul.mubr.bf16.gmra.mxu0 %v5560
        %v6135 = vpop.f32.mrf.mxu0
        %v6136 = vadd.f32 %v6079, %v6135
        %v6137 = vpop.f32.mrf.mxu0
        %v6138 = vadd.f32 %v6083, %v6137
        %v6139 = vpop.f32.mrf.mxu0
        %v6140 = vpop.f32.mrf.mxu0
        %6141 = vdwg.mxu0
        %6142 = vmatprep.subr.bf16.mxu0 %v5953
        %6143 = vmatpush1.bf16.msra.mxu0 %v5952
        %6144 = vmatprep.subr.bf16.mxu0 %v5948
        %6145 = vmatpush1.bf16.msra.mxu0 %v5947
        %6146 = vmatprep.subr.bf16.mxu0 %v5943
        %6147 = vmatpush1.bf16.msra.mxu0 %v5942
        %6148 = vmatprep.subr.bf16.mxu0 %v5938
        %6149 = vmatpush1.bf16.msra.mxu0 %v5937
        %6150 = vmatprep.subr.bf16.mxu0 %v5933
        %6151 = vmatpush1.bf16.msra.mxu0 %v5932
        %6152 = vmatprep.subr.bf16.mxu0 %v5928
        %6153 = vmatpush1.bf16.msra.mxu0 %v5927
        %6154 = vmatprep.subr.bf16.mxu0 %v5923
        %6155 = vmatpush1.bf16.msra.mxu0 %v5922
        %6156 = vmatprep.subr.bf16.mxu0 %v5918
        %6157 = vmatpush1.bf16.msra.mxu0 %v5917
        %6158 = vmatprep.subr.bf16.mxu0 %v5993
        %6159 = vmatpush2.bf16.msra.mxu0 %v5992
        %6160 = vmatprep.subr.bf16.mxu0 %v5988
        %6161 = vmatpush2.bf16.msra.mxu0 %v5987
        %6162 = vmatprep.subr.bf16.mxu0 %v5983
        %6163 = vmatpush2.bf16.msra.mxu0 %v5982
        %6164 = vmatprep.subr.bf16.mxu0 %v5978
        %6165 = vmatpush2.bf16.msra.mxu0 %v5977
        %6166 = vmatprep.subr.bf16.mxu0 %v5973
        %6167 = vmatpush2.bf16.msra.mxu0 %v5972
        %6168 = vmatprep.subr.bf16.mxu0 %v5968
        %6169 = vmatpush2.bf16.msra.mxu0 %v5967
        %6170 = vmatprep.subr.bf16.mxu0 %v5963
        %6171 = vmatpush2.bf16.msra.mxu0 %v5962
        %6172 = vmatprep.subr.bf16.mxu0 %v5958
        %6173 = vmatpush2.bf16.msra.mxu0 %v5957
        %6174 = vmatprep.mubr.bf16.mxu0 %v5561
        %6175 = vmatmul.mubr.bf16.gmra.mxu0 %v5560
        %v6176 = vpop.f32.mrf.mxu0
        %v6177 = vadd.f32 %v6087, %v6176
        %v6178 = vpop.f32.mrf.mxu0
        %v6179 = vadd.f32 %v6091, %v6178
        %v6180 = vpop.f32.mrf.mxu0
        %v6181 = vpop.f32.mrf.mxu0
        %6182 = vdwg.mxu0
        %6183 = vmatprep.subr.bf16.mxu0 0
        %6184 = vmatpush1.bf16.msra.mxu0 %v5954
        %6185 = vmatprep.subr.bf16.mxu0 0
        %6186 = vmatpush1.bf16.msra.mxu0 %v5949
        %6187 = vmatprep.subr.bf16.mxu0 0
        %6188 = vmatpush1.bf16.msra.mxu0 %v5944
        %6189 = vmatprep.subr.bf16.mxu0 0
        %6190 = vmatpush1.bf16.msra.mxu0 %v5939
        %6191 = vmatprep.subr.bf16.mxu0 0
        %6192 = vmatpush1.bf16.msra.mxu0 %v5934
        %6193 = vmatprep.subr.bf16.mxu0 0
        %6194 = vmatpush1.bf16.msra.mxu0 %v5929
        %6195 = vmatprep.subr.bf16.mxu0 0
        %6196 = vmatpush1.bf16.msra.mxu0 %v5924
        %6197 = vmatprep.subr.bf16.mxu0 0
        %6198 = vmatpush1.bf16.msra.mxu0 %v5919
        %6199 = vmatprep.subr.bf16.mxu0 0
        %6200 = vmatpush2.bf16.msra.mxu0 %v5994
        %6201 = vmatprep.subr.bf16.mxu0 0
        %6202 = vmatpush2.bf16.msra.mxu0 %v5989
        %6203 = vmatprep.subr.bf16.mxu0 0
        %6204 = vmatpush2.bf16.msra.mxu0 %v5984
        %6205 = vmatprep.subr.bf16.mxu0 0
        %6206 = vmatpush2.bf16.msra.mxu0 %v5979
        %6207 = vmatprep.subr.bf16.mxu0 0
        %6208 = vmatpush2.bf16.msra.mxu0 %v5974
        %6209 = vmatprep.subr.bf16.mxu0 0
        %6210 = vmatpush2.bf16.msra.mxu0 %v5969
        %6211 = vmatprep.subr.bf16.mxu0 0
        %6212 = vmatpush2.bf16.msra.mxu0 %v5964
        %6213 = vmatprep.subr.bf16.mxu0 0
        %6214 = vmatpush2.bf16.msra.mxu0 %v5959
        %6215 = vmatprep.mubr.bf16.mxu0 %v5561
        %6216 = vmatmul.mubr.bf16.gmra.mxu0 %v5560
        %v6217 = vpop.f32.mrf.mxu0
        %v6218 = vadd.f32 %v6095, %v6217
        %v6219 = vpop.f32.mrf.mxu0
        %v6220 = vpop.f32.mrf.mxu0
        %v6221 = vpop.f32.mrf.mxu0
        %6222 = vdwg.mxu0
        %v6228 = vcombine.low %v6136, %v6138
        %v6229 = vcombine.low %v6177, %v6179
        %v6231 = vunpack.c.l.s4 1966171168
        %v6232 = vunpack.c.0.s8 %v6231
        %v6233 = vlaneseq
        %v6234 = vshrl.u32 %v6233, 7
        %v6235 = vsub.s32 %v6232, %v6234
        %v6236 = vrot.slane %v6228, %v6235
        %v6238 = vunpack.c.l.s4 1966171168
        %v6239 = vunpack.c.0.s8 %v6238
        %v6240 = vlaneseq
        %v6241 = vshrl.u32 %v6240, 7
        %v6242 = vsub.s32 %v6239, %v6241
        %v6243 = vrot.slane %v6229, %v6242
        %v6245 = vunpack.c.l.s4 1966171168
        %v6246 = vunpack.c.0.s8 %v6245
        %v6247 = vlaneseq
        %v6248 = vshrl.u32 %v6247, 7
        %v6249 = vsub.s32 %v6246, %v6248
        %v6250 = vrot.slane %v6218, %v6249
        %v6251 = vcombine.low %v6236, %v6243
        %v6253 = vunpack.c.l.s4 1966171168
        %v6254 = vunpack.c.0.s8 %v6253
        %v6255 = vlaneseq
        %v6256 = vshrl.u32 %v6255, 7
        %v6257 = vsub.s32 %v6254, %v6256
        %v6258 = vrot.slane %v6251, %v6257
        %v6260 = vunpack.c.l.s4 1966171168
        %v6261 = vunpack.c.0.s8 %v6260
        %v6262 = vlaneseq
        %v6263 = vshrl.u32 %v6262, 7
        %v6264 = vsub.s32 %v6261, %v6263
        %v6265 = vrot.slane %v6250, %v6264
        %v6266 = vcombine.low %v6258, %v6265
        %v6268 = vlaneseq
        %vm6269 = vcmp.ge.s32.totalorder %v6268, 0
        %vm6270 = vcmp.lt.s32.totalorder %v6268, 600
        %vm6271 = vmand %vm6269, %vm6270
        %6272 = vst.msk [vmem:[%s641] sm:$0x1f] %vm6271, %v6266
      $region96: #{multi_object_3d_bbox_forward.1} parent=87 // pred_fallthru
        _
      %p6273 = scmp.lt.s32.totalorder %s32, 1
      %s6274 = scalar_select %p6273, %s32, 1
      %s6275 = smul.addr %s6274, 5
      %s6276 = scalar_lea.vmem %s17, %s6275
      // Predicated region
      $region97: #{multi_object_3d_bbox_forward.1} parent=87 // pred_check
        %p6277 = pneg %p439
      $region98: #{multi_object_3d_bbox_forward.1} parent=87 // pred_check_branch
        %6279 = sbr.rel (%p6277) target = $region100
      $region99: #{multi_object_3d_bbox_forward.1} parent=87 // pred_region
        _
      $region100: #{multi_object_3d_bbox_forward.1} parent=87 // pred_fallthru
        _
    $region88: #{multi_object_3d_bbox_forward.1} parent=5 // pred_fallthru
      _
    %p6280 = scmp.le.s32.totalorder 2, %s23
    // Predicated region
    $region101: #{multi_object_3d_bbox_forward.1} parent=5 // pred_check
      %p6281 = pneg %p6280
    $region102: #{multi_object_3d_bbox_forward.1} parent=5 // pred_check_branch
      %6283 = sbr.rel (%p6281) target = $region104
    $region103: #{multi_object_3d_bbox_forward.1} parent=5 // pred_region
      %s6284 = ssub.s32 %s23, 2
      // Predicated region
      $region105: #{multi_object_3d_bbox_forward.1} parent=103 // pred_check
        %p6285 = pneg %p445
      $region106: #{multi_object_3d_bbox_forward.1} parent=103 // pred_check_branch
        %6287 = sbr.rel (%p6285) target = $region108
      $region107: #{multi_object_3d_bbox_forward.1} parent=103 // pred_region
        %p6288 = scmp.lt.s32.totalorder %s34, 1
        %s6289 = scalar_select %p6288, %s34, 1
        %s6290 = smul.addr %s6289, 5
        %s6291 = scalar_lea.vmem %s17, %s6290
      $region108: #{multi_object_3d_bbox_forward.1} parent=103 // pred_fallthru
        _
    $region104: #{multi_object_3d_bbox_forward.1} parent=5 // pred_fallthru
      _
  $region6: #{multi_object_3d_bbox_forward.1} parent=0 // loop_footer
    %s27 = sadd.s32 1, %s23
  $region7: #{multi_object_3d_bbox_forward.1} parent=0 // loop_footer_branch
    %22 = sbr.rel target = $region3
  $region8: #{multi_object_3d_bbox_forward.1} parent=0 // loop_exit
    _

</llo_original>
